<compile_context>
chip_gen: v6e
topology: v6e:2x2x1
jax: 0.10.0
libtpu: 0.0.40
codegen_flags: <defaults>
</compile_context>

<pallas_src>
import functools
import math

import jax
import jax.numpy as jnp
import numpy as np
from jax.experimental import pallas as pl
from jax.experimental.pallas import tpu as pltpu


def _round_up(x, m):
    return (x + m - 1) // m * m


# 2x2 "delta" shift offsets on the flat (stride-11) coarse grid.
_DELTAS = ((0, 0), (0, 1), (1, 0), (1, 1))
_OFFS = tuple(dh * 11 + dw for dh, dw in _DELTAS)


# ---------------------------------------------------------------------------
# Kernel 1: fused  conv1(4->16, 8x8, s4) + ReLU + conv2(16->32, 4x4, s2) + ReLU
#   xs_ref : (256, L+128) bf16   space-to-depth(8) input, per-sample 128-lane
#                                blocks (121 used, flat index I*11+J), plus a
#                                128-lane zero margin per batch tile.
#   w1s    : (4, 64, 256) bf16   conv1 weights grouped by delta; rows =
#                                (pu,pv,c1) conv2-phase-stacked channels.
#   w2s    : (4, 32, 64)  bf16   conv2 weights grouped by delta.
#   o_ref  : (32, L)      bf16   conv2 output, lanes = n_local*128 + i2*11+j2.
# ---------------------------------------------------------------------------
def _conv_kernel(xs_ref, w1s_ref, b1s_ref, w2s_ref, b2s_ref, o_ref):
    L = o_ref.shape[-1]          # bt1 * 128
    Lm = L + 16                  # conv1 output width (margin for conv2 shifts)

    # conv1 (+ folded /255): 4 shifted matmuls, phases stacked on the row axis.
    acc1 = None
    for idx, off in enumerate(_OFFS):
        z = jnp.dot(w1s_ref[idx], xs_ref[:, pl.ds(off, Lm)],
                    preferred_element_type=jnp.float32)
        acc1 = z if acc1 is None else acc1 + z
    y1 = jnp.maximum(acc1 + b1s_ref[...], 0.0).astype(jnp.bfloat16)   # (64, Lm)

    # conv2: 4 shifted matmuls on the phase-stacked conv1 output.
    acc2 = None
    for idx, off in enumerate(_OFFS):
        z = jnp.dot(w2s_ref[idx], y1[:, off:off + L],
                    preferred_element_type=jnp.float32)
        acc2 = z if acc2 is None else acc2 + z
    y2 = jnp.maximum(acc2 + b2s_ref[...], 0.0)                        # (32, L) f32
    o_ref[...] = y2.astype(o_ref.dtype)


def _conv_stage(xs, w1s, b1s, w2s, b2s, *, n_tiles, bt1):
    L = bt1 * 128
    return pl.pallas_call(
        _conv_kernel,
        out_shape=jax.ShapeDtypeStruct((32, n_tiles * L), jnp.bfloat16),
        grid=(n_tiles,),
        in_specs=[
            pl.BlockSpec((256, L + 128), lambda i: (0, i)),   # input tile
            pl.BlockSpec((4, 64, 256), lambda i: (0, 0, 0)),  # weights resident
            pl.BlockSpec((64, 1), lambda i: (0, 0)),
            pl.BlockSpec((4, 32, 64), lambda i: (0, 0, 0)),
            pl.BlockSpec((32, 1), lambda i: (0, 0)),
        ],
        out_specs=pl.BlockSpec((32, L), lambda i: (0, i)),
        compiler_params=pltpu.CompilerParams(
            dimension_semantics=("parallel",),
            vmem_limit_bytes=32 * 1024 * 1024),
    )(xs, w1s, b1s, w2s, b2s)


# ---------------------------------------------------------------------------
# Kernel 2: fused  Linear(4096->256) + ReLU + Linear(256->A_pad)
# (the 4096 axis is the 2592 real features scattered into a (32,128) lane
#  layout; padded/garbage lanes carry zero weights in w3.)
# ---------------------------------------------------------------------------
def _mlp_kernel(x_ref, w3_ref, b3_ref, w4_ref, b4_ref, o_ref):
    h = jnp.dot(x_ref[...], w3_ref[...], preferred_element_type=jnp.float32)
    h = jnp.maximum(h + b3_ref[...], 0.0)
    q = jnp.dot(h.astype(jnp.bfloat16), w4_ref[...],
                preferred_element_type=jnp.float32)
    o_ref[...] = q + b4_ref[...]


def _mlp_stage(flat, w3, b3, w4, b4, *, bt2):
    n2p, k = flat.shape
    a_pad = w4.shape[1]
    return pl.pallas_call(
        _mlp_kernel,
        out_shape=jax.ShapeDtypeStruct((n2p, a_pad), jnp.float32),
        grid=(n2p // bt2,),
        in_specs=[
            pl.BlockSpec((bt2, k), lambda i: (i, 0)),         # batch-tiled x
            pl.BlockSpec((k, 256), lambda i: (0, 0)),         # weights resident
            pl.BlockSpec((1, 256), lambda i: (0, 0)),
            pl.BlockSpec((256, a_pad), lambda i: (0, 0)),
            pl.BlockSpec((1, a_pad), lambda i: (0, 0)),
        ],
        out_specs=pl.BlockSpec((bt2, a_pad), lambda i: (i, 0)),
        compiler_params=pltpu.CompilerParams(
            dimension_semantics=("parallel",),
            vmem_limit_bytes=32 * 1024 * 1024),
    )(flat, w3, b3, w4, b4)


# ---------------------------------------------------------------------------
# One-time parameter preparation (hoisted out of the per-forward path).
# ---------------------------------------------------------------------------
def prepare_params(params, n_actions):
    w1, b1, w2, b2, w3, b3, w4, b4 = [np.asarray(p, np.float32) for p in params]
    w1 = w1 / 255.0                                    # fold input scaling

    # conv1: rows = (pu, pv, c1) [conv2 parity phase x 16ch], cols = (c,qh,qw).
    w1s = np.zeros((4, 64, 256), np.float32)
    for di, (dh, dw) in enumerate(_DELTAS):
        for pu in range(2):
            for pv in range(2):
                r0 = pu * 32 + pv * 16
                for qh in range(8):
                    kh = 8 * dh + qh - 4 * pu
                    if not 0 <= kh < 8:
                        continue
                    for qw in range(8):
                        kw = 8 * dw + qw - 4 * pv
                        if not 0 <= kw < 8:
                            continue
                        for c in range(4):
                            w1s[di, r0:r0 + 16, c * 64 + qh * 8 + qw] = \
                                w1[:, c, kh, kw]

    # conv2: cols = (pu, pv, c1) matching conv1's output row order.
    w2s = np.zeros((4, 32, 64), np.float32)
    for di, (du, dv) in enumerate(_DELTAS):
        for pu in range(2):
            for pv in range(2):
                c0 = pu * 32 + pv * 16
                w2s[di, :, c0:c0 + 16] = w2[:, :, 2 * du + pu, 2 * dv + pv]

    b1s = np.tile(b1, 4).reshape(64, 1)
    b2s = b2.reshape(32, 1)

    # FC1 weight scattered to the kernel's (32, 128) lane layout (i2*11+j2).
    w3r = w3.reshape(256, 32, 9, 9)
    w3p = np.zeros((32, 128, 256), np.float32)
    for i2 in range(9):
        for j2 in range(9):
            w3p[:, i2 * 11 + j2, :] = w3r[:, :, i2, j2].T
    w3p = w3p.reshape(4096, 256)

    a_pad = _round_up(max(n_actions, 1), 128)
    w4p = np.zeros((256, a_pad), np.float32)
    w4p[:, :n_actions] = w4.T
    b4p = np.zeros((1, a_pad), np.float32)
    b4p[0, :n_actions] = b4

    return dict(
        w1s=jnp.asarray(w1s, jnp.bfloat16), b1s=jnp.asarray(b1s, jnp.float32),
        w2s=jnp.asarray(w2s, jnp.bfloat16), b2s=jnp.asarray(b2s, jnp.float32),
        w3=jnp.asarray(w3p, jnp.bfloat16), b3=jnp.asarray(b3.reshape(1, 256),
                                                          jnp.float32),
        w4=jnp.asarray(w4p, jnp.bfloat16), b4=jnp.asarray(b4p, jnp.float32),
    )


# ---------------------------------------------------------------------------
# Forward: conv(4->16,8,s4) ReLU conv(16->32,4,s2) ReLU Flatten
#          Linear(2592,256) ReLU Linear(256,n_actions)       (input / 255)
# ---------------------------------------------------------------------------
def dqn_forward(prep, x, *, n_actions):
    n = x.shape[0]
    bt1 = 8 if n >= 16 else 1            # small batch: 1 sample/step -> both
    n_tiles = -(-n // bt1)               # v7x TensorCores stay busy
    n1p = n_tiles * bt1

    # --- single expansion-free relayout of x: space-to-depth by 8 -----------
    xb = x.astype(jnp.bfloat16)
    xb = jnp.pad(xb, ((0, n1p - n), (0, 0), (0, 4), (0, 4)))     # (n1p,4,88,88)
    xs = xb.reshape(n1p, 4, 11, 8, 11, 8).transpose(1, 3, 5, 0, 2, 4)
    xs = xs.reshape(256, n1p, 121)
    xs = jnp.pad(xs, ((0, 0), (0, 0), (0, 7)))                   # lanes -> 128
    xs = xs.reshape(256, n_tiles, bt1 * 128)
    xs = jnp.pad(xs, ((0, 0), (0, 0), (0, 128)))                 # per-tile margin
    xs = xs.reshape(256, n_tiles * (bt1 * 128 + 128))

    # --- fused conv1 + conv2 (everything stays in VMEM inside the kernel) ---
    y2 = _conv_stage(xs, prep["w1s"], prep["b1s"], prep["w2s"], prep["b2s"],
                     n_tiles=n_tiles, bt1=bt1)                   # (32, n1p*128)

    # tiny flatten (8 KiB / sample).  TODO(synk): fold into kernel 1.
    flat = y2.reshape(32, n1p, 128).transpose(1, 0, 2).reshape(n1p, 4096)

    bt2 = 128 if n1p >= 128 else _round_up(n1p, 8)
    n2p = _round_up(n1p, bt2)
    if n2p != n1p:
        flat = jnp.pad(flat, ((0, n2p - n1p), (0, 0)))

    # --- fused MLP head ------------------------------------------------------
    q = _mlp_stage(flat, prep["w3"], prep["b3"], prep["w4"], prep["b4"],
                   bt2=bt2)                                      # (n2p, a_pad)
    return q[:n, :n_actions]


# ---------------------------------------------------------------------------
# Parameter init (xavier_uniform_ weights, PyTorch default uniform biases)
# ---------------------------------------------------------------------------
def init_params(key, n_actions):
    ks = jax.random.split(key, 8)

    def xavier(k, shape, fan_in, fan_out):
        bound = math.sqrt(6.0 / (fan_in + fan_out))
        return jax.random.uniform(k, shape, jnp.float32, -bound, bound)

    def bias(k, shape, fan_in):
        bound = 1.0 / math.sqrt(fan_in)
        return jax.random.uniform(k, shape, jnp.float32, -bound, bound)

    w1 = xavier(ks[0], (16, 4, 8, 8), 4 * 64, 16 * 64)
    b1 = bias(ks[1], (16,), 4 * 64)
    w2 = xavier(ks[2], (32, 16, 4, 4), 16 * 16, 32 * 16)
    b2 = bias(ks[3], (32,), 16 * 16)
    w3 = xavier(ks[4], (256, 2592), 2592, 256)
    b3 = bias(ks[5], (256,), 2592)
    w4 = xavier(ks[6], (n_actions, 256), 256, n_actions)
    b4 = bias(ks[7], (n_actions,), 256)
    return (w1, b1, w2, b2, w3, b3, w4, b4)


# Pure-JAX f32 reference of the PyTorch module (for a tolerance check).
def dqn_reference(params, x):
    w1, b1, w2, b2, w3, b3, w4, b4 = params
    dn = ("NCHW", "OIHW", "NCHW")
    y = x / 255.0
    y = jax.lax.conv_general_dilated(y, w1, (4, 4), "VALID",
                                     dimension_numbers=dn)
    y = jnp.maximum(y + b1[None, :, None, None], 0.0)
    y = jax.lax.conv_general_dilated(y, w2, (2, 2), "VALID",
                                     dimension_numbers=dn)
    y = jnp.maximum(y + b2[None, :, None, None], 0.0)
    y = y.reshape(x.shape[0], -1)
    h = jnp.maximum(y @ w3.T + b3, 0.0)
    return h @ w4.T + b4


if __name__ == "__main__":
    n_actions = 6
    batch = 2

    key = jax.random.PRNGKey(0)
    k_params, k_x = jax.random.split(key)

    params = init_params(k_params, n_actions)
    # Atari-style frames in [0, 255], NCHW; 84x84 is implied by Linear(2592,.).
    x = jax.random.uniform(k_x, (batch, 4, 84, 84), jnp.float32, 0.0, 255.0)

    prep = prepare_params(params, n_actions)          # one-time, outside jit
    fwd = jax.jit(functools.partial(dqn_forward, n_actions=n_actions))
    q_values = jax.block_until_ready(fwd(prep, x))

    assert q_values.shape == (batch, n_actions), q_values.shape
    assert bool(jnp.isfinite(q_values).all())

    # bf16 MXU operands / f32 accumulation => ~1% expected deviation from f32.
    q_ref = jax.jit(dqn_reference)(params, x)
    rel = float(jnp.max(jnp.abs(q_values - q_ref)) /
                (jnp.max(jnp.abs(q_ref)) + 1e-6))
    assert rel < 0.08, f"mismatch vs f32 reference: rel={rel:.4f}"

    print("KERNEL_OK")
</pallas_src>

<mosaic_0001>
module attributes {stable_mosaic.version = 11 : i64} {
  func.func @_conv_kernel(%arg0: i32, %arg1: memref<256x256xbf16, #tpu.memory_space<vmem>>, %arg2: memref<4x64x256xbf16, #tpu.memory_space<vmem>>, %arg3: memref<64x1xf32, #tpu.memory_space<vmem>>, %arg4: memref<4x32x64xbf16, #tpu.memory_space<vmem>>, %arg5: memref<32x1xf32, #tpu.memory_space<vmem>>, %arg6: memref<32x128xbf16, #tpu.memory_space<vmem>>) attributes {dimension_semantics = [#tpu.dimension_semantics<parallel>], iteration_bounds = array<i64: 2>, scalar_prefetch = 0 : i64, scratch_operands = 0 : i64, tpu.core_type = #tpu.core_type<tc>, window_params = [{transform_indices = @transform_0, window_bounds = array<i64: 256, 256>}, {pipeline_mode = #tpu.pipeline_mode<synchronous>, transform_indices = @transform_1, window_bounds = array<i64: 4, 64, 256>}, {pipeline_mode = #tpu.pipeline_mode<synchronous>, transform_indices = @transform_2, window_bounds = array<i64: 64, 1>}, {pipeline_mode = #tpu.pipeline_mode<synchronous>, transform_indices = @transform_3, window_bounds = array<i64: 4, 32, 64>}, {pipeline_mode = #tpu.pipeline_mode<synchronous>, transform_indices = @transform_4, window_bounds = array<i64: 32, 1>}, {transform_indices = @transform_5, window_bounds = array<i64: 32, 128>}]} {
    %c0 = arith.constant 0 : index
    %c0_0 = arith.constant 0 : index
    %c0_1 = arith.constant 0 : index
    %0 = vector.load %arg2[%c0, %c0_0, %c0_1] : memref<4x64x256xbf16, #tpu.memory_space<vmem>>, vector<1x64x256xbf16>
    %1 = vector.shape_cast %0 : vector<1x64x256xbf16> to vector<64x256xbf16>
    %c0_2 = arith.constant 0 : index
    %c0_3 = arith.constant 0 : index
    %2 = vector.load %arg1[%c0_2, %c0_3] : memref<256x256xbf16, #tpu.memory_space<vmem>>, vector<256x144xbf16>
    %cst = arith.constant dense<0.000000e+00> : vector<64x144xf32>
    %3 = tpu.matmul %1, %2, %cst {dimension_numbers = #tpu.dot_dimension_numbers<[1], [0], [0], [1], [0, 0, 1, 1], [], []>} : vector<64x256xbf16>, vector<256x144xbf16>, vector<64x144xf32> -> vector<64x144xf32>
    %c1 = arith.constant 1 : index
    %c0_4 = arith.constant 0 : index
    %c0_5 = arith.constant 0 : index
    %4 = vector.load %arg2[%c1, %c0_4, %c0_5] : memref<4x64x256xbf16, #tpu.memory_space<vmem>>, vector<1x64x256xbf16>
    %5 = vector.shape_cast %4 : vector<1x64x256xbf16> to vector<64x256xbf16>
    %c0_6 = arith.constant 0 : index
    %c1_7 = arith.constant 1 : index
    %6 = vector.load %arg1[%c0_6, %c1_7] : memref<256x256xbf16, #tpu.memory_space<vmem>>, vector<256x144xbf16>
    %cst_8 = arith.constant dense<0.000000e+00> : vector<64x144xf32>
    %7 = tpu.matmul %5, %6, %cst_8 {dimension_numbers = #tpu.dot_dimension_numbers<[1], [0], [0], [1], [0, 0, 1, 1], [], []>} : vector<64x256xbf16>, vector<256x144xbf16>, vector<64x144xf32> -> vector<64x144xf32>
    %8 = arith.addf %3, %7 : vector<64x144xf32>
    %c2 = arith.constant 2 : index
    %c0_9 = arith.constant 0 : index
    %c0_10 = arith.constant 0 : index
    %9 = vector.load %arg2[%c2, %c0_9, %c0_10] : memref<4x64x256xbf16, #tpu.memory_space<vmem>>, vector<1x64x256xbf16>
    %10 = vector.shape_cast %9 : vector<1x64x256xbf16> to vector<64x256xbf16>
    %c0_11 = arith.constant 0 : index
    %c11 = arith.constant 11 : index
    %11 = vector.load %arg1[%c0_11, %c11] : memref<256x256xbf16, #tpu.memory_space<vmem>>, vector<256x144xbf16>
    %cst_12 = arith.constant dense<0.000000e+00> : vector<64x144xf32>
    %12 = tpu.matmul %10, %11, %cst_12 {dimension_numbers = #tpu.dot_dimension_numbers<[1], [0], [0], [1], [0, 0, 1, 1], [], []>} : vector<64x256xbf16>, vector<256x144xbf16>, vector<64x144xf32> -> vector<64x144xf32>
    %13 = arith.addf %8, %12 : vector<64x144xf32>
    %c3 = arith.constant 3 : index
    %c0_13 = arith.constant 0 : index
    %c0_14 = arith.constant 0 : index
    %14 = vector.load %arg2[%c3, %c0_13, %c0_14] : memref<4x64x256xbf16, #tpu.memory_space<vmem>>, vector<1x64x256xbf16>
    %15 = vector.shape_cast %14 : vector<1x64x256xbf16> to vector<64x256xbf16>
    %c0_15 = arith.constant 0 : index
    %c12 = arith.constant 12 : index
    %16 = vector.load %arg1[%c0_15, %c12] : memref<256x256xbf16, #tpu.memory_space<vmem>>, vector<256x144xbf16>
    %cst_16 = arith.constant dense<0.000000e+00> : vector<64x144xf32>
    %17 = tpu.matmul %15, %16, %cst_16 {dimension_numbers = #tpu.dot_dimension_numbers<[1], [0], [0], [1], [0, 0, 1, 1], [], []>} : vector<64x256xbf16>, vector<256x144xbf16>, vector<64x144xf32> -> vector<64x144xf32>
    %18 = arith.addf %13, %17 : vector<64x144xf32>
    %c0_17 = arith.constant 0 : index
    %c0_18 = arith.constant 0 : index
    %19 = vector.load %arg3[%c0_17, %c0_18] : memref<64x1xf32, #tpu.memory_space<vmem>>, vector<64x1xf32>
    %20 = vector.broadcast %19 : vector<64x1xf32> to vector<64x144xf32>
    %21 = arith.addf %18, %20 : vector<64x144xf32>
    %cst_19 = arith.constant 0.000000e+00 : f32
    %22 = vector.broadcast %cst_19 : f32 to vector<64x144xf32>
    %23 = arith.maximumf %21, %22 : vector<64x144xf32>
    %24 = arith.truncf %23 : vector<64x144xf32> to vector<64x144xbf16>
    %c0_20 = arith.constant 0 : index
    %c0_21 = arith.constant 0 : index
    %c0_22 = arith.constant 0 : index
    %25 = vector.load %arg4[%c0_20, %c0_21, %c0_22] : memref<4x32x64xbf16, #tpu.memory_space<vmem>>, vector<1x32x64xbf16>
    %26 = vector.shape_cast %25 : vector<1x32x64xbf16> to vector<32x64xbf16>
    %27 = vector.extract_strided_slice %24 {offsets = [0, 0], sizes = [64, 128], strides = [1, 1]} : vector<64x144xbf16> to vector<64x128xbf16>
    %cst_23 = arith.constant dense<0.000000e+00> : vector<32x128xf32>
    %28 = tpu.matmul %26, %27, %cst_23 {dimension_numbers = #tpu.dot_dimension_numbers<[1], [0], [0], [1], [0, 0, 1, 1], [], []>} : vector<32x64xbf16>, vector<64x128xbf16>, vector<32x128xf32> -> vector<32x128xf32>
    %c1_24 = arith.constant 1 : index
    %c0_25 = arith.constant 0 : index
    %c0_26 = arith.constant 0 : index
    %29 = vector.load %arg4[%c1_24, %c0_25, %c0_26] : memref<4x32x64xbf16, #tpu.memory_space<vmem>>, vector<1x32x64xbf16>
    %30 = vector.shape_cast %29 : vector<1x32x64xbf16> to vector<32x64xbf16>
    %31 = vector.extract_strided_slice %24 {offsets = [0, 1], sizes = [64, 128], strides = [1, 1]} : vector<64x144xbf16> to vector<64x128xbf16>
    %cst_27 = arith.constant dense<0.000000e+00> : vector<32x128xf32>
    %32 = tpu.matmul %30, %31, %cst_27 {dimension_numbers = #tpu.dot_dimension_numbers<[1], [0], [0], [1], [0, 0, 1, 1], [], []>} : vector<32x64xbf16>, vector<64x128xbf16>, vector<32x128xf32> -> vector<32x128xf32>
    %33 = arith.addf %28, %32 : vector<32x128xf32>
    %c2_28 = arith.constant 2 : index
    %c0_29 = arith.constant 0 : index
    %c0_30 = arith.constant 0 : index
    %34 = vector.load %arg4[%c2_28, %c0_29, %c0_30] : memref<4x32x64xbf16, #tpu.memory_space<vmem>>, vector<1x32x64xbf16>
    %35 = vector.shape_cast %34 : vector<1x32x64xbf16> to vector<32x64xbf16>
    %36 = vector.extract_strided_slice %24 {offsets = [0, 11], sizes = [64, 128], strides = [1, 1]} : vector<64x144xbf16> to vector<64x128xbf16>
    %cst_31 = arith.constant dense<0.000000e+00> : vector<32x128xf32>
    %37 = tpu.matmul %35, %36, %cst_31 {dimension_numbers = #tpu.dot_dimension_numbers<[1], [0], [0], [1], [0, 0, 1, 1], [], []>} : vector<32x64xbf16>, vector<64x128xbf16>, vector<32x128xf32> -> vector<32x128xf32>
    %38 = arith.addf %33, %37 : vector<32x128xf32>
    %c3_32 = arith.constant 3 : index
    %c0_33 = arith.constant 0 : index
    %c0_34 = arith.constant 0 : index
    %39 = vector.load %arg4[%c3_32, %c0_33, %c0_34] : memref<4x32x64xbf16, #tpu.memory_space<vmem>>, vector<1x32x64xbf16>
    %40 = vector.shape_cast %39 : vector<1x32x64xbf16> to vector<32x64xbf16>
    %41 = vector.extract_strided_slice %24 {offsets = [0, 12], sizes = [64, 128], strides = [1, 1]} : vector<64x144xbf16> to vector<64x128xbf16>
    %cst_35 = arith.constant dense<0.000000e+00> : vector<32x128xf32>
    %42 = tpu.matmul %40, %41, %cst_35 {dimension_numbers = #tpu.dot_dimension_numbers<[1], [0], [0], [1], [0, 0, 1, 1], [], []>} : vector<32x64xbf16>, vector<64x128xbf16>, vector<32x128xf32> -> vector<32x128xf32>
    %43 = arith.addf %38, %42 : vector<32x128xf32>
    %c0_36 = arith.constant 0 : index
    %c0_37 = arith.constant 0 : index
    %44 = vector.load %arg5[%c0_36, %c0_37] : memref<32x1xf32, #tpu.memory_space<vmem>>, vector<32x1xf32>
    %45 = vector.broadcast %44 : vector<32x1xf32> to vector<32x128xf32>
    %46 = arith.addf %43, %45 : vector<32x128xf32>
    %cst_38 = arith.constant 0.000000e+00 : f32
    %47 = vector.broadcast %cst_38 : f32 to vector<32x128xf32>
    %48 = arith.maximumf %46, %47 : vector<32x128xf32>
    %49 = arith.truncf %48 : vector<32x128xf32> to vector<32x128xbf16>
    %c0_39 = arith.constant 0 : index
    %c0_40 = arith.constant 0 : index
    %50 = vector.load %arg6[%c0_39, %c0_40] : memref<32x128xbf16, #tpu.memory_space<vmem>>, vector<32x128xbf16>
    tpu.vector_store %arg6[%c0_39, %c0_40], %49 {strides = array<i32>} : memref<32x128xbf16, #tpu.memory_space<vmem>>, vector<32x128xbf16>,
    return
  }
  func.func @transform_0(%arg0: i32) -> (i32, i32) {
    %c0_i32 = arith.constant 0 : i32
    %c0_i32_0 = arith.constant 0 : i32
    return %c0_i32, %arg0 : i32, i32
  }
  func.func @transform_1(%arg0: i32) -> (i32, i32, i32) {
    %c0_i32 = arith.constant 0 : i32
    %c0_i32_0 = arith.constant 0 : i32
    %c0_i32_1 = arith.constant 0 : i32
    %c0_i32_2 = arith.constant 0 : i32
    return %c0_i32, %c0_i32_0, %c0_i32_1 : i32, i32, i32
  }
  func.func @transform_2(%arg0: i32) -> (i32, i32) {
    %c0_i32 = arith.constant 0 : i32
    %c0_i32_0 = arith.constant 0 : i32
    %c0_i32_1 = arith.constant 0 : i32
    return %c0_i32, %c0_i32_0 : i32, i32
  }
  func.func @transform_3(%arg0: i32) -> (i32, i32, i32) {
    %c0_i32 = arith.constant 0 : i32
    %c0_i32_0 = arith.constant 0 : i32
    %c0_i32_1 = arith.constant 0 : i32
    %c0_i32_2 = arith.constant 0 : i32
    return %c0_i32, %c0_i32_0, %c0_i32_1 : i32, i32, i32
  }
  func.func @transform_4(%arg0: i32) -> (i32, i32) {
    %c0_i32 = arith.constant 0 : i32
    %c0_i32_0 = arith.constant 0 : i32
    %c0_i32_1 = arith.constant 0 : i32
    return %c0_i32, %c0_i32_0 : i32, i32
  }
  func.func @transform_5(%arg0: i32) -> (i32, i32) {
    %c0_i32 = arith.constant 0 : i32
    %c0_i32_0 = arith.constant 0 : i32
    return %c0_i32, %arg0 : i32, i32
  }
}

module attributes {stable_mosaic.version = 11 : i64} {
  func.func @_mlp_kernel(%arg0: i32, %arg1: memref<8x4096xbf16, #tpu.memory_space<vmem>>, %arg2: memref<4096x256xbf16, #tpu.memory_space<vmem>>, %arg3: memref<1x256xf32, #tpu.memory_space<vmem>>, %arg4: memref<256x128xbf16, #tpu.memory_space<vmem>>, %arg5: memref<1x128xf32, #tpu.memory_space<vmem>>, %arg6: memref<8x128xf32, #tpu.memory_space<vmem>>) attributes {dimension_semantics = [#tpu.dimension_semantics<parallel>], iteration_bounds = array<i64: 1>, scalar_prefetch = 0 : i64, scratch_operands = 0 : i64, tpu.core_type = #tpu.core_type<tc>, window_params = [{transform_indices = @transform_0, window_bounds = array<i64: 8, 4096>}, {pipeline_mode = #tpu.pipeline_mode<synchronous>, transform_indices = @transform_1, window_bounds = array<i64: 4096, 256>}, {pipeline_mode = #tpu.pipeline_mode<synchronous>, transform_indices = @transform_2, window_bounds = array<i64: 1, 256>}, {pipeline_mode = #tpu.pipeline_mode<synchronous>, transform_indices = @transform_3, window_bounds = array<i64: 256, 128>}, {pipeline_mode = #tpu.pipeline_mode<synchronous>, transform_indices = @transform_4, window_bounds = array<i64: 1, 128>}, {transform_indices = @transform_5, window_bounds = array<i64: 8, 128>}]} {
    %c0 = arith.constant 0 : index
    %c0_0 = arith.constant 0 : index
    %0 = vector.load %arg1[%c0, %c0_0] : memref<8x4096xbf16, #tpu.memory_space<vmem>>, vector<8x4096xbf16>
    %c0_1 = arith.constant 0 : index
    %c0_2 = arith.constant 0 : index
    %1 = vector.load %arg2[%c0_1, %c0_2] : memref<4096x256xbf16, #tpu.memory_space<vmem>>, vector<4096x256xbf16>
    %cst = arith.constant dense<0.000000e+00> : vector<8x256xf32>
    %2 = tpu.matmul %0, %1, %cst {dimension_numbers = #tpu.dot_dimension_numbers<[1], [0], [0], [1], [0, 0, 1, 1], [], []>} : vector<8x4096xbf16>, vector<4096x256xbf16>, vector<8x256xf32> -> vector<8x256xf32>
    %c0_3 = arith.constant 0 : index
    %c0_4 = arith.constant 0 : index
    %3 = vector.load %arg3[%c0_3, %c0_4] : memref<1x256xf32, #tpu.memory_space<vmem>>, vector<1x256xf32>
    %4 = vector.broadcast %3 : vector<1x256xf32> to vector<8x256xf32>
    %5 = arith.addf %2, %4 : vector<8x256xf32>
    %cst_5 = arith.constant 0.000000e+00 : f32
    %6 = vector.broadcast %cst_5 : f32 to vector<8x256xf32>
    %7 = arith.maximumf %5, %6 : vector<8x256xf32>
    %8 = arith.truncf %7 : vector<8x256xf32> to vector<8x256xbf16>
    %c0_6 = arith.constant 0 : index
    %c0_7 = arith.constant 0 : index
    %9 = vector.load %arg4[%c0_6, %c0_7] : memref<256x128xbf16, #tpu.memory_space<vmem>>, vector<256x128xbf16>
    %cst_8 = arith.constant dense<0.000000e+00> : vector<8x128xf32>
    %10 = tpu.matmul %8, %9, %cst_8 {dimension_numbers = #tpu.dot_dimension_numbers<[1], [0], [0], [1], [0, 0, 1, 1], [], []>} : vector<8x256xbf16>, vector<256x128xbf16>, vector<8x128xf32> -> vector<8x128xf32>
    %c0_9 = arith.constant 0 : index
    %c0_10 = arith.constant 0 : index
    %11 = vector.load %arg5[%c0_9, %c0_10] : memref<1x128xf32, #tpu.memory_space<vmem>>, vector<1x128xf32>
    %12 = vector.broadcast %11 : vector<1x128xf32> to vector<8x128xf32>
    %13 = arith.addf %10, %12 : vector<8x128xf32>
    %c0_11 = arith.constant 0 : index
    %c0_12 = arith.constant 0 : index
    %14 = vector.load %arg6[%c0_11, %c0_12] : memref<8x128xf32, #tpu.memory_space<vmem>>, vector<8x128xf32>
    tpu.vector_store %arg6[%c0_11, %c0_12], %13 {strides = array<i32>} : memref<8x128xf32, #tpu.memory_space<vmem>>, vector<8x128xf32>,
    return
  }
  func.func @transform_0(%arg0: i32) -> (i32, i32) {
    %c0_i32 = arith.constant 0 : i32
    %c0_i32_0 = arith.constant 0 : i32
    return %arg0, %c0_i32 : i32, i32
  }
  func.func @transform_1(%arg0: i32) -> (i32, i32) {
    %c0_i32 = arith.constant 0 : i32
    %c0_i32_0 = arith.constant 0 : i32
    %c0_i32_1 = arith.constant 0 : i32
    return %c0_i32, %c0_i32_0 : i32, i32
  }
  func.func @transform_2(%arg0: i32) -> (i32, i32) {
    %c0_i32 = arith.constant 0 : i32
    %c0_i32_0 = arith.constant 0 : i32
    %c0_i32_1 = arith.constant 0 : i32
    return %c0_i32, %c0_i32_0 : i32, i32
  }
  func.func @transform_3(%arg0: i32) -> (i32, i32) {
    %c0_i32 = arith.constant 0 : i32
    %c0_i32_0 = arith.constant 0 : i32
    %c0_i32_1 = arith.constant 0 : i32
    return %c0_i32, %c0_i32_0 : i32, i32
  }
  func.func @transform_4(%arg0: i32) -> (i32, i32) {
    %c0_i32 = arith.constant 0 : i32
    %c0_i32_0 = arith.constant 0 : i32
    %c0_i32_1 = arith.constant 0 : i32
    return %c0_i32, %c0_i32_0 : i32, i32
  }
  func.func @transform_5(%arg0: i32) -> (i32, i32) {
    %c0_i32 = arith.constant 0 : i32
    %c0_i32_0 = arith.constant 0 : i32
    return %arg0, %c0_i32 : i32, i32
  }
}

</mosaic_0001>

<llo_original>
// kernel: dqn_forward.2
$region0: #{dqn_forward.2}
  #allocation0 [shape = 'u32[]', space=smem, size = 0x4, offset = 0x4, fixed_abs, tag = 'smem constant byte address 0x4 - core index']
  #allocation1 [shape = 'u32[144,128]{1,0:T(1,128)}', space=vmem, size = 0x12000, scoped, tag = 'internal scratch']
  %s0 = inlined_call_operand.vmem [shape: bf16[256,512], index: 0, kind: input, shape index: {}]
  %s1 = inlined_call_operand.vmem [shape: bf16[4,64,256], index: 1, kind: input, shape index: {}]
  %s2 = inlined_call_operand.vmem [shape: f32[64,1], index: 2, kind: input, shape index: {}]
  %s3 = inlined_call_operand.vmem [shape: bf16[4,32,64], index: 3, kind: input, shape index: {}]
  %s4 = inlined_call_operand.vmem [shape: f32[32,1], index: 4, kind: input, shape index: {}]
  %s5 = inlined_call_operand.vmem [shape: bf16[32,256], index: 5, kind: output, shape index: {}]
  %s6 = sld [smem:[#allocation0]]
  $region128: #{dqn_forward.2} parent=0
    _
  %s8 = ssub.s32 1, %s6
  %s9 = scalar_select 0, %s8, %s6
  $region1: #{dqn_forward.2} parent=0
    #allocation2 [shape = 'u8[262144]{0}', space=vmem, size = 0x40000, scoped, tag = 'input window, operand 0']
    #allocation3 [shape = 'u8[16384]{0}', space=vmem, size = 0x4000, scoped, tag = 'output window, operand 0']
    loop: start=0, step=1, limit=4
    $region2: #{dqn_forward.2} parent=1 // loop_pre_header
      _
    $region3: #{dqn_forward.2} parent=1 // loop_header
      %s11 = sphi 0, %s15
      %p12 = scmp.ge.s32.totalorder %s11, 4
      %s21 = sphi 0, %s23
      %s24 = sphi 0, %s21
      %s25 = sphi 0, %s24
      %s41 = sphi 0, %s25
      %s45 = sphi 0, %s45
      %s47 = sphi 0, %s45
      %s48 = sphi 0, %s47
      %s62 = sphi 0, %s48
      %s66 = sphi 0, %s66
      %s68 = sphi 0, %s66
      %s69 = sphi 0, %s68
      %s83 = sphi 0, %s69
      %s87 = sphi 0, %s87
      %s89 = sphi 0, %s87
      %s90 = sphi 0, %s89
      %s104 = sphi 0, %s90
      %s108 = sphi 0, %s108
      %s110 = sphi 0, %s108
      %s111 = sphi 0, %s110
      %s125 = sphi 0, %s111
      %s131 = sphi 0, %s133
      %s134 = sphi 0, %s131
      %s135 = sphi 0, %s134
      %s151 = sphi 0, %s135
    $region4: #{dqn_forward.2} parent=1 // loop_header_branch
      %14 = sbr.rel (%p12) target = $region8
    $region5: #{dqn_forward.2} parent=1 // loop_body
      %s16 = ssub.s32 %s11, 1
      %s17 = ssub.s32 %s11, 2
      %s18 = sadd.s32 %s11, 1
      %s19 = ssub.s32 %s11, %s18
      %p20 = scmp.eq.s32.totalorder %s19, 0
      %s22 = sadd.s32 %s21, 1
      %s23 = scalar_select %p20, %s21, %s22
      %p26 = pneg %p20
      %p27 = scmp.eq.s32.totalorder %s11, 1
      %p28 = por %p26, %p27
      %p29 = scmp.ne.s32.totalorder %s21, %s24
      %p30 = scmp.eq.s32.totalorder %s11, 0
      %p31 = por %p29, %p30
      %p32 = scmp.ne.s32.totalorder %s21, %s24
      %p33 = scmp.eq.s32.totalorder %s16, 1
      %p34 = por %p32, %p33
      %p35 = scmp.ne.s32.totalorder %s24, %s25
      %p36 = scmp.eq.s32.totalorder %s16, 0
      %p37 = por %p35, %p36
      %p38 = scmp.ne.s32.totalorder %s24, %s25
      %p39 = scmp.eq.s32.totalorder %s17, 1
      %p40 = por %p38, %p39
      %p42 = scmp.ne.s32.totalorder %s25, %s41
      %p43 = scmp.eq.s32.totalorder %s17, 0
      %p44 = por %p42, %p43
      %s46 = sadd.s32 %s45, 1
      %p49 = scmp.eq.s32.totalorder %s11, 1
      %p50 = scmp.ne.s32.totalorder %s45, %s47
      %p51 = scmp.eq.s32.totalorder %s11, 0
      %p52 = por %p50, %p51
      %p53 = scmp.ne.s32.totalorder %s45, %s47
      %p54 = scmp.eq.s32.totalorder %s16, 1
      %p55 = por %p53, %p54
      %p56 = scmp.ne.s32.totalorder %s47, %s48
      %p57 = scmp.eq.s32.totalorder %s16, 0
      %p58 = por %p56, %p57
      %p59 = scmp.ne.s32.totalorder %s47, %s48
      %p60 = scmp.eq.s32.totalorder %s17, 1
      %p61 = por %p59, %p60
      %p63 = scmp.ne.s32.totalorder %s48, %s62
      %p64 = scmp.eq.s32.totalorder %s17, 0
      %p65 = por %p63, %p64
      %s67 = sadd.s32 %s66, 1
      %p70 = scmp.eq.s32.totalorder %s11, 1
      %p71 = scmp.ne.s32.totalorder %s66, %s68
      %p72 = scmp.eq.s32.totalorder %s11, 0
      %p73 = por %p71, %p72
      %p74 = scmp.ne.s32.totalorder %s66, %s68
      %p75 = scmp.eq.s32.totalorder %s16, 1
      %p76 = por %p74, %p75
      %p77 = scmp.ne.s32.totalorder %s68, %s69
      %p78 = scmp.eq.s32.totalorder %s16, 0
      %p79 = por %p77, %p78
      %p80 = scmp.ne.s32.totalorder %s68, %s69
      %p81 = scmp.eq.s32.totalorder %s17, 1
      %p82 = por %p80, %p81
      %p84 = scmp.ne.s32.totalorder %s69, %s83
      %p85 = scmp.eq.s32.totalorder %s17, 0
      %p86 = por %p84, %p85
      %s88 = sadd.s32 %s87, 1
      %p91 = scmp.eq.s32.totalorder %s11, 1
      %p92 = scmp.ne.s32.totalorder %s87, %s89
      %p93 = scmp.eq.s32.totalorder %s11, 0
      %p94 = por %p92, %p93
      %p95 = scmp.ne.s32.totalorder %s87, %s89
      %p96 = scmp.eq.s32.totalorder %s16, 1
      %p97 = por %p95, %p96
      %p98 = scmp.ne.s32.totalorder %s89, %s90
      %p99 = scmp.eq.s32.totalorder %s16, 0
      %p100 = por %p98, %p99
      %p101 = scmp.ne.s32.totalorder %s89, %s90
      %p102 = scmp.eq.s32.totalorder %s17, 1
      %p103 = por %p101, %p102
      %p105 = scmp.ne.s32.totalorder %s90, %s104
      %p106 = scmp.eq.s32.totalorder %s17, 0
      %p107 = por %p105, %p106
      %s109 = sadd.s32 %s108, 1
      %p112 = scmp.eq.s32.totalorder %s11, 1
      %p113 = scmp.ne.s32.totalorder %s108, %s110
      %p114 = scmp.eq.s32.totalorder %s11, 0
      %p115 = por %p113, %p114
      %p116 = scmp.ne.s32.totalorder %s108, %s110
      %p117 = scmp.eq.s32.totalorder %s16, 1
      %p118 = por %p116, %p117
      %p119 = scmp.ne.s32.totalorder %s110, %s111
      %p120 = scmp.eq.s32.totalorder %s16, 0
      %p121 = por %p119, %p120
      %p122 = scmp.ne.s32.totalorder %s110, %s111
      %p123 = scmp.eq.s32.totalorder %s17, 1
      %p124 = por %p122, %p123
      %p126 = scmp.ne.s32.totalorder %s111, %s125
      %p127 = scmp.eq.s32.totalorder %s17, 0
      %p128 = por %p126, %p127
      %s129 = ssub.s32 %s11, %s18
      %p130 = scmp.eq.s32.totalorder %s129, 0
      %s132 = sadd.s32 %s131, 1
      %s133 = scalar_select %p130, %s131, %s132
      %p136 = pneg %p130
      %p137 = scmp.eq.s32.totalorder %s11, 1
      %p138 = por %p136, %p137
      %p139 = scmp.ne.s32.totalorder %s131, %s134
      %p140 = scmp.eq.s32.totalorder %s11, 0
      %p141 = por %p139, %p140
      %p142 = scmp.ne.s32.totalorder %s131, %s134
      %p143 = scmp.eq.s32.totalorder %s16, 1
      %p144 = por %p142, %p143
      %p145 = scmp.ne.s32.totalorder %s134, %s135
      %p146 = scmp.eq.s32.totalorder %s16, 0
      %p147 = por %p145, %p146
      %p148 = scmp.ne.s32.totalorder %s134, %s135
      %p149 = scmp.eq.s32.totalorder %s17, 1
      %p150 = por %p148, %p149
      %p152 = scmp.ne.s32.totalorder %s135, %s151
      %p153 = scmp.eq.s32.totalorder %s17, 0
      %p154 = por %p152, %p153
      %p155 = scmp.le.s32.totalorder 1, %s11
      %p156 = scmp.lt.s32.totalorder %s11, 3
      %p157 = pnand %p155, %p156
      %p158 = pneg %p157
      // Predicated region
      $region9: #{dqn_forward.2} parent=5 // pred_check
        _
      $region10: #{dqn_forward.2} parent=5 // pred_check_branch
        %160 = sbr.rel (%p157) target = $region12
      $region11: #{dqn_forward.2} parent=5 // pred_region
        %s161 = ssub.s32 %s11, 1
        // Predicated region
        $region13: #{dqn_forward.2} parent=11 // pred_check
          %p162 = pneg %p58
        $region14: #{dqn_forward.2} parent=11 // pred_check_branch
          %164 = sbr.rel (%p162) target = $region16
        $region15: #{dqn_forward.2} parent=11 // pred_region
          _
        $region16: #{dqn_forward.2} parent=11 // pred_fallthru
          _
        // Predicated region
        $region17: #{dqn_forward.2} parent=11 // pred_check
          %p165 = pneg %p79
        $region18: #{dqn_forward.2} parent=11 // pred_check_branch
          %167 = sbr.rel (%p165) target = $region20
        $region19: #{dqn_forward.2} parent=11 // pred_region
          _
        $region20: #{dqn_forward.2} parent=11 // pred_fallthru
          _
        // Predicated region
        $region21: #{dqn_forward.2} parent=11 // pred_check
          %p168 = pneg %p100
        $region22: #{dqn_forward.2} parent=11 // pred_check_branch
          %170 = sbr.rel (%p168) target = $region24
        $region23: #{dqn_forward.2} parent=11 // pred_region
          _
        $region24: #{dqn_forward.2} parent=11 // pred_fallthru
          _
        // Predicated region
        $region25: #{dqn_forward.2} parent=11 // pred_check
          %p171 = pneg %p121
        $region26: #{dqn_forward.2} parent=11 // pred_check_branch
          %173 = sbr.rel (%p171) target = $region28
        $region27: #{dqn_forward.2} parent=11 // pred_region
          _
        $region28: #{dqn_forward.2} parent=11 // pred_fallthru
          _
      $region12: #{dqn_forward.2} parent=5 // pred_fallthru
        _
      %p174 = scmp.lt.s32.totalorder %s11, 2
      // Predicated region
      $region29: #{dqn_forward.2} parent=5 // pred_check
        %p175 = pneg %p174
      $region30: #{dqn_forward.2} parent=5 // pred_check_branch
        %177 = sbr.rel (%p175) target = $region32
      $region31: #{dqn_forward.2} parent=5 // pred_region
        // Predicated region
        $region33: #{dqn_forward.2} parent=31 // pred_check
          %p178 = pneg %p31
        $region34: #{dqn_forward.2} parent=31 // pred_check_branch
          %180 = sbr.rel (%p178) target = $region36
        $region35: #{dqn_forward.2} parent=31 // pred_region
          %s181 = sand.u32 %s21, 1
          %s182 = sand.u32 %s21, 1
          %s183 = smul.addr %s182, 256
          %s184 = scalar_lea.vmem [#allocation2], %s183
          %s185 = smul.u32 2, %s11
          %s186 = smul.addr %s185, 4
          %s187 = scalar_lea.vmem %s0, %s186
          // Predicated region
          $region37: #{dqn_forward.2} parent=35 // pred_check
            _
          $region38: #{dqn_forward.2} parent=35 // pred_check_branch
            %189 = sbr.rel (0) target = $region40
          $region39: #{dqn_forward.2} parent=35 // pred_region
            // Predicated region
            $region41: #{dqn_forward.2} parent=39 // pred_check
              _
            $region42: #{dqn_forward.2} parent=39 // pred_check_branch
              %191 = sbr.rel (0) target = $region44
            $region43: #{dqn_forward.2} parent=39 // pred_region
              // Predicated region
              $region56: #{dqn_forward.2} parent=43 // pred_check
                _
              $region57: #{dqn_forward.2} parent=43 // pred_check_branch
                %269 = sbr.rel (0) target = $region59
              $region58: #{dqn_forward.2} parent=43 // pred_region
                loop: start=0, step=1, limit=1
                $region60: #{dqn_forward.2} parent=58 // loop_pre_header
                  _
                $region61: #{dqn_forward.2} parent=58 // loop_header
                  %s271 = sphi 0, %s275
                  %p272 = scmp.ge.s32.totalorder %s271, 1
                  %s276 = sphi %s187, %s187
                  %s277 = sphi %s184, %s184
                $region62: #{dqn_forward.2} parent=58 // loop_header_branch
                  %274 = sbr.rel (%p272) target = $region66
                $region63: #{dqn_forward.2} parent=58 // loop_body
                  %v278 = vld [vmem:[%s276] sm:$0xff]
                  %279 = vst [vmem:[%s277] sm:$0xff] %v278
                  %v280 = vld [vmem:[%s276 + $0x10] sm:$0xff]
                  %281 = vst [vmem:[%s277 + $0x8] sm:$0xff] %v280
                  %v282 = vld [vmem:[%s276 + $0x20] sm:$0xff]
                  %283 = vst [vmem:[%s277 + $0x10] sm:$0xff] %v282
                  %v284 = vld [vmem:[%s276 + $0x30] sm:$0xff]
                  %285 = vst [vmem:[%s277 + $0x18] sm:$0xff] %v284
                  %v286 = vld [vmem:[%s276 + $0x40] sm:$0xff]
                  %287 = vst [vmem:[%s277 + $0x20] sm:$0xff] %v286
                  %v288 = vld [vmem:[%s276 + $0x50] sm:$0xff]
                  %289 = vst [vmem:[%s277 + $0x28] sm:$0xff] %v288
                  %v290 = vld [vmem:[%s276 + $0x60] sm:$0xff]
                  %291 = vst [vmem:[%s277 + $0x30] sm:$0xff] %v290
                  %v292 = vld [vmem:[%s276 + $0x70] sm:$0xff]
                  %293 = vst [vmem:[%s277 + $0x38] sm:$0xff] %v292
                  %v294 = vld [vmem:[%s276 + $0x80] sm:$0xff]
                  %295 = vst [vmem:[%s277 + $0x40] sm:$0xff] %v294
                  %v296 = vld [vmem:[%s276 + $0x90] sm:$0xff]
                  %297 = vst [vmem:[%s277 + $0x48] sm:$0xff] %v296
                  %v298 = vld [vmem:[%s276 + $0xa0] sm:$0xff]
                  %299 = vst [vmem:[%s277 + $0x50] sm:$0xff] %v298
                  %v300 = vld [vmem:[%s276 + $0xb0] sm:$0xff]
                  %301 = vst [vmem:[%s277 + $0x58] sm:$0xff] %v300
                  %v302 = vld [vmem:[%s276 + $0xc0] sm:$0xff]
                  %303 = vst [vmem:[%s277 + $0x60] sm:$0xff] %v302
                  %v304 = vld [vmem:[%s276 + $0xd0] sm:$0xff]
                  %305 = vst [vmem:[%s277 + $0x68] sm:$0xff] %v304
                  %v306 = vld [vmem:[%s276 + $0xe0] sm:$0xff]
                  %307 = vst [vmem:[%s277 + $0x70] sm:$0xff] %v306
                  %v308 = vld [vmem:[%s276 + $0xf0] sm:$0xff]
                  %309 = vst [vmem:[%s277 + $0x78] sm:$0xff] %v308
                  %v310 = vld [vmem:[%s276 + $0x100] sm:$0xff]
                  %311 = vst [vmem:[%s277 + $0x80] sm:$0xff] %v310
                  %v312 = vld [vmem:[%s276 + $0x110] sm:$0xff]
                  %313 = vst [vmem:[%s277 + $0x88] sm:$0xff] %v312
                  %v314 = vld [vmem:[%s276 + $0x120] sm:$0xff]
                  %315 = vst [vmem:[%s277 + $0x90] sm:$0xff] %v314
                  %v316 = vld [vmem:[%s276 + $0x130] sm:$0xff]
                  %317 = vst [vmem:[%s277 + $0x98] sm:$0xff] %v316
                  %v318 = vld [vmem:[%s276 + $0x140] sm:$0xff]
                  %319 = vst [vmem:[%s277 + $0xa0] sm:$0xff] %v318
                  %v320 = vld [vmem:[%s276 + $0x150] sm:$0xff]
                  %321 = vst [vmem:[%s277 + $0xa8] sm:$0xff] %v320
                  %v322 = vld [vmem:[%s276 + $0x160] sm:$0xff]
                  %323 = vst [vmem:[%s277 + $0xb0] sm:$0xff] %v322
                  %v324 = vld [vmem:[%s276 + $0x170] sm:$0xff]
                  %325 = vst [vmem:[%s277 + $0xb8] sm:$0xff] %v324
                  %v326 = vld [vmem:[%s276 + $0x180] sm:$0xff]
                  %327 = vst [vmem:[%s277 + $0xc0] sm:$0xff] %v326
                  %v328 = vld [vmem:[%s276 + $0x190] sm:$0xff]
                  %329 = vst [vmem:[%s277 + $0xc8] sm:$0xff] %v328
                  %v330 = vld [vmem:[%s276 + $0x1a0] sm:$0xff]
                  %331 = vst [vmem:[%s277 + $0xd0] sm:$0xff] %v330
                  %v332 = vld [vmem:[%s276 + $0x1b0] sm:$0xff]
                  %333 = vst [vmem:[%s277 + $0xd8] sm:$0xff] %v332
                  %v334 = vld [vmem:[%s276 + $0x1c0] sm:$0xff]
                  %335 = vst [vmem:[%s277 + $0xe0] sm:$0xff] %v334
                  %v336 = vld [vmem:[%s276 + $0x1d0] sm:$0xff]
                  %337 = vst [vmem:[%s277 + $0xe8] sm:$0xff] %v336
                  %v338 = vld [vmem:[%s276 + $0x1e0] sm:$0xff]
                  %339 = vst [vmem:[%s277 + $0xf0] sm:$0xff] %v338
                  %v340 = vld [vmem:[%s276 + $0x1f0] sm:$0xff]
                  %341 = vst [vmem:[%s277 + $0xf8] sm:$0xff] %v340
                $region64: #{dqn_forward.2} parent=58 // loop_footer
                  %s275 = sadd.s32 1, %s271
                $region65: #{dqn_forward.2} parent=58 // loop_footer_branch
                  %270 = sbr.rel target = $region61
                $region66: #{dqn_forward.2} parent=58 // loop_exit
                  _
              $region59: #{dqn_forward.2} parent=43 // pred_fallthru
                _
              // Predicated region
              $region67: #{dqn_forward.2} parent=43 // pred_check
                _
              $region68: #{dqn_forward.2} parent=43 // pred_check_branch
                %343 = sbr.rel target = $region70
              $region69: #{dqn_forward.2} parent=43 // pred_region
                _
              $region70: #{dqn_forward.2} parent=43 // pred_fallthru
                _
            $region44: #{dqn_forward.2} parent=39 // pred_fallthru
              _
            // Predicated region
            $region45: #{dqn_forward.2} parent=39 // pred_check
              _
            $region46: #{dqn_forward.2} parent=39 // pred_check_branch
              %193 = sbr.rel target = $region48
            $region47: #{dqn_forward.2} parent=39 // pred_region
              %s195 = ssub.s32 256, 1
              loop: start=0, step=1, limit=1
              $region49: #{dqn_forward.2} parent=47 // loop_pre_header
                _
              $region50: #{dqn_forward.2} parent=47 // loop_header
                %s197 = sphi 0, %s201
                %p198 = scmp.ge.s32.totalorder %s197, 1
                %s202 = sphi %s187, %s187
                %s203 = sphi %s184, %s184
              $region51: #{dqn_forward.2} parent=47 // loop_header_branch
                %200 = sbr.rel (%p198) target = $region55
              $region52: #{dqn_forward.2} parent=47 // loop_body
                %v204 = vld [vmem:[%s202] sm:%s195]
                %205 = vst [vmem:[%s203] sm:%s195] %v204
                %v206 = vld [vmem:[%s202 + $0x10] sm:%s195]
                %207 = vst [vmem:[%s203 + $0x8] sm:%s195] %v206
                %v208 = vld [vmem:[%s202 + $0x20] sm:%s195]
                %209 = vst [vmem:[%s203 + $0x10] sm:%s195] %v208
                %v210 = vld [vmem:[%s202 + $0x30] sm:%s195]
                %211 = vst [vmem:[%s203 + $0x18] sm:%s195] %v210
                %v212 = vld [vmem:[%s202 + $0x40] sm:%s195]
                %213 = vst [vmem:[%s203 + $0x20] sm:%s195] %v212
                %v214 = vld [vmem:[%s202 + $0x50] sm:%s195]
                %215 = vst [vmem:[%s203 + $0x28] sm:%s195] %v214
                %v216 = vld [vmem:[%s202 + $0x60] sm:%s195]
                %217 = vst [vmem:[%s203 + $0x30] sm:%s195] %v216
                %v218 = vld [vmem:[%s202 + $0x70] sm:%s195]
                %219 = vst [vmem:[%s203 + $0x38] sm:%s195] %v218
                %v220 = vld [vmem:[%s202 + $0x80] sm:%s195]
                %221 = vst [vmem:[%s203 + $0x40] sm:%s195] %v220
                %v222 = vld [vmem:[%s202 + $0x90] sm:%s195]
                %223 = vst [vmem:[%s203 + $0x48] sm:%s195] %v222
                %v224 = vld [vmem:[%s202 + $0xa0] sm:%s195]
                %225 = vst [vmem:[%s203 + $0x50] sm:%s195] %v224
                %v226 = vld [vmem:[%s202 + $0xb0] sm:%s195]
                %227 = vst [vmem:[%s203 + $0x58] sm:%s195] %v226
                %v228 = vld [vmem:[%s202 + $0xc0] sm:%s195]
                %229 = vst [vmem:[%s203 + $0x60] sm:%s195] %v228
                %v230 = vld [vmem:[%s202 + $0xd0] sm:%s195]
                %231 = vst [vmem:[%s203 + $0x68] sm:%s195] %v230
                %v232 = vld [vmem:[%s202 + $0xe0] sm:%s195]
                %233 = vst [vmem:[%s203 + $0x70] sm:%s195] %v232
                %v234 = vld [vmem:[%s202 + $0xf0] sm:%s195]
                %235 = vst [vmem:[%s203 + $0x78] sm:%s195] %v234
                %v236 = vld [vmem:[%s202 + $0x100] sm:%s195]
                %237 = vst [vmem:[%s203 + $0x80] sm:%s195] %v236
                %v238 = vld [vmem:[%s202 + $0x110] sm:%s195]
                %239 = vst [vmem:[%s203 + $0x88] sm:%s195] %v238
                %v240 = vld [vmem:[%s202 + $0x120] sm:%s195]
                %241 = vst [vmem:[%s203 + $0x90] sm:%s195] %v240
                %v242 = vld [vmem:[%s202 + $0x130] sm:%s195]
                %243 = vst [vmem:[%s203 + $0x98] sm:%s195] %v242
                %v244 = vld [vmem:[%s202 + $0x140] sm:%s195]
                %245 = vst [vmem:[%s203 + $0xa0] sm:%s195] %v244
                %v246 = vld [vmem:[%s202 + $0x150] sm:%s195]
                %247 = vst [vmem:[%s203 + $0xa8] sm:%s195] %v246
                %v248 = vld [vmem:[%s202 + $0x160] sm:%s195]
                %249 = vst [vmem:[%s203 + $0xb0] sm:%s195] %v248
                %v250 = vld [vmem:[%s202 + $0x170] sm:%s195]
                %251 = vst [vmem:[%s203 + $0xb8] sm:%s195] %v250
                %v252 = vld [vmem:[%s202 + $0x180] sm:%s195]
                %253 = vst [vmem:[%s203 + $0xc0] sm:%s195] %v252
                %v254 = vld [vmem:[%s202 + $0x190] sm:%s195]
                %255 = vst [vmem:[%s203 + $0xc8] sm:%s195] %v254
                %v256 = vld [vmem:[%s202 + $0x1a0] sm:%s195]
                %257 = vst [vmem:[%s203 + $0xd0] sm:%s195] %v256
                %v258 = vld [vmem:[%s202 + $0x1b0] sm:%s195]
                %259 = vst [vmem:[%s203 + $0xd8] sm:%s195] %v258
                %v260 = vld [vmem:[%s202 + $0x1c0] sm:%s195]
                %261 = vst [vmem:[%s203 + $0xe0] sm:%s195] %v260
                %v262 = vld [vmem:[%s202 + $0x1d0] sm:%s195]
                %263 = vst [vmem:[%s203 + $0xe8] sm:%s195] %v262
                %v264 = vld [vmem:[%s202 + $0x1e0] sm:%s195]
                %265 = vst [vmem:[%s203 + $0xf0] sm:%s195] %v264
                %v266 = vld [vmem:[%s202 + $0x1f0] sm:%s195]
                %267 = vst [vmem:[%s203 + $0xf8] sm:%s195] %v266
              $region53: #{dqn_forward.2} parent=47 // loop_footer
                %s201 = sadd.s32 1, %s197
              $region54: #{dqn_forward.2} parent=47 // loop_footer_branch
                %196 = sbr.rel target = $region50
              $region55: #{dqn_forward.2} parent=47 // loop_exit
                _
            $region48: #{dqn_forward.2} parent=39 // pred_fallthru
              _
          $region40: #{dqn_forward.2} parent=35 // pred_fallthru
            _
          %344 = vnop
        $region36: #{dqn_forward.2} parent=31 // pred_fallthru
          _
      $region32: #{dqn_forward.2} parent=5 // pred_fallthru
        _
      %p345 = scmp.le.s32.totalorder 1, %s11
      %p346 = scmp.lt.s32.totalorder %s11, 3
      %p347 = pnand %p345, %p346
      %p348 = pneg %p347
      // Predicated region
      $region71: #{dqn_forward.2} parent=5 // pred_check
        _
      $region72: #{dqn_forward.2} parent=5 // pred_check_branch
        %350 = sbr.rel (%p347) target = $region74
      $region73: #{dqn_forward.2} parent=5 // pred_region
        %s351 = ssub.s32 %s11, 1
        %s352 = sand.u32 %s24, 1
        %s353 = sand.u32 %s24, 1
        %s354 = smul.addr %s353, 256
        %s355 = scalar_lea.vmem [#allocation2], %s354
        // Predicated region
        $region75: #{dqn_forward.2} parent=73 // pred_check
          %p356 = pneg %p37
        $region76: #{dqn_forward.2} parent=73 // pred_check_branch
          %358 = sbr.rel (%p356) target = $region78
        $region77: #{dqn_forward.2} parent=73 // pred_region
          _
        $region78: #{dqn_forward.2} parent=73 // pred_fallthru
          _
        %s359 = sand.u32 %s24, 1
        %s360 = sand.u32 %s24, 1
        %s361 = smul.addr %s360, 256
        %s362 = scalar_lea.vmem [#allocation2], %s361
        %p363 = pneg %p37
        %p364 = pneg %p34
        %p365 = pneg %p58
        %p366 = pneg %p55
        %p367 = pneg %p79
        %p368 = pneg %p76
        %p369 = pneg %p100
        %p370 = pneg %p97
        %p371 = pneg %p121
        %p372 = pneg %p118
        %p373 = pneg %p147
        %p374 = pneg %p144
        %s375 = sand.u32 %s134, 1
        %s376 = sand.u32 %s134, 1
        %s377 = smul.addr %s376, 16
        %s378 = scalar_lea.vmem [#allocation3], %s377
        %s379 = smul.u32 2, %s16
        %v381 = vld [vmem:[%s1] sm:$0xff]
        %v382 = vld [vmem:[%s1 + $0x8] sm:$0xff]
        %v383 = vld [vmem:[%s1 + $0x10] sm:$0xff]
        %v384 = vld [vmem:[%s1 + $0x18] sm:$0xff]
        %v385 = vld [vmem:[%s1 + $0x20] sm:$0xff]
        %v386 = vld [vmem:[%s1 + $0x28] sm:$0xff]
        %v387 = vld [vmem:[%s1 + $0x30] sm:$0xff]
        %v388 = vld [vmem:[%s1 + $0x38] sm:$0xff]
        %v389 = vld [vmem:[%s355] sm:$0xff]
        %v390 = vld [vmem:[%s355 + $0x8] sm:$0xff]
        %v391 = vld [vmem:[%s355 + $0x10] sm:$0xff]
        %v392 = vld [vmem:[%s355 + $0x18] sm:$0xff]
        %v393 = vld [vmem:[%s355 + $0x20] sm:$0xff]
        %v394 = vld [vmem:[%s355 + $0x28] sm:$0xff]
        %v395 = vld [vmem:[%s355 + $0x30] sm:$0xff]
        %v396 = vld [vmem:[%s355 + $0x38] sm:$0xff]
        %v397 = vld [vmem:[%s355 + $0x40] sm:$0xff]
        %v398 = vld [vmem:[%s355 + $0x48] sm:$0xff]
        %v399 = vld [vmem:[%s355 + $0x50] sm:$0xff]
        %v400 = vld [vmem:[%s355 + $0x58] sm:$0xff]
        %v401 = vld [vmem:[%s355 + $0x60] sm:$0xff]
        %v402 = vld [vmem:[%s355 + $0x68] sm:$0xff]
        %v403 = vld [vmem:[%s355 + $0x70] sm:$0xff]
        %v404 = vld [vmem:[%s355 + $0x78] sm:$0xff]
        %v405 = vld [vmem:[%s355 + $0x80] sm:$0xff]
        %v406 = vld [vmem:[%s355 + $0x88] sm:$0xff]
        %v407 = vld [vmem:[%s355 + $0x90] sm:$0xff]
        %v408 = vld [vmem:[%s355 + $0x98] sm:$0xff]
        %v409 = vld [vmem:[%s355 + $0xa0] sm:$0xff]
        %v410 = vld [vmem:[%s355 + $0xa8] sm:$0xff]
        %v411 = vld [vmem:[%s355 + $0xb0] sm:$0xff]
        %v412 = vld [vmem:[%s355 + $0xb8] sm:$0xff]
        %v413 = vld [vmem:[%s355 + $0xc0] sm:$0xff]
        %v414 = vld [vmem:[%s355 + $0xc8] sm:$0xff]
        %v415 = vld [vmem:[%s355 + $0xd0] sm:$0xff]
        %v416 = vld [vmem:[%s355 + $0xd8] sm:$0xff]
        %v417 = vld [vmem:[%s355 + $0xe0] sm:$0xff]
        %v418 = vld [vmem:[%s355 + $0xe8] sm:$0xff]
        %v419 = vld [vmem:[%s355 + $0xf0] sm:$0xff]
        %v420 = vld [vmem:[%s355 + $0xf8] sm:$0xff]
        %s421 = scalar_lea.vmem %s1, 64
        %v422 = vld [vmem:[%s421] sm:$0xff]
        %v423 = vld [vmem:[%s421 + $0x8] sm:$0xff]
        %v424 = vld [vmem:[%s421 + $0x10] sm:$0xff]
        %v425 = vld [vmem:[%s421 + $0x18] sm:$0xff]
        %v426 = vld [vmem:[%s421 + $0x20] sm:$0xff]
        %v427 = vld [vmem:[%s421 + $0x28] sm:$0xff]
        %v428 = vld [vmem:[%s421 + $0x30] sm:$0xff]
        %v429 = vld [vmem:[%s421 + $0x38] sm:$0xff]
        %v438 = vunpack.c.l.b16 %v422
        %v439 = vunpack.c.h.b16 %v422
        %v440 = vunpack.c.l.b16 %v423
        %v441 = vunpack.c.h.b16 %v423
        %v442 = vunpack.c.l.b16 %v424
        %v443 = vunpack.c.h.b16 %v424
        %v444 = vunpack.c.l.b16 %v425
        %v445 = vunpack.c.h.b16 %v425
        %v446 = vunpack.c.l.b16 %v426
        %v447 = vunpack.c.h.b16 %v426
        %v448 = vunpack.c.l.b16 %v427
        %v449 = vunpack.c.h.b16 %v427
        %v450 = vunpack.c.l.b16 %v428
        %v451 = vunpack.c.h.b16 %v428
        %v452 = vunpack.c.l.b16 %v429
        %v453 = vunpack.c.h.b16 %v429
        %v454 = vpack.c.b16 %v440, %v438
        %v455 = vpack.c.b16 %v441, %v439
        %v456 = vpack.c.b16 %v444, %v442
        %v457 = vpack.c.b16 %v445, %v443
        %v458 = vpack.c.b16 %v448, %v446
        %v459 = vpack.c.b16 %v449, %v447
        %v460 = vpack.c.b16 %v452, %v450
        %v461 = vpack.c.b16 %v453, %v451
        %v502 = vunpack.c.l.b16 %v389
        %v503 = vunpack.c.h.b16 %v389
        %v504 = vunpack.c.l.b16 %v390
        %v505 = vunpack.c.h.b16 %v390
        %v506 = vunpack.c.l.b16 %v391
        %v507 = vunpack.c.h.b16 %v391
        %v508 = vunpack.c.l.b16 %v392
        %v509 = vunpack.c.h.b16 %v392
        %v510 = vunpack.c.l.b16 %v393
        %v511 = vunpack.c.h.b16 %v393
        %v512 = vunpack.c.l.b16 %v394
        %v513 = vunpack.c.h.b16 %v394
        %v514 = vunpack.c.l.b16 %v395
        %v515 = vunpack.c.h.b16 %v395
        %v516 = vunpack.c.l.b16 %v396
        %v517 = vunpack.c.h.b16 %v396
        %v518 = vunpack.c.l.b16 %v397
        %v519 = vunpack.c.h.b16 %v397
        %v520 = vunpack.c.l.b16 %v398
        %v521 = vunpack.c.h.b16 %v398
        %v522 = vunpack.c.l.b16 %v399
        %v523 = vunpack.c.h.b16 %v399
        %v524 = vunpack.c.l.b16 %v400
        %v525 = vunpack.c.h.b16 %v400
        %v526 = vunpack.c.l.b16 %v401
        %v527 = vunpack.c.h.b16 %v401
        %v528 = vunpack.c.l.b16 %v402
        %v529 = vunpack.c.h.b16 %v402
        %v530 = vunpack.c.l.b16 %v403
        %v531 = vunpack.c.h.b16 %v403
        %v532 = vunpack.c.l.b16 %v404
        %v533 = vunpack.c.h.b16 %v404
        %v534 = vunpack.c.l.b16 %v405
        %v535 = vunpack.c.h.b16 %v405
        %v536 = vunpack.c.l.b16 %v406
        %v537 = vunpack.c.h.b16 %v406
        %v538 = vunpack.c.l.b16 %v407
        %v539 = vunpack.c.h.b16 %v407
        %v540 = vunpack.c.l.b16 %v408
        %v541 = vunpack.c.h.b16 %v408
        %v542 = vunpack.c.l.b16 %v409
        %v543 = vunpack.c.h.b16 %v409
        %v544 = vunpack.c.l.b16 %v410
        %v545 = vunpack.c.h.b16 %v410
        %v546 = vunpack.c.l.b16 %v411
        %v547 = vunpack.c.h.b16 %v411
        %v548 = vunpack.c.l.b16 %v412
        %v549 = vunpack.c.h.b16 %v412
        %v550 = vunpack.c.l.b16 %v413
        %v551 = vunpack.c.h.b16 %v413
        %v552 = vunpack.c.l.b16 %v414
        %v553 = vunpack.c.h.b16 %v414
        %v554 = vunpack.c.l.b16 %v415
        %v555 = vunpack.c.h.b16 %v415
        %v556 = vunpack.c.l.b16 %v416
        %v557 = vunpack.c.h.b16 %v416
        %v558 = vunpack.c.l.b16 %v417
        %v559 = vunpack.c.h.b16 %v417
        %v560 = vunpack.c.l.b16 %v418
        %v561 = vunpack.c.h.b16 %v418
        %v562 = vunpack.c.l.b16 %v419
        %v563 = vunpack.c.h.b16 %v419
        %v564 = vunpack.c.l.b16 %v420
        %v565 = vunpack.c.h.b16 %v420
        %v566 = vpack.c.b16 %v504, %v502
        %v567 = vpack.c.b16 %v505, %v503
        %v568 = vpack.c.b16 %v508, %v506
        %v569 = vpack.c.b16 %v509, %v507
        %v570 = vpack.c.b16 %v512, %v510
        %v571 = vpack.c.b16 %v513, %v511
        %v572 = vpack.c.b16 %v516, %v514
        %v573 = vpack.c.b16 %v517, %v515
        %v574 = vpack.c.b16 %v520, %v518
        %v575 = vpack.c.b16 %v521, %v519
        %v576 = vpack.c.b16 %v524, %v522
        %v577 = vpack.c.b16 %v525, %v523
        %v578 = vpack.c.b16 %v528, %v526
        %v579 = vpack.c.b16 %v529, %v527
        %v580 = vpack.c.b16 %v532, %v530
        %v581 = vpack.c.b16 %v533, %v531
        %v582 = vpack.c.b16 %v536, %v534
        %v583 = vpack.c.b16 %v537, %v535
        %v584 = vpack.c.b16 %v540, %v538
        %v585 = vpack.c.b16 %v541, %v539
        %v586 = vpack.c.b16 %v544, %v542
        %v587 = vpack.c.b16 %v545, %v543
        %v588 = vpack.c.b16 %v548, %v546
        %v589 = vpack.c.b16 %v549, %v547
        %v590 = vpack.c.b16 %v552, %v550
        %v591 = vpack.c.b16 %v553, %v551
        %v592 = vpack.c.b16 %v556, %v554
        %v593 = vpack.c.b16 %v557, %v555
        %v594 = vpack.c.b16 %v560, %v558
        %v595 = vpack.c.b16 %v561, %v559
        %v596 = vpack.c.b16 %v564, %v562
        %v597 = vpack.c.b16 %v565, %v563
        %598 = vrot.lane.b32.xlu0 %v566, 127
        %v599 = vpop.permute.xlu0 %598
        %600 = vrot.lane.b32.xlu0 %v567, 127
        %v601 = vpop.permute.xlu0 %600
        %602 = vrot.lane.b32.xlu0 %v568, 127
        %v603 = vpop.permute.xlu0 %602
        %604 = vrot.lane.b32.xlu0 %v569, 127
        %v605 = vpop.permute.xlu0 %604
        %606 = vrot.lane.b32.xlu0 %v570, 127
        %v607 = vpop.permute.xlu0 %606
        %608 = vrot.lane.b32.xlu0 %v571, 127
        %v609 = vpop.permute.xlu0 %608
        %610 = vrot.lane.b32.xlu0 %v572, 127
        %v611 = vpop.permute.xlu0 %610
        %612 = vrot.lane.b32.xlu0 %v573, 127
        %v613 = vpop.permute.xlu0 %612
        %614 = vrot.lane.b32.xlu0 %v574, 127
        %v615 = vpop.permute.xlu0 %614
        %616 = vrot.lane.b32.xlu0 %v575, 127
        %v617 = vpop.permute.xlu0 %616
        %618 = vrot.lane.b32.xlu0 %v576, 127
        %v619 = vpop.permute.xlu0 %618
        %620 = vrot.lane.b32.xlu0 %v577, 127
        %v621 = vpop.permute.xlu0 %620
        %622 = vrot.lane.b32.xlu0 %v578, 127
        %v623 = vpop.permute.xlu0 %622
        %624 = vrot.lane.b32.xlu0 %v579, 127
        %v625 = vpop.permute.xlu0 %624
        %626 = vrot.lane.b32.xlu0 %v580, 127
        %v627 = vpop.permute.xlu0 %626
        %628 = vrot.lane.b32.xlu0 %v581, 127
        %v629 = vpop.permute.xlu0 %628
        %630 = vrot.lane.b32.xlu0 %v582, 127
        %v631 = vpop.permute.xlu0 %630
        %632 = vrot.lane.b32.xlu0 %v583, 127
        %v633 = vpop.permute.xlu0 %632
        %634 = vrot.lane.b32.xlu0 %v584, 127
        %v635 = vpop.permute.xlu0 %634
        %636 = vrot.lane.b32.xlu0 %v585, 127
        %v637 = vpop.permute.xlu0 %636
        %638 = vrot.lane.b32.xlu0 %v586, 127
        %v639 = vpop.permute.xlu0 %638
        %640 = vrot.lane.b32.xlu0 %v587, 127
        %v641 = vpop.permute.xlu0 %640
        %642 = vrot.lane.b32.xlu0 %v588, 127
        %v643 = vpop.permute.xlu0 %642
        %644 = vrot.lane.b32.xlu0 %v589, 127
        %v645 = vpop.permute.xlu0 %644
        %646 = vrot.lane.b32.xlu0 %v590, 127
        %v647 = vpop.permute.xlu0 %646
        %648 = vrot.lane.b32.xlu0 %v591, 127
        %v649 = vpop.permute.xlu0 %648
        %650 = vrot.lane.b32.xlu0 %v592, 127
        %v651 = vpop.permute.xlu0 %650
        %652 = vrot.lane.b32.xlu0 %v593, 127
        %v653 = vpop.permute.xlu0 %652
        %654 = vrot.lane.b32.xlu0 %v594, 127
        %v655 = vpop.permute.xlu0 %654
        %656 = vrot.lane.b32.xlu0 %v595, 127
        %v657 = vpop.permute.xlu0 %656
        %658 = vrot.lane.b32.xlu0 %v596, 127
        %v659 = vpop.permute.xlu0 %658
        %660 = vrot.lane.b32.xlu0 %v597, 127
        %v661 = vpop.permute.xlu0 %660
        %vm662 = vcmask 1039360
        %v663 = vsel %vm662, %v599, %v601
        %v664 = vsel %vm662, %v603, %v605
        %v665 = vsel %vm662, %v607, %v609
        %v666 = vsel %vm662, %v611, %v613
        %v667 = vsel %vm662, %v615, %v617
        %v668 = vsel %vm662, %v619, %v621
        %v669 = vsel %vm662, %v623, %v625
        %v670 = vsel %vm662, %v627, %v629
        %v671 = vsel %vm662, %v631, %v633
        %v672 = vsel %vm662, %v635, %v637
        %v673 = vsel %vm662, %v639, %v641
        %v674 = vsel %vm662, %v643, %v645
        %v675 = vsel %vm662, %v647, %v649
        %v676 = vsel %vm662, %v651, %v653
        %v677 = vsel %vm662, %v655, %v657
        %v678 = vsel %vm662, %v659, %v661
        %711 = vmatprep.subr.bf16.mxu0 %v629
        %712 = vmatpush1.bf16.msra.mxu0 %v670
        %713 = vmatprep.subr.bf16.mxu0 %v625
        %714 = vmatpush1.bf16.msra.mxu0 %v669
        %715 = vmatprep.subr.bf16.mxu0 %v621
        %716 = vmatpush1.bf16.msra.mxu0 %v668
        %717 = vmatprep.subr.bf16.mxu0 %v617
        %718 = vmatpush1.bf16.msra.mxu0 %v667
        %719 = vmatprep.subr.bf16.mxu0 %v613
        %720 = vmatpush1.bf16.msra.mxu0 %v666
        %721 = vmatprep.subr.bf16.mxu0 %v609
        %722 = vmatpush1.bf16.msra.mxu0 %v665
        %723 = vmatprep.subr.bf16.mxu0 %v605
        %724 = vmatpush1.bf16.msra.mxu0 %v664
        %725 = vmatprep.subr.bf16.mxu0 %v601
        %726 = vmatpush1.bf16.msra.mxu0 %v663
        %727 = vmatprep.subr.bf16.mxu0 %v661
        %728 = vmatpush2.bf16.msra.mxu0 %v678
        %729 = vmatprep.subr.bf16.mxu0 %v657
        %730 = vmatpush2.bf16.msra.mxu0 %v677
        %731 = vmatprep.subr.bf16.mxu0 %v653
        %732 = vmatpush2.bf16.msra.mxu0 %v676
        %733 = vmatprep.subr.bf16.mxu0 %v649
        %734 = vmatpush2.bf16.msra.mxu0 %v675
        %735 = vmatprep.subr.bf16.mxu0 %v645
        %736 = vmatpush2.bf16.msra.mxu0 %v674
        %737 = vmatprep.subr.bf16.mxu0 %v641
        %738 = vmatpush2.bf16.msra.mxu0 %v673
        %739 = vmatprep.subr.bf16.mxu0 %v637
        %740 = vmatpush2.bf16.msra.mxu0 %v672
        %741 = vmatprep.subr.bf16.mxu0 %v633
        %742 = vmatpush2.bf16.msra.mxu0 %v671
        %743 = vmatprep.mubr.bf16.mxu0 %v455
        %744 = vmatmul.mubr.bf16.gmra.mxu0 %v454
        %v745 = vpop.f32.mrf.mxu0
        %v746 = vadd.f32 0.0, %v745
        %v747 = vpop.f32.mrf.mxu0
        %v748 = vadd.f32 0.0, %v747
        %v749 = vpop.f32.mrf.mxu0
        %v750 = vadd.f32 0.0, %v749
        %v751 = vpop.f32.mrf.mxu0
        %v752 = vadd.f32 0.0, %v751
        %753 = vmatprep.mubr.bf16.mxu0 %v457
        %754 = vmatmul.mubr.bf16.gmra.mxu0 %v456
        %v755 = vpop.f32.mrf.mxu0
        %v756 = vadd.f32 0.0, %v755
        %v757 = vpop.f32.mrf.mxu0
        %v758 = vadd.f32 0.0, %v757
        %v759 = vpop.f32.mrf.mxu0
        %v760 = vadd.f32 0.0, %v759
        %v761 = vpop.f32.mrf.mxu0
        %v762 = vadd.f32 0.0, %v761
        %763 = vmatprep.mubr.bf16.mxu0 %v459
        %764 = vmatmul.mubr.bf16.gmra.mxu0 %v458
        %v765 = vpop.f32.mrf.mxu0
        %v766 = vadd.f32 0.0, %v765
        %v767 = vpop.f32.mrf.mxu0
        %v768 = vadd.f32 0.0, %v767
        %v769 = vpop.f32.mrf.mxu0
        %v770 = vadd.f32 0.0, %v769
        %v771 = vpop.f32.mrf.mxu0
        %v772 = vadd.f32 0.0, %v771
        %773 = vmatprep.mubr.bf16.mxu0 %v461
        %774 = vmatmul.mubr.bf16.gmra.mxu0 %v460
        %v775 = vpop.f32.mrf.mxu0
        %v776 = vadd.f32 0.0, %v775
        %v777 = vpop.f32.mrf.mxu0
        %v778 = vadd.f32 0.0, %v777
        %v779 = vpop.f32.mrf.mxu0
        %v780 = vadd.f32 0.0, %v779
        %v781 = vpop.f32.mrf.mxu0
        %v782 = vadd.f32 0.0, %v781
        %783 = vdwg.mxu0
        %v792 = vunpack.c.l.b16 %v381
        %v793 = vunpack.c.h.b16 %v381
        %v794 = vunpack.c.l.b16 %v382
        %v795 = vunpack.c.h.b16 %v382
        %v796 = vunpack.c.l.b16 %v383
        %v797 = vunpack.c.h.b16 %v383
        %v798 = vunpack.c.l.b16 %v384
        %v799 = vunpack.c.h.b16 %v384
        %v800 = vunpack.c.l.b16 %v385
        %v801 = vunpack.c.h.b16 %v385
        %v802 = vunpack.c.l.b16 %v386
        %v803 = vunpack.c.h.b16 %v386
        %v804 = vunpack.c.l.b16 %v387
        %v805 = vunpack.c.h.b16 %v387
        %v806 = vunpack.c.l.b16 %v388
        %v807 = vunpack.c.h.b16 %v388
        %v808 = vpack.c.b16 %v794, %v792
        %v809 = vpack.c.b16 %v795, %v793
        %v810 = vpack.c.b16 %v798, %v796
        %v811 = vpack.c.b16 %v799, %v797
        %v812 = vpack.c.b16 %v802, %v800
        %v813 = vpack.c.b16 %v803, %v801
        %v814 = vpack.c.b16 %v806, %v804
        %v815 = vpack.c.b16 %v807, %v805
        %856 = vmatprep.subr.bf16.mxu0 %v581
        %857 = vmatpush1.bf16.msra.mxu0 %v580
        %858 = vmatprep.subr.bf16.mxu0 %v579
        %859 = vmatpush1.bf16.msra.mxu0 %v578
        %860 = vmatprep.subr.bf16.mxu0 %v577
        %861 = vmatpush1.bf16.msra.mxu0 %v576
        %862 = vmatprep.subr.bf16.mxu0 %v575
        %863 = vmatpush1.bf16.msra.mxu0 %v574
        %864 = vmatprep.subr.bf16.mxu0 %v573
        %865 = vmatpush1.bf16.msra.mxu0 %v572
        %866 = vmatprep.subr.bf16.mxu0 %v571
        %867 = vmatpush1.bf16.msra.mxu0 %v570
        %868 = vmatprep.subr.bf16.mxu0 %v569
        %869 = vmatpush1.bf16.msra.mxu0 %v568
        %870 = vmatprep.subr.bf16.mxu0 %v567
        %871 = vmatpush1.bf16.msra.mxu0 %v566
        %872 = vmatprep.subr.bf16.mxu0 %v597
        %873 = vmatpush2.bf16.msra.mxu0 %v596
        %874 = vmatprep.subr.bf16.mxu0 %v595
        %875 = vmatpush2.bf16.msra.mxu0 %v594
        %876 = vmatprep.subr.bf16.mxu0 %v593
        %877 = vmatpush2.bf16.msra.mxu0 %v592
        %878 = vmatprep.subr.bf16.mxu0 %v591
        %879 = vmatpush2.bf16.msra.mxu0 %v590
        %880 = vmatprep.subr.bf16.mxu0 %v589
        %881 = vmatpush2.bf16.msra.mxu0 %v588
        %882 = vmatprep.subr.bf16.mxu0 %v587
        %883 = vmatpush2.bf16.msra.mxu0 %v586
        %884 = vmatprep.subr.bf16.mxu0 %v585
        %885 = vmatpush2.bf16.msra.mxu0 %v584
        %886 = vmatprep.subr.bf16.mxu0 %v583
        %887 = vmatpush2.bf16.msra.mxu0 %v582
        %888 = vmatprep.mubr.bf16.mxu0 %v809
        %889 = vmatmul.mubr.bf16.gmra.mxu0 %v808
        %v890 = vpop.f32.mrf.mxu0
        %v891 = vadd.f32 %v746, %v890
        %v892 = vpop.f32.mrf.mxu0
        %v893 = vadd.f32 %v748, %v892
        %v894 = vpop.f32.mrf.mxu0
        %v895 = vadd.f32 %v750, %v894
        %v896 = vpop.f32.mrf.mxu0
        %v897 = vadd.f32 %v752, %v896
        %898 = vmatprep.mubr.bf16.mxu0 %v811
        %899 = vmatmul.mubr.bf16.gmra.mxu0 %v810
        %v900 = vpop.f32.mrf.mxu0
        %v901 = vadd.f32 %v756, %v900
        %v902 = vpop.f32.mrf.mxu0
        %v903 = vadd.f32 %v758, %v902
        %v904 = vpop.f32.mrf.mxu0
        %v905 = vadd.f32 %v760, %v904
        %v906 = vpop.f32.mrf.mxu0
        %v907 = vadd.f32 %v762, %v906
        %908 = vmatprep.mubr.bf16.mxu0 %v813
        %909 = vmatmul.mubr.bf16.gmra.mxu0 %v812
        %v910 = vpop.f32.mrf.mxu0
        %v911 = vadd.f32 %v766, %v910
        %v912 = vpop.f32.mrf.mxu0
        %v913 = vadd.f32 %v768, %v912
        %v914 = vpop.f32.mrf.mxu0
        %v915 = vadd.f32 %v770, %v914
        %v916 = vpop.f32.mrf.mxu0
        %v917 = vadd.f32 %v772, %v916
        %918 = vmatprep.mubr.bf16.mxu0 %v815
        %919 = vmatmul.mubr.bf16.gmra.mxu0 %v814
        %v920 = vpop.f32.mrf.mxu0
        %v921 = vadd.f32 %v776, %v920
        %v922 = vpop.f32.mrf.mxu0
        %v923 = vadd.f32 %v778, %v922
        %v924 = vpop.f32.mrf.mxu0
        %v925 = vadd.f32 %v780, %v924
        %v926 = vpop.f32.mrf.mxu0
        %v927 = vadd.f32 %v782, %v926
        %928 = vdwg.mxu0
        %s929 = scalar_lea.vmem %s1, 128
        %v930 = vld [vmem:[%s929] sm:$0xff]
        %v931 = vld [vmem:[%s929 + $0x8] sm:$0xff]
        %v932 = vld [vmem:[%s929 + $0x10] sm:$0xff]
        %v933 = vld [vmem:[%s929 + $0x18] sm:$0xff]
        %v934 = vld [vmem:[%s929 + $0x20] sm:$0xff]
        %v935 = vld [vmem:[%s929 + $0x28] sm:$0xff]
        %v936 = vld [vmem:[%s929 + $0x30] sm:$0xff]
        %v937 = vld [vmem:[%s929 + $0x38] sm:$0xff]
        %v946 = vunpack.c.l.b16 %v930
        %v947 = vunpack.c.h.b16 %v930
        %v948 = vunpack.c.l.b16 %v931
        %v949 = vunpack.c.h.b16 %v931
        %v950 = vunpack.c.l.b16 %v932
        %v951 = vunpack.c.h.b16 %v932
        %v952 = vunpack.c.l.b16 %v933
        %v953 = vunpack.c.h.b16 %v933
        %v954 = vunpack.c.l.b16 %v934
        %v955 = vunpack.c.h.b16 %v934
        %v956 = vunpack.c.l.b16 %v935
        %v957 = vunpack.c.h.b16 %v935
        %v958 = vunpack.c.l.b16 %v936
        %v959 = vunpack.c.h.b16 %v936
        %v960 = vunpack.c.l.b16 %v937
        %v961 = vunpack.c.h.b16 %v937
        %v962 = vpack.c.b16 %v948, %v946
        %v963 = vpack.c.b16 %v949, %v947
        %v964 = vpack.c.b16 %v952, %v950
        %v965 = vpack.c.b16 %v953, %v951
        %v966 = vpack.c.b16 %v956, %v954
        %v967 = vpack.c.b16 %v957, %v955
        %v968 = vpack.c.b16 %v960, %v958
        %v969 = vpack.c.b16 %v961, %v959
        %978 = vrot.lane.b32.xlu0 %v566, 117
        %v979 = vpop.permute.xlu0 %978
        %980 = vrot.lane.b32.xlu0 %v567, 117
        %v981 = vpop.permute.xlu0 %980
        %982 = vrot.lane.b32.xlu0 %v568, 117
        %v983 = vpop.permute.xlu0 %982
        %984 = vrot.lane.b32.xlu0 %v569, 117
        %v985 = vpop.permute.xlu0 %984
        %986 = vrot.lane.b32.xlu0 %v570, 117
        %v987 = vpop.permute.xlu0 %986
        %988 = vrot.lane.b32.xlu0 %v571, 117
        %v989 = vpop.permute.xlu0 %988
        %990 = vrot.lane.b32.xlu0 %v572, 117
        %v991 = vpop.permute.xlu0 %990
        %992 = vrot.lane.b32.xlu0 %v573, 117
        %v993 = vpop.permute.xlu0 %992
        %994 = vrot.lane.b32.xlu0 %v574, 117
        %v995 = vpop.permute.xlu0 %994
        %996 = vrot.lane.b32.xlu0 %v575, 117
        %v997 = vpop.permute.xlu0 %996
        %998 = vrot.lane.b32.xlu0 %v576, 117
        %v999 = vpop.permute.xlu0 %998
        %1000 = vrot.lane.b32.xlu0 %v577, 117
        %v1001 = vpop.permute.xlu0 %1000
        %1002 = vrot.lane.b32.xlu0 %v578, 117
        %v1003 = vpop.permute.xlu0 %1002
        %1004 = vrot.lane.b32.xlu0 %v579, 117
        %v1005 = vpop.permute.xlu0 %1004
        %1006 = vrot.lane.b32.xlu0 %v580, 117
        %v1007 = vpop.permute.xlu0 %1006
        %1008 = vrot.lane.b32.xlu0 %v581, 117
        %v1009 = vpop.permute.xlu0 %1008
        %1010 = vrot.lane.b32.xlu0 %v582, 117
        %v1011 = vpop.permute.xlu0 %1010
        %1012 = vrot.lane.b32.xlu0 %v583, 117
        %v1013 = vpop.permute.xlu0 %1012
        %1014 = vrot.lane.b32.xlu0 %v584, 117
        %v1015 = vpop.permute.xlu0 %1014
        %1016 = vrot.lane.b32.xlu0 %v585, 117
        %v1017 = vpop.permute.xlu0 %1016
        %1018 = vrot.lane.b32.xlu0 %v586, 117
        %v1019 = vpop.permute.xlu0 %1018
        %1020 = vrot.lane.b32.xlu0 %v587, 117
        %v1021 = vpop.permute.xlu0 %1020
        %1022 = vrot.lane.b32.xlu0 %v588, 117
        %v1023 = vpop.permute.xlu0 %1022
        %1024 = vrot.lane.b32.xlu0 %v589, 117
        %v1025 = vpop.permute.xlu0 %1024
        %1026 = vrot.lane.b32.xlu0 %v590, 117
        %v1027 = vpop.permute.xlu0 %1026
        %1028 = vrot.lane.b32.xlu0 %v591, 117
        %v1029 = vpop.permute.xlu0 %1028
        %1030 = vrot.lane.b32.xlu0 %v592, 117
        %v1031 = vpop.permute.xlu0 %1030
        %1032 = vrot.lane.b32.xlu0 %v593, 117
        %v1033 = vpop.permute.xlu0 %1032
        %1034 = vrot.lane.b32.xlu0 %v594, 117
        %v1035 = vpop.permute.xlu0 %1034
        %1036 = vrot.lane.b32.xlu0 %v595, 117
        %v1037 = vpop.permute.xlu0 %1036
        %1038 = vrot.lane.b32.xlu0 %v596, 117
        %v1039 = vpop.permute.xlu0 %1038
        %1040 = vrot.lane.b32.xlu0 %v597, 117
        %v1041 = vpop.permute.xlu0 %1040
        %vm1042 = vcmask 957440
        %v1043 = vsel %vm1042, %v979, %v981
        %v1044 = vsel %vm1042, %v983, %v985
        %v1045 = vsel %vm1042, %v987, %v989
        %v1046 = vsel %vm1042, %v991, %v993
        %v1047 = vsel %vm1042, %v995, %v997
        %v1048 = vsel %vm1042, %v999, %v1001
        %v1049 = vsel %vm1042, %v1003, %v1005
        %v1050 = vsel %vm1042, %v1007, %v1009
        %v1051 = vsel %vm1042, %v1011, %v1013
        %v1052 = vsel %vm1042, %v1015, %v1017
        %v1053 = vsel %vm1042, %v1019, %v1021
        %v1054 = vsel %vm1042, %v1023, %v1025
        %v1055 = vsel %vm1042, %v1027, %v1029
        %v1056 = vsel %vm1042, %v1031, %v1033
        %v1057 = vsel %vm1042, %v1035, %v1037
        %v1058 = vsel %vm1042, %v1039, %v1041
        %1091 = vmatprep.subr.bf16.mxu0 %v1009
        %1092 = vmatpush1.bf16.msra.mxu0 %v1050
        %1093 = vmatprep.subr.bf16.mxu0 %v1005
        %1094 = vmatpush1.bf16.msra.mxu0 %v1049
        %1095 = vmatprep.subr.bf16.mxu0 %v1001
        %1096 = vmatpush1.bf16.msra.mxu0 %v1048
        %1097 = vmatprep.subr.bf16.mxu0 %v997
        %1098 = vmatpush1.bf16.msra.mxu0 %v1047
        %1099 = vmatprep.subr.bf16.mxu0 %v993
        %1100 = vmatpush1.bf16.msra.mxu0 %v1046
        %1101 = vmatprep.subr.bf16.mxu0 %v989
        %1102 = vmatpush1.bf16.msra.mxu0 %v1045
        %1103 = vmatprep.subr.bf16.mxu0 %v985
        %1104 = vmatpush1.bf16.msra.mxu0 %v1044
        %1105 = vmatprep.subr.bf16.mxu0 %v981
        %1106 = vmatpush1.bf16.msra.mxu0 %v1043
        %1107 = vmatprep.subr.bf16.mxu0 %v1041
        %1108 = vmatpush2.bf16.msra.mxu0 %v1058
        %1109 = vmatprep.subr.bf16.mxu0 %v1037
        %1110 = vmatpush2.bf16.msra.mxu0 %v1057
        %1111 = vmatprep.subr.bf16.mxu0 %v1033
        %1112 = vmatpush2.bf16.msra.mxu0 %v1056
        %1113 = vmatprep.subr.bf16.mxu0 %v1029
        %1114 = vmatpush2.bf16.msra.mxu0 %v1055
        %1115 = vmatprep.subr.bf16.mxu0 %v1025
        %1116 = vmatpush2.bf16.msra.mxu0 %v1054
        %1117 = vmatprep.subr.bf16.mxu0 %v1021
        %1118 = vmatpush2.bf16.msra.mxu0 %v1053
        %1119 = vmatprep.subr.bf16.mxu0 %v1017
        %1120 = vmatpush2.bf16.msra.mxu0 %v1052
        %1121 = vmatprep.subr.bf16.mxu0 %v1013
        %1122 = vmatpush2.bf16.msra.mxu0 %v1051
        %1123 = vmatprep.mubr.bf16.mxu0 %v963
        %1124 = vmatmul.mubr.bf16.gmra.mxu0 %v962
        %v1125 = vpop.f32.mrf.mxu0
        %v1126 = vadd.f32 0.0, %v1125
        %v1127 = vpop.f32.mrf.mxu0
        %v1128 = vadd.f32 0.0, %v1127
        %v1129 = vpop.f32.mrf.mxu0
        %v1130 = vadd.f32 0.0, %v1129
        %v1131 = vpop.f32.mrf.mxu0
        %v1132 = vadd.f32 0.0, %v1131
        %1133 = vmatprep.mubr.bf16.mxu0 %v965
        %1134 = vmatmul.mubr.bf16.gmra.mxu0 %v964
        %v1135 = vpop.f32.mrf.mxu0
        %v1136 = vadd.f32 0.0, %v1135
        %v1137 = vpop.f32.mrf.mxu0
        %v1138 = vadd.f32 0.0, %v1137
        %v1139 = vpop.f32.mrf.mxu0
        %v1140 = vadd.f32 0.0, %v1139
        %v1141 = vpop.f32.mrf.mxu0
        %v1142 = vadd.f32 0.0, %v1141
        %1143 = vmatprep.mubr.bf16.mxu0 %v967
        %1144 = vmatmul.mubr.bf16.gmra.mxu0 %v966
        %v1145 = vpop.f32.mrf.mxu0
        %v1146 = vadd.f32 0.0, %v1145
        %v1147 = vpop.f32.mrf.mxu0
        %v1148 = vadd.f32 0.0, %v1147
        %v1149 = vpop.f32.mrf.mxu0
        %v1150 = vadd.f32 0.0, %v1149
        %v1151 = vpop.f32.mrf.mxu0
        %v1152 = vadd.f32 0.0, %v1151
        %1153 = vmatprep.mubr.bf16.mxu0 %v969
        %1154 = vmatmul.mubr.bf16.gmra.mxu0 %v968
        %v1155 = vpop.f32.mrf.mxu0
        %v1156 = vadd.f32 0.0, %v1155
        %v1157 = vpop.f32.mrf.mxu0
        %v1158 = vadd.f32 0.0, %v1157
        %v1159 = vpop.f32.mrf.mxu0
        %v1160 = vadd.f32 0.0, %v1159
        %v1161 = vpop.f32.mrf.mxu0
        %v1162 = vadd.f32 0.0, %v1161
        %1163 = vdwg.mxu0
        %v1164 = vadd.f32 %v891, %v1126
        %v1165 = vadd.f32 %v893, %v1128
        %v1166 = vadd.f32 %v895, %v1130
        %v1167 = vadd.f32 %v897, %v1132
        %v1168 = vadd.f32 %v901, %v1136
        %v1169 = vadd.f32 %v903, %v1138
        %v1170 = vadd.f32 %v905, %v1140
        %v1171 = vadd.f32 %v907, %v1142
        %v1172 = vadd.f32 %v911, %v1146
        %v1173 = vadd.f32 %v913, %v1148
        %v1174 = vadd.f32 %v915, %v1150
        %v1175 = vadd.f32 %v917, %v1152
        %v1176 = vadd.f32 %v921, %v1156
        %v1177 = vadd.f32 %v923, %v1158
        %v1178 = vadd.f32 %v925, %v1160
        %v1179 = vadd.f32 %v927, %v1162
        %s1180 = scalar_lea.vmem %s1, 192
        %v1181 = vld [vmem:[%s1180] sm:$0xff]
        %v1182 = vld [vmem:[%s1180 + $0x8] sm:$0xff]
        %v1183 = vld [vmem:[%s1180 + $0x10] sm:$0xff]
        %v1184 = vld [vmem:[%s1180 + $0x18] sm:$0xff]
        %v1185 = vld [vmem:[%s1180 + $0x20] sm:$0xff]
        %v1186 = vld [vmem:[%s1180 + $0x28] sm:$0xff]
        %v1187 = vld [vmem:[%s1180 + $0x30] sm:$0xff]
        %v1188 = vld [vmem:[%s1180 + $0x38] sm:$0xff]
        %v1197 = vunpack.c.l.b16 %v1181
        %v1198 = vunpack.c.h.b16 %v1181
        %v1199 = vunpack.c.l.b16 %v1182
        %v1200 = vunpack.c.h.b16 %v1182
        %v1201 = vunpack.c.l.b16 %v1183
        %v1202 = vunpack.c.h.b16 %v1183
        %v1203 = vunpack.c.l.b16 %v1184
        %v1204 = vunpack.c.h.b16 %v1184
        %v1205 = vunpack.c.l.b16 %v1185
        %v1206 = vunpack.c.h.b16 %v1185
        %v1207 = vunpack.c.l.b16 %v1186
        %v1208 = vunpack.c.h.b16 %v1186
        %v1209 = vunpack.c.l.b16 %v1187
        %v1210 = vunpack.c.h.b16 %v1187
        %v1211 = vunpack.c.l.b16 %v1188
        %v1212 = vunpack.c.h.b16 %v1188
        %v1213 = vpack.c.b16 %v1199, %v1197
        %v1214 = vpack.c.b16 %v1200, %v1198
        %v1215 = vpack.c.b16 %v1203, %v1201
        %v1216 = vpack.c.b16 %v1204, %v1202
        %v1217 = vpack.c.b16 %v1207, %v1205
        %v1218 = vpack.c.b16 %v1208, %v1206
        %v1219 = vpack.c.b16 %v1211, %v1209
        %v1220 = vpack.c.b16 %v1212, %v1210
        %1229 = vrot.lane.b32.xlu0 %v566, 116
        %v1230 = vpop.permute.xlu0 %1229
        %1231 = vrot.lane.b32.xlu0 %v567, 116
        %v1232 = vpop.permute.xlu0 %1231
        %1233 = vrot.lane.b32.xlu0 %v568, 116
        %v1234 = vpop.permute.xlu0 %1233
        %1235 = vrot.lane.b32.xlu0 %v569, 116
        %v1236 = vpop.permute.xlu0 %1235
        %1237 = vrot.lane.b32.xlu0 %v570, 116
        %v1238 = vpop.permute.xlu0 %1237
        %1239 = vrot.lane.b32.xlu0 %v571, 116
        %v1240 = vpop.permute.xlu0 %1239
        %1241 = vrot.lane.b32.xlu0 %v572, 116
        %v1242 = vpop.permute.xlu0 %1241
        %1243 = vrot.lane.b32.xlu0 %v573, 116
        %v1244 = vpop.permute.xlu0 %1243
        %1245 = vrot.lane.b32.xlu0 %v574, 116
        %v1246 = vpop.permute.xlu0 %1245
        %1247 = vrot.lane.b32.xlu0 %v575, 116
        %v1248 = vpop.permute.xlu0 %1247
        %1249 = vrot.lane.b32.xlu0 %v576, 116
        %v1250 = vpop.permute.xlu0 %1249
        %1251 = vrot.lane.b32.xlu0 %v577, 116
        %v1252 = vpop.permute.xlu0 %1251
        %1253 = vrot.lane.b32.xlu0 %v578, 116
        %v1254 = vpop.permute.xlu0 %1253
        %1255 = vrot.lane.b32.xlu0 %v579, 116
        %v1256 = vpop.permute.xlu0 %1255
        %1257 = vrot.lane.b32.xlu0 %v580, 116
        %v1258 = vpop.permute.xlu0 %1257
        %1259 = vrot.lane.b32.xlu0 %v581, 116
        %v1260 = vpop.permute.xlu0 %1259
        %1261 = vrot.lane.b32.xlu0 %v582, 116
        %v1262 = vpop.permute.xlu0 %1261
        %1263 = vrot.lane.b32.xlu0 %v583, 116
        %v1264 = vpop.permute.xlu0 %1263
        %1265 = vrot.lane.b32.xlu0 %v584, 116
        %v1266 = vpop.permute.xlu0 %1265
        %1267 = vrot.lane.b32.xlu0 %v585, 116
        %v1268 = vpop.permute.xlu0 %1267
        %1269 = vrot.lane.b32.xlu0 %v586, 116
        %v1270 = vpop.permute.xlu0 %1269
        %1271 = vrot.lane.b32.xlu0 %v587, 116
        %v1272 = vpop.permute.xlu0 %1271
        %1273 = vrot.lane.b32.xlu0 %v588, 116
        %v1274 = vpop.permute.xlu0 %1273
        %1275 = vrot.lane.b32.xlu0 %v589, 116
        %v1276 = vpop.permute.xlu0 %1275
        %1277 = vrot.lane.b32.xlu0 %v590, 116
        %v1278 = vpop.permute.xlu0 %1277
        %1279 = vrot.lane.b32.xlu0 %v591, 116
        %v1280 = vpop.permute.xlu0 %1279
        %1281 = vrot.lane.b32.xlu0 %v592, 116
        %v1282 = vpop.permute.xlu0 %1281
        %1283 = vrot.lane.b32.xlu0 %v593, 116
        %v1284 = vpop.permute.xlu0 %1283
        %1285 = vrot.lane.b32.xlu0 %v594, 116
        %v1286 = vpop.permute.xlu0 %1285
        %1287 = vrot.lane.b32.xlu0 %v595, 116
        %v1288 = vpop.permute.xlu0 %1287
        %1289 = vrot.lane.b32.xlu0 %v596, 116
        %v1290 = vpop.permute.xlu0 %1289
        %1291 = vrot.lane.b32.xlu0 %v597, 116
        %v1292 = vpop.permute.xlu0 %1291
        %vm1293 = vcmask 949248
        %v1294 = vsel %vm1293, %v1230, %v1232
        %v1295 = vsel %vm1293, %v1234, %v1236
        %v1296 = vsel %vm1293, %v1238, %v1240
        %v1297 = vsel %vm1293, %v1242, %v1244
        %v1298 = vsel %vm1293, %v1246, %v1248
        %v1299 = vsel %vm1293, %v1250, %v1252
        %v1300 = vsel %vm1293, %v1254, %v1256
        %v1301 = vsel %vm1293, %v1258, %v1260
        %v1302 = vsel %vm1293, %v1262, %v1264
        %v1303 = vsel %vm1293, %v1266, %v1268
        %v1304 = vsel %vm1293, %v1270, %v1272
        %v1305 = vsel %vm1293, %v1274, %v1276
        %v1306 = vsel %vm1293, %v1278, %v1280
        %v1307 = vsel %vm1293, %v1282, %v1284
        %v1308 = vsel %vm1293, %v1286, %v1288
        %v1309 = vsel %vm1293, %v1290, %v1292
        %1342 = vmatprep.subr.bf16.mxu0 %v1260
        %1343 = vmatpush1.bf16.msra.mxu0 %v1301
        %1344 = vmatprep.subr.bf16.mxu0 %v1256
        %1345 = vmatpush1.bf16.msra.mxu0 %v1300
        %1346 = vmatprep.subr.bf16.mxu0 %v1252
        %1347 = vmatpush1.bf16.msra.mxu0 %v1299
        %1348 = vmatprep.subr.bf16.mxu0 %v1248
        %1349 = vmatpush1.bf16.msra.mxu0 %v1298
        %1350 = vmatprep.subr.bf16.mxu0 %v1244
        %1351 = vmatpush1.bf16.msra.mxu0 %v1297
        %1352 = vmatprep.subr.bf16.mxu0 %v1240
        %1353 = vmatpush1.bf16.msra.mxu0 %v1296
        %1354 = vmatprep.subr.bf16.mxu0 %v1236
        %1355 = vmatpush1.bf16.msra.mxu0 %v1295
        %1356 = vmatprep.subr.bf16.mxu0 %v1232
        %1357 = vmatpush1.bf16.msra.mxu0 %v1294
        %1358 = vmatprep.subr.bf16.mxu0 %v1292
        %1359 = vmatpush2.bf16.msra.mxu0 %v1309
        %1360 = vmatprep.subr.bf16.mxu0 %v1288
        %1361 = vmatpush2.bf16.msra.mxu0 %v1308
        %1362 = vmatprep.subr.bf16.mxu0 %v1284
        %1363 = vmatpush2.bf16.msra.mxu0 %v1307
        %1364 = vmatprep.subr.bf16.mxu0 %v1280
        %1365 = vmatpush2.bf16.msra.mxu0 %v1306
        %1366 = vmatprep.subr.bf16.mxu0 %v1276
        %1367 = vmatpush2.bf16.msra.mxu0 %v1305
        %1368 = vmatprep.subr.bf16.mxu0 %v1272
        %1369 = vmatpush2.bf16.msra.mxu0 %v1304
        %1370 = vmatprep.subr.bf16.mxu0 %v1268
        %1371 = vmatpush2.bf16.msra.mxu0 %v1303
        %1372 = vmatprep.subr.bf16.mxu0 %v1264
        %1373 = vmatpush2.bf16.msra.mxu0 %v1302
        %1374 = vmatprep.mubr.bf16.mxu0 %v1214
        %1375 = vmatmul.mubr.bf16.gmra.mxu0 %v1213
        %v1376 = vpop.f32.mrf.mxu0
        %v1377 = vadd.f32 0.0, %v1376
        %v1378 = vpop.f32.mrf.mxu0
        %v1379 = vadd.f32 0.0, %v1378
        %v1380 = vpop.f32.mrf.mxu0
        %v1381 = vadd.f32 0.0, %v1380
        %v1382 = vpop.f32.mrf.mxu0
        %v1383 = vadd.f32 0.0, %v1382
        %1384 = vmatprep.mubr.bf16.mxu0 %v1216
        %1385 = vmatmul.mubr.bf16.gmra.mxu0 %v1215
        %v1386 = vpop.f32.mrf.mxu0
        %v1387 = vadd.f32 0.0, %v1386
        %v1388 = vpop.f32.mrf.mxu0
        %v1389 = vadd.f32 0.0, %v1388
        %v1390 = vpop.f32.mrf.mxu0
        %v1391 = vadd.f32 0.0, %v1390
        %v1392 = vpop.f32.mrf.mxu0
        %v1393 = vadd.f32 0.0, %v1392
        %1394 = vmatprep.mubr.bf16.mxu0 %v1218
        %1395 = vmatmul.mubr.bf16.gmra.mxu0 %v1217
        %v1396 = vpop.f32.mrf.mxu0
        %v1397 = vadd.f32 0.0, %v1396
        %v1398 = vpop.f32.mrf.mxu0
        %v1399 = vadd.f32 0.0, %v1398
        %v1400 = vpop.f32.mrf.mxu0
        %v1401 = vadd.f32 0.0, %v1400
        %v1402 = vpop.f32.mrf.mxu0
        %v1403 = vadd.f32 0.0, %v1402
        %1404 = vmatprep.mubr.bf16.mxu0 %v1220
        %1405 = vmatmul.mubr.bf16.gmra.mxu0 %v1219
        %v1406 = vpop.f32.mrf.mxu0
        %v1407 = vadd.f32 0.0, %v1406
        %v1408 = vpop.f32.mrf.mxu0
        %v1409 = vadd.f32 0.0, %v1408
        %v1410 = vpop.f32.mrf.mxu0
        %v1411 = vadd.f32 0.0, %v1410
        %v1412 = vpop.f32.mrf.mxu0
        %v1413 = vadd.f32 0.0, %v1412
        %1414 = vdwg.mxu0
        %v1415 = vadd.f32 %v1164, %v1377
        %v1416 = vadd.f32 %v1165, %v1379
        %v1417 = vadd.f32 %v1166, %v1381
        %v1418 = vadd.f32 %v1167, %v1383
        %v1419 = vadd.f32 %v1168, %v1387
        %v1420 = vadd.f32 %v1169, %v1389
        %v1421 = vadd.f32 %v1170, %v1391
        %v1422 = vadd.f32 %v1171, %v1393
        %v1423 = vadd.f32 %v1172, %v1397
        %v1424 = vadd.f32 %v1173, %v1399
        %v1425 = vadd.f32 %v1174, %v1401
        %v1426 = vadd.f32 %v1175, %v1403
        %v1427 = vadd.f32 %v1176, %v1407
        %v1428 = vadd.f32 %v1177, %v1409
        %v1429 = vadd.f32 %v1178, %v1411
        %v1430 = vadd.f32 %v1179, %v1413
        %v1431 = vld [vmem:[%s2] sm:$0xff]
        %v1432 = vld [vmem:[%s2 + $0x8] sm:$0xff]
        %v1433 = vld [vmem:[%s2 + $0x10] sm:$0xff]
        %v1434 = vld [vmem:[%s2 + $0x18] sm:$0xff]
        %v1435 = vld [vmem:[%s2 + $0x20] sm:$0xff]
        %v1436 = vld [vmem:[%s2 + $0x28] sm:$0xff]
        %v1437 = vld [vmem:[%s2 + $0x30] sm:$0xff]
        %v1438 = vld [vmem:[%s2 + $0x38] sm:$0xff]
        %1440 = vset.pattern.permute.xlu0 0
        %1441 = vperm.xlu0 %1440, %v1431
        %v1442 = vpop.permute.xlu0 %1441
        %1445 = vset.pattern.permute.xlu0 0
        %1446 = vperm.xlu0 %1445, %v1432
        %v1447 = vpop.permute.xlu0 %1446
        %1450 = vset.pattern.permute.xlu0 0
        %1451 = vperm.xlu0 %1450, %v1433
        %v1452 = vpop.permute.xlu0 %1451
        %1455 = vset.pattern.permute.xlu0 0
        %1456 = vperm.xlu0 %1455, %v1434
        %v1457 = vpop.permute.xlu0 %1456
        %1460 = vset.pattern.permute.xlu0 0
        %1461 = vperm.xlu0 %1460, %v1435
        %v1462 = vpop.permute.xlu0 %1461
        %1465 = vset.pattern.permute.xlu0 0
        %1466 = vperm.xlu0 %1465, %v1436
        %v1467 = vpop.permute.xlu0 %1466
        %1470 = vset.pattern.permute.xlu0 0
        %1471 = vperm.xlu0 %1470, %v1437
        %v1472 = vpop.permute.xlu0 %1471
        %1475 = vset.pattern.permute.xlu0 0
        %1476 = vperm.xlu0 %1475, %v1438
        %v1477 = vpop.permute.xlu0 %1476
        %v1479 = vadd.f32 %v1415, %v1442
        %v1480 = vadd.f32 %v1416, %v1442
        %v1481 = vadd.f32 %v1417, %v1447
        %v1482 = vadd.f32 %v1418, %v1447
        %v1483 = vadd.f32 %v1419, %v1452
        %v1484 = vadd.f32 %v1420, %v1452
        %v1485 = vadd.f32 %v1421, %v1457
        %v1486 = vadd.f32 %v1422, %v1457
        %v1487 = vadd.f32 %v1423, %v1462
        %v1488 = vadd.f32 %v1424, %v1462
        %v1489 = vadd.f32 %v1425, %v1467
        %v1490 = vadd.f32 %v1426, %v1467
        %v1491 = vadd.f32 %v1427, %v1472
        %v1492 = vadd.f32 %v1428, %v1472
        %v1493 = vadd.f32 %v1429, %v1477
        %v1494 = vadd.f32 %v1430, %v1477
        %v1495 = vmax.f32 %v1479, 0.0
        %v1496 = vmax.f32 %v1480, 0.0
        %v1497 = vmax.f32 %v1481, 0.0
        %v1498 = vmax.f32 %v1482, 0.0
        %v1499 = vmax.f32 %v1483, 0.0
        %v1500 = vmax.f32 %v1484, 0.0
        %v1501 = vmax.f32 %v1485, 0.0
        %v1502 = vmax.f32 %v1486, 0.0
        %v1503 = vmax.f32 %v1487, 0.0
        %v1504 = vmax.f32 %v1488, 0.0
        %v1505 = vmax.f32 %v1489, 0.0
        %v1506 = vmax.f32 %v1490, 0.0
        %v1507 = vmax.f32 %v1491, 0.0
        %v1508 = vmax.f32 %v1492, 0.0
        %v1509 = vmax.f32 %v1493, 0.0
        %v1510 = vmax.f32 %v1494, 0.0
        %v1511 = vpack.c.bf16 %v1497, %v1495
        %v1512 = vpack.c.bf16 %v1498, %v1496
        %v1513 = vpack.c.bf16 %v1501, %v1499
        %v1514 = vpack.c.bf16 %v1502, %v1500
        %v1515 = vpack.c.bf16 %v1505, %v1503
        %v1516 = vpack.c.bf16 %v1506, %v1504
        %v1517 = vpack.c.bf16 %v1509, %v1507
        %v1518 = vpack.c.bf16 %v1510, %v1508
        %v1519 = vld [vmem:[%s3] sm:$0xf]
        %v1520 = vld [vmem:[%s3 + $0x4] sm:$0xf]
        %v1521 = vld [vmem:[%s3 + $0x8] sm:$0xf]
        %v1522 = vld [vmem:[%s3 + $0xc] sm:$0xf]
        %s1523 = scalar_lea.vmem %s3, 16
        %v1524 = vld [vmem:[%s1523] sm:$0xf]
        %v1525 = vld [vmem:[%s1523 + $0x4] sm:$0xf]
        %v1526 = vld [vmem:[%s1523 + $0x8] sm:$0xf]
        %v1527 = vld [vmem:[%s1523 + $0xc] sm:$0xf]
        %v1532 = vunpack.c.l.b16 %v1524
        %v1533 = vunpack.c.l.b16 %v1525
        %v1534 = vunpack.c.l.b16 %v1526
        %v1535 = vunpack.c.l.b16 %v1527
        %v1536 = vpack.c.b16 %v1533, %v1532
        %v1537 = vpack.c.b16 %v1535, %v1534
        %1546 = vrot.lane.b32.xlu0 %v1511, 127
        %v1547 = vpop.permute.xlu0 %1546
        %1548 = vrot.lane.b32.xlu0 %v1512, 127
        %v1549 = vpop.permute.xlu0 %1548
        %1550 = vrot.lane.b32.xlu0 %v1513, 127
        %v1551 = vpop.permute.xlu0 %1550
        %1552 = vrot.lane.b32.xlu0 %v1514, 127
        %v1553 = vpop.permute.xlu0 %1552
        %1554 = vrot.lane.b32.xlu0 %v1515, 127
        %v1555 = vpop.permute.xlu0 %1554
        %1556 = vrot.lane.b32.xlu0 %v1516, 127
        %v1557 = vpop.permute.xlu0 %1556
        %1558 = vrot.lane.b32.xlu0 %v1517, 127
        %v1559 = vpop.permute.xlu0 %1558
        %1560 = vrot.lane.b32.xlu0 %v1518, 127
        %v1561 = vpop.permute.xlu0 %1560
        %v1562 = vsel %vm662, %v1547, %v1549
        %v1563 = vsel %vm662, %v1551, %v1553
        %v1564 = vsel %vm662, %v1555, %v1557
        %v1565 = vsel %vm662, %v1559, %v1561
        %vm1570 = vcmask 523264
        %v1572 = vsel %vm1570, %v1536, 0
        %v1575 = vsel %vm1570, %v1537, 0
        %1577 = vmatprep.subr.bf16.mxu0 0
        %1578 = vmatpush1.bf16.msra.mxu0 0
        %1579 = vmatprep.subr.bf16.mxu0 0
        %1580 = vmatpush1.bf16.msra.mxu0 0
        %1581 = vmatprep.subr.bf16.mxu0 0
        %1582 = vmatpush1.bf16.msra.mxu0 0
        %1583 = vmatprep.subr.bf16.mxu0 0
        %1584 = vmatpush1.bf16.msra.mxu0 0
        %1585 = vmatprep.subr.bf16.mxu0 0
        %1586 = vmatpush1.bf16.msra.mxu0 %v1565
        %1587 = vmatprep.subr.bf16.mxu0 0
        %1588 = vmatpush1.bf16.msra.mxu0 %v1564
        %1589 = vmatprep.subr.bf16.mxu0 0
        %1590 = vmatpush1.bf16.msra.mxu0 %v1563
        %1591 = vmatprep.subr.bf16.mxu0 0
        %1592 = vmatpush1.bf16.msra.mxu0 %v1562
        %1593 = vmatprep.subr.bf16.mxu0 0
        %1594 = vmatpush2.bf16.msra.mxu0 0
        %1595 = vmatprep.subr.bf16.mxu0 0
        %1596 = vmatpush2.bf16.msra.mxu0 0
        %1597 = vmatprep.subr.bf16.mxu0 0
        %1598 = vmatpush2.bf16.msra.mxu0 0
        %1599 = vmatprep.subr.bf16.mxu0 0
        %1600 = vmatpush2.bf16.msra.mxu0 0
        %1601 = vmatprep.subr.bf16.mxu0 0
        %1602 = vmatpush2.bf16.msra.mxu0 0
        %1603 = vmatprep.subr.bf16.mxu0 0
        %1604 = vmatpush2.bf16.msra.mxu0 0
        %1605 = vmatprep.subr.bf16.mxu0 0
        %1606 = vmatpush2.bf16.msra.mxu0 0
        %1607 = vmatprep.subr.bf16.mxu0 0
        %1608 = vmatpush2.bf16.msra.mxu0 0
        %1609 = vmatprep.mubr.bf16.mxu0 0
        %1610 = vmatmul.mubr.bf16.gmra.mxu0 %v1572
        %v1611 = vpop.f32.mrf.mxu0
        %v1612 = vadd.f32 0.0, %v1611
        %v1613 = vpop.f32.mrf.mxu0
        %v1614 = vpop.f32.mrf.mxu0
        %v1615 = vadd.f32 0.0, %v1614
        %v1616 = vpop.f32.mrf.mxu0
        %1617 = vmatprep.mubr.bf16.mxu0 0
        %1618 = vmatmul.mubr.bf16.gmra.mxu0 %v1575
        %v1619 = vpop.f32.mrf.mxu0
        %v1620 = vadd.f32 0.0, %v1619
        %v1621 = vpop.f32.mrf.mxu0
        %v1622 = vpop.f32.mrf.mxu0
        %v1623 = vadd.f32 0.0, %v1622
        %v1624 = vpop.f32.mrf.mxu0
        %1625 = vdwg.mxu0
        %v1630 = vunpack.c.l.b16 %v1519
        %v1631 = vunpack.c.l.b16 %v1520
        %v1632 = vunpack.c.l.b16 %v1521
        %v1633 = vunpack.c.l.b16 %v1522
        %v1634 = vpack.c.b16 %v1631, %v1630
        %v1635 = vpack.c.b16 %v1633, %v1632
        %v1637 = vsel %vm1570, %v1634, 0
        %v1640 = vsel %vm1570, %v1635, 0
        %1642 = vmatprep.subr.bf16.mxu0 0
        %1643 = vmatpush1.bf16.msra.mxu0 0
        %1644 = vmatprep.subr.bf16.mxu0 0
        %1645 = vmatpush1.bf16.msra.mxu0 0
        %1646 = vmatprep.subr.bf16.mxu0 0
        %1647 = vmatpush1.bf16.msra.mxu0 0
        %1648 = vmatprep.subr.bf16.mxu0 0
        %1649 = vmatpush1.bf16.msra.mxu0 0
        %1650 = vmatprep.subr.bf16.mxu0 0
        %1651 = vmatpush1.bf16.msra.mxu0 %v1517
        %1652 = vmatprep.subr.bf16.mxu0 0
        %1653 = vmatpush1.bf16.msra.mxu0 %v1515
        %1654 = vmatprep.subr.bf16.mxu0 0
        %1655 = vmatpush1.bf16.msra.mxu0 %v1513
        %1656 = vmatprep.subr.bf16.mxu0 0
        %1657 = vmatpush1.bf16.msra.mxu0 %v1511
        %1658 = vmatprep.subr.bf16.mxu0 0
        %1659 = vmatpush2.bf16.msra.mxu0 0
        %1660 = vmatprep.subr.bf16.mxu0 0
        %1661 = vmatpush2.bf16.msra.mxu0 0
        %1662 = vmatprep.subr.bf16.mxu0 0
        %1663 = vmatpush2.bf16.msra.mxu0 0
        %1664 = vmatprep.subr.bf16.mxu0 0
        %1665 = vmatpush2.bf16.msra.mxu0 0
        %1666 = vmatprep.subr.bf16.mxu0 0
        %1667 = vmatpush2.bf16.msra.mxu0 0
        %1668 = vmatprep.subr.bf16.mxu0 0
        %1669 = vmatpush2.bf16.msra.mxu0 0
        %1670 = vmatprep.subr.bf16.mxu0 0
        %1671 = vmatpush2.bf16.msra.mxu0 0
        %1672 = vmatprep.subr.bf16.mxu0 0
        %1673 = vmatpush2.bf16.msra.mxu0 0
        %1674 = vmatprep.mubr.bf16.mxu0 0
        %1675 = vmatmul.mubr.bf16.gmra.mxu0 %v1637
        %v1676 = vpop.f32.mrf.mxu0
        %v1677 = vadd.f32 %v1612, %v1676
        %v1678 = vpop.f32.mrf.mxu0
        %v1679 = vpop.f32.mrf.mxu0
        %v1680 = vadd.f32 %v1615, %v1679
        %v1681 = vpop.f32.mrf.mxu0
        %1682 = vmatprep.mubr.bf16.mxu0 0
        %1683 = vmatmul.mubr.bf16.gmra.mxu0 %v1640
        %v1684 = vpop.f32.mrf.mxu0
        %v1685 = vadd.f32 %v1620, %v1684
        %v1686 = vpop.f32.mrf.mxu0
        %v1687 = vpop.f32.mrf.mxu0
        %v1688 = vadd.f32 %v1623, %v1687
        %v1689 = vpop.f32.mrf.mxu0
        %1690 = vdwg.mxu0
        %s1691 = scalar_lea.vmem %s3, 32
        %v1692 = vld [vmem:[%s1691] sm:$0xf]
        %v1693 = vld [vmem:[%s1691 + $0x4] sm:$0xf]
        %v1694 = vld [vmem:[%s1691 + $0x8] sm:$0xf]
        %v1695 = vld [vmem:[%s1691 + $0xc] sm:$0xf]
        %v1700 = vunpack.c.l.b16 %v1692
        %v1701 = vunpack.c.l.b16 %v1693
        %v1702 = vunpack.c.l.b16 %v1694
        %v1703 = vunpack.c.l.b16 %v1695
        %v1704 = vpack.c.b16 %v1701, %v1700
        %v1705 = vpack.c.b16 %v1703, %v1702
        %1706 = vrot.lane.b32.xlu0 %v1511, 117
        %v1707 = vpop.permute.xlu0 %1706
        %1708 = vrot.lane.b32.xlu0 %v1512, 117
        %v1709 = vpop.permute.xlu0 %1708
        %1710 = vrot.lane.b32.xlu0 %v1513, 117
        %v1711 = vpop.permute.xlu0 %1710
        %1712 = vrot.lane.b32.xlu0 %v1514, 117
        %v1713 = vpop.permute.xlu0 %1712
        %1714 = vrot.lane.b32.xlu0 %v1515, 117
        %v1715 = vpop.permute.xlu0 %1714
        %1716 = vrot.lane.b32.xlu0 %v1516, 117
        %v1717 = vpop.permute.xlu0 %1716
        %1718 = vrot.lane.b32.xlu0 %v1517, 117
        %v1719 = vpop.permute.xlu0 %1718
        %1720 = vrot.lane.b32.xlu0 %v1518, 117
        %v1721 = vpop.permute.xlu0 %1720
        %v1722 = vsel %vm1042, %v1707, %v1709
        %v1723 = vsel %vm1042, %v1711, %v1713
        %v1724 = vsel %vm1042, %v1715, %v1717
        %v1725 = vsel %vm1042, %v1719, %v1721
        %v1731 = vsel %vm1570, %v1704, 0
        %v1734 = vsel %vm1570, %v1705, 0
        %1736 = vmatprep.subr.bf16.mxu0 0
        %1737 = vmatpush1.bf16.msra.mxu0 0
        %1738 = vmatprep.subr.bf16.mxu0 0
        %1739 = vmatpush1.bf16.msra.mxu0 0
        %1740 = vmatprep.subr.bf16.mxu0 0
        %1741 = vmatpush1.bf16.msra.mxu0 0
        %1742 = vmatprep.subr.bf16.mxu0 0
        %1743 = vmatpush1.bf16.msra.mxu0 0
        %1744 = vmatprep.subr.bf16.mxu0 0
        %1745 = vmatpush1.bf16.msra.mxu0 %v1725
        %1746 = vmatprep.subr.bf16.mxu0 0
        %1747 = vmatpush1.bf16.msra.mxu0 %v1724
        %1748 = vmatprep.subr.bf16.mxu0 0
        %1749 = vmatpush1.bf16.msra.mxu0 %v1723
        %1750 = vmatprep.subr.bf16.mxu0 0
        %1751 = vmatpush1.bf16.msra.mxu0 %v1722
        %1752 = vmatprep.subr.bf16.mxu0 0
        %1753 = vmatpush2.bf16.msra.mxu0 0
        %1754 = vmatprep.subr.bf16.mxu0 0
        %1755 = vmatpush2.bf16.msra.mxu0 0
        %1756 = vmatprep.subr.bf16.mxu0 0
        %1757 = vmatpush2.bf16.msra.mxu0 0
        %1758 = vmatprep.subr.bf16.mxu0 0
        %1759 = vmatpush2.bf16.msra.mxu0 0
        %1760 = vmatprep.subr.bf16.mxu0 0
        %1761 = vmatpush2.bf16.msra.mxu0 0
        %1762 = vmatprep.subr.bf16.mxu0 0
        %1763 = vmatpush2.bf16.msra.mxu0 0
        %1764 = vmatprep.subr.bf16.mxu0 0
        %1765 = vmatpush2.bf16.msra.mxu0 0
        %1766 = vmatprep.subr.bf16.mxu0 0
        %1767 = vmatpush2.bf16.msra.mxu0 0
        %1768 = vmatprep.mubr.bf16.mxu0 0
        %1769 = vmatmul.mubr.bf16.gmra.mxu0 %v1731
        %v1770 = vpop.f32.mrf.mxu0
        %v1771 = vadd.f32 0.0, %v1770
        %v1772 = vpop.f32.mrf.mxu0
        %v1773 = vpop.f32.mrf.mxu0
        %v1774 = vadd.f32 0.0, %v1773
        %v1775 = vpop.f32.mrf.mxu0
        %1776 = vmatprep.mubr.bf16.mxu0 0
        %1777 = vmatmul.mubr.bf16.gmra.mxu0 %v1734
        %v1778 = vpop.f32.mrf.mxu0
        %v1779 = vadd.f32 0.0, %v1778
        %v1780 = vpop.f32.mrf.mxu0
        %v1781 = vpop.f32.mrf.mxu0
        %v1782 = vadd.f32 0.0, %v1781
        %v1783 = vpop.f32.mrf.mxu0
        %1784 = vdwg.mxu0
        %v1785 = vadd.f32 %v1677, %v1771
        %v1786 = vadd.f32 %v1680, %v1774
        %v1787 = vadd.f32 %v1685, %v1779
        %v1788 = vadd.f32 %v1688, %v1782
        %s1789 = scalar_lea.vmem %s3, 48
        %v1790 = vld [vmem:[%s1789] sm:$0xf]
        %v1791 = vld [vmem:[%s1789 + $0x4] sm:$0xf]
        %v1792 = vld [vmem:[%s1789 + $0x8] sm:$0xf]
        %v1793 = vld [vmem:[%s1789 + $0xc] sm:$0xf]
        %v1798 = vunpack.c.l.b16 %v1790
        %v1799 = vunpack.c.l.b16 %v1791
        %v1800 = vunpack.c.l.b16 %v1792
        %v1801 = vunpack.c.l.b16 %v1793
        %v1802 = vpack.c.b16 %v1799, %v1798
        %v1803 = vpack.c.b16 %v1801, %v1800
        %1804 = vrot.lane.b32.xlu0 %v1511, 116
        %v1805 = vpop.permute.xlu0 %1804
        %1806 = vrot.lane.b32.xlu0 %v1512, 116
        %v1807 = vpop.permute.xlu0 %1806
        %1808 = vrot.lane.b32.xlu0 %v1513, 116
        %v1809 = vpop.permute.xlu0 %1808
        %1810 = vrot.lane.b32.xlu0 %v1514, 116
        %v1811 = vpop.permute.xlu0 %1810
        %1812 = vrot.lane.b32.xlu0 %v1515, 116
        %v1813 = vpop.permute.xlu0 %1812
        %1814 = vrot.lane.b32.xlu0 %v1516, 116
        %v1815 = vpop.permute.xlu0 %1814
        %1816 = vrot.lane.b32.xlu0 %v1517, 116
        %v1817 = vpop.permute.xlu0 %1816
        %1818 = vrot.lane.b32.xlu0 %v1518, 116
        %v1819 = vpop.permute.xlu0 %1818
        %v1820 = vsel %vm1293, %v1805, %v1807
        %v1821 = vsel %vm1293, %v1809, %v1811
        %v1822 = vsel %vm1293, %v1813, %v1815
        %v1823 = vsel %vm1293, %v1817, %v1819
        %v1829 = vsel %vm1570, %v1802, 0
        %v1832 = vsel %vm1570, %v1803, 0
        %1834 = vmatprep.subr.bf16.mxu0 0
        %1835 = vmatpush1.bf16.msra.mxu0 0
        %1836 = vmatprep.subr.bf16.mxu0 0
        %1837 = vmatpush1.bf16.msra.mxu0 0
        %1838 = vmatprep.subr.bf16.mxu0 0
        %1839 = vmatpush1.bf16.msra.mxu0 0
        %1840 = vmatprep.subr.bf16.mxu0 0
        %1841 = vmatpush1.bf16.msra.mxu0 0
        %1842 = vmatprep.subr.bf16.mxu0 0
        %1843 = vmatpush1.bf16.msra.mxu0 %v1823
        %1844 = vmatprep.subr.bf16.mxu0 0
        %1845 = vmatpush1.bf16.msra.mxu0 %v1822
        %1846 = vmatprep.subr.bf16.mxu0 0
        %1847 = vmatpush1.bf16.msra.mxu0 %v1821
        %1848 = vmatprep.subr.bf16.mxu0 0
        %1849 = vmatpush1.bf16.msra.mxu0 %v1820
        %1850 = vmatprep.subr.bf16.mxu0 0
        %1851 = vmatpush2.bf16.msra.mxu0 0
        %1852 = vmatprep.subr.bf16.mxu0 0
        %1853 = vmatpush2.bf16.msra.mxu0 0
        %1854 = vmatprep.subr.bf16.mxu0 0
        %1855 = vmatpush2.bf16.msra.mxu0 0
        %1856 = vmatprep.subr.bf16.mxu0 0
        %1857 = vmatpush2.bf16.msra.mxu0 0
        %1858 = vmatprep.subr.bf16.mxu0 0
        %1859 = vmatpush2.bf16.msra.mxu0 0
        %1860 = vmatprep.subr.bf16.mxu0 0
        %1861 = vmatpush2.bf16.msra.mxu0 0
        %1862 = vmatprep.subr.bf16.mxu0 0
        %1863 = vmatpush2.bf16.msra.mxu0 0
        %1864 = vmatprep.subr.bf16.mxu0 0
        %1865 = vmatpush2.bf16.msra.mxu0 0
        %1866 = vmatprep.mubr.bf16.mxu0 0
        %1867 = vmatmul.mubr.bf16.gmra.mxu0 %v1829
        %v1868 = vpop.f32.mrf.mxu0
        %v1869 = vadd.f32 0.0, %v1868
        %v1870 = vpop.f32.mrf.mxu0
        %v1871 = vpop.f32.mrf.mxu0
        %v1872 = vadd.f32 0.0, %v1871
        %v1873 = vpop.f32.mrf.mxu0
        %1874 = vmatprep.mubr.bf16.mxu0 0
        %1875 = vmatmul.mubr.bf16.gmra.mxu0 %v1832
        %v1876 = vpop.f32.mrf.mxu0
        %v1877 = vadd.f32 0.0, %v1876
        %v1878 = vpop.f32.mrf.mxu0
        %v1879 = vpop.f32.mrf.mxu0
        %v1880 = vadd.f32 0.0, %v1879
        %v1881 = vpop.f32.mrf.mxu0
        %1882 = vdwg.mxu0
        %v1883 = vadd.f32 %v1785, %v1869
        %v1884 = vadd.f32 %v1786, %v1872
        %v1885 = vadd.f32 %v1787, %v1877
        %v1886 = vadd.f32 %v1788, %v1880
        %v1887 = vld [vmem:[%s4] sm:$0xff]
        %v1888 = vld [vmem:[%s4 + $0x8] sm:$0xff]
        %v1889 = vld [vmem:[%s4 + $0x10] sm:$0xff]
        %v1890 = vld [vmem:[%s4 + $0x18] sm:$0xff]
        %1892 = vset.pattern.permute.xlu0 0
        %1893 = vperm.xlu0 %1892, %v1887
        %v1894 = vpop.permute.xlu0 %1893
        %1897 = vset.pattern.permute.xlu0 0
        %1898 = vperm.xlu0 %1897, %v1888
        %v1899 = vpop.permute.xlu0 %1898
        %1902 = vset.pattern.permute.xlu0 0
        %1903 = vperm.xlu0 %1902, %v1889
        %v1904 = vpop.permute.xlu0 %1903
        %1907 = vset.pattern.permute.xlu0 0
        %1908 = vperm.xlu0 %1907, %v1890
        %v1909 = vpop.permute.xlu0 %1908
        %v1911 = vadd.f32 %v1883, %v1894
        %v1912 = vadd.f32 %v1884, %v1899
        %v1913 = vadd.f32 %v1885, %v1904
        %v1914 = vadd.f32 %v1886, %v1909
        %v1915 = vmax.f32 %v1911, 0.0
        %v1916 = vmax.f32 %v1912, 0.0
        %v1917 = vmax.f32 %v1913, 0.0
        %v1918 = vmax.f32 %v1914, 0.0
        %v1919 = vpack.c.bf16 %v1916, %v1915
        %v1920 = vpack.c.bf16 %v1918, %v1917
        %v1923 = vunpack.c.l.b16 %v1919
        %v1924 = vunpack.c.h.b16 %v1919
        %v1925 = vunpack.c.l.b16 %v1920
        %v1926 = vunpack.c.h.b16 %v1920
        %v1927 = vpack.c.b16 %v1923, %v1923
        %v1928 = vpack.c.b16 %v1924, %v1924
        %v1929 = vpack.c.b16 %v1925, %v1925
        %v1930 = vpack.c.b16 %v1926, %v1926
        %1935 = vst [vmem:[%s378] sm:$0xf] %v1927
        %1936 = vst [vmem:[%s378 + $0x4] sm:$0xf] %v1928
        %1937 = vst [vmem:[%s378 + $0x8] sm:$0xf] %v1929
        %1938 = vst [vmem:[%s378 + $0xc] sm:$0xf] %v1930
        %s1939 = sand.u32 %s134, 1
        %s1940 = sand.u32 %s134, 1
        %s1941 = smul.addr %s1940, 16
        %s1942 = scalar_lea.vmem [#allocation3], %s1941
        // Predicated region
        $region79: #{dqn_forward.2} parent=73 // pred_check
          %p1943 = pneg %p144
        $region80: #{dqn_forward.2} parent=73 // pred_check_branch
          %1945 = sbr.rel (%p1943) target = $region82
        $region81: #{dqn_forward.2} parent=73 // pred_region
          %s1946 = smul.addr %s16, 4
          %s1947 = scalar_lea.vmem %s5, %s1946
          // Predicated region
          $region83: #{dqn_forward.2} parent=81 // pred_check
            _
          $region84: #{dqn_forward.2} parent=81 // pred_check_branch
            %1949 = sbr.rel (0) target = $region86
          $region85: #{dqn_forward.2} parent=81 // pred_region
            // Predicated region
            $region87: #{dqn_forward.2} parent=85 // pred_check
              _
            $region88: #{dqn_forward.2} parent=85 // pred_check_branch
              %1951 = sbr.rel target = $region90
            $region89: #{dqn_forward.2} parent=85 // pred_region
              // Predicated region
              $region102: #{dqn_forward.2} parent=89 // pred_check
                _
              $region103: #{dqn_forward.2} parent=89 // pred_check_branch
                %1973 = sbr.rel (0) target = $region105
              $region104: #{dqn_forward.2} parent=89 // pred_region
                loop: start=0, step=1, limit=1
                $region106: #{dqn_forward.2} parent=104 // loop_pre_header
                  _
                $region107: #{dqn_forward.2} parent=104 // loop_header
                  %s1975 = sphi 0, %s1979
                  %p1976 = scmp.ge.s32.totalorder %s1975, 1
                  %s1980 = sphi %s1942, %s1942
                  %s1981 = sphi %s1947, %s1947
                $region108: #{dqn_forward.2} parent=104 // loop_header_branch
                  %1978 = sbr.rel (%p1976) target = $region112
                $region109: #{dqn_forward.2} parent=104 // loop_body
                  _
                $region110: #{dqn_forward.2} parent=104 // loop_footer
                  %s1979 = sadd.s32 1, %s1975
                $region111: #{dqn_forward.2} parent=104 // loop_footer_branch
                  %1974 = sbr.rel target = $region107
                $region112: #{dqn_forward.2} parent=104 // loop_exit
                  _
                %s1983 = ssub.s32 16, 1
                loop: start=0, step=1, limit=1
                $region113: #{dqn_forward.2} parent=104 // loop_pre_header
                  _
                $region114: #{dqn_forward.2} parent=104 // loop_header
                  %s1985 = sphi 0, %s1989
                  %p1986 = scmp.ge.s32.totalorder %s1985, 1
                  %s1990 = sphi %s1942, %s1942
                  %s1991 = sphi %s1947, %s1947
                $region115: #{dqn_forward.2} parent=104 // loop_header_branch
                  %1988 = sbr.rel (%p1986) target = $region119
                $region116: #{dqn_forward.2} parent=104 // loop_body
                  %v1992 = vld [vmem:[%s1990] sm:%s1983]
                  %1993 = vst [vmem:[%s1991] sm:%s1983] %v1992
                  %v1994 = vld [vmem:[%s1990 + $0x4] sm:%s1983]
                  %1995 = vst [vmem:[%s1991 + $0x8] sm:%s1983] %v1994
                  %v1996 = vld [vmem:[%s1990 + $0x8] sm:%s1983]
                  %1997 = vst [vmem:[%s1991 + $0x10] sm:%s1983] %v1996
                  %v1998 = vld [vmem:[%s1990 + $0xc] sm:%s1983]
                  %1999 = vst [vmem:[%s1991 + $0x18] sm:%s1983] %v1998
                $region117: #{dqn_forward.2} parent=104 // loop_footer
                  %s1989 = sadd.s32 1, %s1985
                $region118: #{dqn_forward.2} parent=104 // loop_footer_branch
                  %1984 = sbr.rel target = $region114
                $region119: #{dqn_forward.2} parent=104 // loop_exit
                  _
              $region105: #{dqn_forward.2} parent=89 // pred_fallthru
                _
            $region90: #{dqn_forward.2} parent=85 // pred_fallthru
              _
            // Predicated region
            $region91: #{dqn_forward.2} parent=85 // pred_check
              _
            $region92: #{dqn_forward.2} parent=85 // pred_check_branch
              %1953 = sbr.rel (0) target = $region94
            $region93: #{dqn_forward.2} parent=85 // pred_region
              %s1955 = ssub.s32 16, 1
              loop: start=0, step=1, limit=1
              $region95: #{dqn_forward.2} parent=93 // loop_pre_header
                _
              $region96: #{dqn_forward.2} parent=93 // loop_header
                %s1957 = sphi 0, %s1961
                %p1958 = scmp.ge.s32.totalorder %s1957, 1
                %s1962 = sphi %s1942, %s1942
                %s1963 = sphi %s1947, %s1947
              $region97: #{dqn_forward.2} parent=93 // loop_header_branch
                %1960 = sbr.rel (%p1958) target = $region101
              $region98: #{dqn_forward.2} parent=93 // loop_body
                %v1964 = vld [vmem:[%s1962] sm:%s1955]
                %1965 = vst [vmem:[%s1963] sm:%s1955] %v1964
                %v1966 = vld [vmem:[%s1962 + $0x4] sm:%s1955]
                %1967 = vst [vmem:[%s1963 + $0x8] sm:%s1955] %v1966
                %v1968 = vld [vmem:[%s1962 + $0x8] sm:%s1955]
                %1969 = vst [vmem:[%s1963 + $0x10] sm:%s1955] %v1968
                %v1970 = vld [vmem:[%s1962 + $0xc] sm:%s1955]
                %1971 = vst [vmem:[%s1963 + $0x18] sm:%s1955] %v1970
              $region99: #{dqn_forward.2} parent=93 // loop_footer
                %s1961 = sadd.s32 1, %s1957
              $region100: #{dqn_forward.2} parent=93 // loop_footer_branch
                %1956 = sbr.rel target = $region96
              $region101: #{dqn_forward.2} parent=93 // loop_exit
                _
            $region94: #{dqn_forward.2} parent=85 // pred_fallthru
              _
          $region86: #{dqn_forward.2} parent=81 // pred_fallthru
            _
          %2000 = vnop
        $region82: #{dqn_forward.2} parent=73 // pred_fallthru
          _
      $region74: #{dqn_forward.2} parent=5 // pred_fallthru
        _
      %p2001 = scmp.le.s32.totalorder 2, %s11
      // Predicated region
      $region120: #{dqn_forward.2} parent=5 // pred_check
        %p2002 = pneg %p2001
      $region121: #{dqn_forward.2} parent=5 // pred_check_branch
        %2004 = sbr.rel (%p2002) target = $region123
      $region122: #{dqn_forward.2} parent=5 // pred_region
        %s2005 = ssub.s32 %s11, 2
        // Predicated region
        $region124: #{dqn_forward.2} parent=122 // pred_check
          %p2006 = pneg %p150
        $region125: #{dqn_forward.2} parent=122 // pred_check_branch
          %2008 = sbr.rel (%p2006) target = $region127
        $region126: #{dqn_forward.2} parent=122 // pred_region
          %s2009 = sand.u32 %s135, 1
          %s2010 = sand.u32 %s135, 1
          %s2011 = smul.addr %s2010, 16
          %s2012 = scalar_lea.vmem [#allocation3], %s2011
        $region127: #{dqn_forward.2} parent=122 // pred_fallthru
          _
      $region123: #{dqn_forward.2} parent=5 // pred_fallthru
        _
    $region6: #{dqn_forward.2} parent=1 // loop_footer
      %s15 = sadd.s32 1, %s11
    $region7: #{dqn_forward.2} parent=1 // loop_footer_branch
      %10 = sbr.rel target = $region3
    $region8: #{dqn_forward.2} parent=1 // loop_exit
      _

// kernel: dqn_forward.3
$region0: #{dqn_forward.3}
  #allocation0 [shape = 'u32[]', space=smem, size = 0x4, offset = 0x4, fixed_abs, tag = 'smem constant byte address 0x4 - core index']
  #allocation1 [shape = 'u32[144,128]{1,0:T(1,128)}', space=vmem, size = 0x12000, scoped, tag = 'internal scratch']
  %s0 = inlined_call_operand.vmem [shape: bf16[8,4096], index: 0, kind: input, shape index: {}]
  %s1 = inlined_call_operand.vmem [shape: bf16[4096,256], index: 1, kind: input, shape index: {}]
  %s2 = inlined_call_operand.vmem [shape: f32[1,256], index: 2, kind: input, shape index: {}]
  %s3 = inlined_call_operand.vmem [shape: bf16[256,128], index: 3, kind: input, shape index: {}]
  %s4 = inlined_call_operand.vmem [shape: f32[1,128], index: 4, kind: input, shape index: {}]
  %s5 = inlined_call_operand.vmem [shape: f32[8,128], index: 5, kind: output, shape index: {}]
  %s6 = sld [smem:[#allocation0]]
  $region30: #{dqn_forward.3} parent=0
    _
  %s8 = ssub.s32 1, %s6
  %s9 = scalar_select 0, %s8, %s6
  // Predicated region
  $region2: #{dqn_forward.3} parent=0 // pred_check
    _
  $region3: #{dqn_forward.3} parent=0 // pred_check_branch
    %11 = sbr.rel (0) target = $region5
  $region4: #{dqn_forward.3} parent=0 // pred_region
    _
  $region5: #{dqn_forward.3} parent=0 // pred_fallthru
    _
  // Predicated region
  $region6: #{dqn_forward.3} parent=0 // pred_check
    _
  $region7: #{dqn_forward.3} parent=0 // pred_check_branch
    %13 = sbr.rel (0) target = $region9
  $region8: #{dqn_forward.3} parent=0 // pred_region
    _
  $region9: #{dqn_forward.3} parent=0 // pred_fallthru
    _
  // Predicated region
  $region10: #{dqn_forward.3} parent=0 // pred_check
    _
  $region11: #{dqn_forward.3} parent=0 // pred_check_branch
    %15 = sbr.rel (0) target = $region13
  $region12: #{dqn_forward.3} parent=0 // pred_region
    _
  $region13: #{dqn_forward.3} parent=0 // pred_fallthru
    _
  // Predicated region
  $region14: #{dqn_forward.3} parent=0 // pred_check
    _
  $region15: #{dqn_forward.3} parent=0 // pred_check_branch
    %17 = sbr.rel (0) target = $region17
  $region16: #{dqn_forward.3} parent=0 // pred_region
    _
  $region17: #{dqn_forward.3} parent=0 // pred_fallthru
    _
  // Predicated region
  $region18: #{dqn_forward.3} parent=0 // pred_check
    _
  $region19: #{dqn_forward.3} parent=0 // pred_check_branch
    %19 = sbr.rel (0) target = $region21
  $region20: #{dqn_forward.3} parent=0 // pred_region
    _
  $region21: #{dqn_forward.3} parent=0 // pred_fallthru
    _
  %v21 = vld [vmem:[%s0] sm:$0xff]
  %v22 = vld [vmem:[%s0 + $0x8] sm:$0xff]
  %v23 = vld [vmem:[%s0 + $0x10] sm:$0xff]
  %v24 = vld [vmem:[%s0 + $0x18] sm:$0xff]
  %v25 = vld [vmem:[%s0 + $0x20] sm:$0xff]
  %v26 = vld [vmem:[%s0 + $0x28] sm:$0xff]
  %v27 = vld [vmem:[%s0 + $0x30] sm:$0xff]
  %v28 = vld [vmem:[%s0 + $0x38] sm:$0xff]
  %v29 = vld [vmem:[%s0 + $0x40] sm:$0xff]
  %v30 = vld [vmem:[%s0 + $0x48] sm:$0xff]
  %v31 = vld [vmem:[%s0 + $0x50] sm:$0xff]
  %v32 = vld [vmem:[%s0 + $0x58] sm:$0xff]
  %v33 = vld [vmem:[%s0 + $0x60] sm:$0xff]
  %v34 = vld [vmem:[%s0 + $0x68] sm:$0xff]
  %v35 = vld [vmem:[%s0 + $0x70] sm:$0xff]
  %v36 = vld [vmem:[%s0 + $0x78] sm:$0xff]
  %v37 = vld [vmem:[%s1] sm:$0xff]
  %v38 = vld [vmem:[%s1 + $0x8] sm:$0xff]
  %v39 = vld [vmem:[%s1 + $0x10] sm:$0xff]
  %v40 = vld [vmem:[%s1 + $0x18] sm:$0xff]
  %v41 = vld [vmem:[%s1 + $0x20] sm:$0xff]
  %v42 = vld [vmem:[%s1 + $0x28] sm:$0xff]
  %v43 = vld [vmem:[%s1 + $0x30] sm:$0xff]
  %v44 = vld [vmem:[%s1 + $0x38] sm:$0xff]
  %v45 = vld [vmem:[%s1 + $0x40] sm:$0xff]
  %v46 = vld [vmem:[%s1 + $0x48] sm:$0xff]
  %v47 = vld [vmem:[%s1 + $0x50] sm:$0xff]
  %v48 = vld [vmem:[%s1 + $0x58] sm:$0xff]
  %v49 = vld [vmem:[%s1 + $0x60] sm:$0xff]
  %v50 = vld [vmem:[%s1 + $0x68] sm:$0xff]
  %v51 = vld [vmem:[%s1 + $0x70] sm:$0xff]
  %v52 = vld [vmem:[%s1 + $0x78] sm:$0xff]
  %v53 = vld [vmem:[%s1 + $0x80] sm:$0xff]
  %v54 = vld [vmem:[%s1 + $0x88] sm:$0xff]
  %v55 = vld [vmem:[%s1 + $0x90] sm:$0xff]
  %v56 = vld [vmem:[%s1 + $0x98] sm:$0xff]
  %v57 = vld [vmem:[%s1 + $0xa0] sm:$0xff]
  %v58 = vld [vmem:[%s1 + $0xa8] sm:$0xff]
  %v59 = vld [vmem:[%s1 + $0xb0] sm:$0xff]
  %v60 = vld [vmem:[%s1 + $0xb8] sm:$0xff]
  %v61 = vld [vmem:[%s1 + $0xc0] sm:$0xff]
  %v62 = vld [vmem:[%s1 + $0xc8] sm:$0xff]
  %v63 = vld [vmem:[%s1 + $0xd0] sm:$0xff]
  %v64 = vld [vmem:[%s1 + $0xd8] sm:$0xff]
  %v65 = vld [vmem:[%s1 + $0xe0] sm:$0xff]
  %v66 = vld [vmem:[%s1 + $0xe8] sm:$0xff]
  %v67 = vld [vmem:[%s1 + $0xf0] sm:$0xff]
  %v68 = vld [vmem:[%s1 + $0xf8] sm:$0xff]
  %v69 = vld [vmem:[%s1 + $0x100] sm:$0xff]
  %v70 = vld [vmem:[%s1 + $0x108] sm:$0xff]
  %v71 = vld [vmem:[%s1 + $0x110] sm:$0xff]
  %v72 = vld [vmem:[%s1 + $0x118] sm:$0xff]
  %v73 = vld [vmem:[%s1 + $0x120] sm:$0xff]
  %v74 = vld [vmem:[%s1 + $0x128] sm:$0xff]
  %v75 = vld [vmem:[%s1 + $0x130] sm:$0xff]
  %v76 = vld [vmem:[%s1 + $0x138] sm:$0xff]
  %v77 = vld [vmem:[%s1 + $0x140] sm:$0xff]
  %v78 = vld [vmem:[%s1 + $0x148] sm:$0xff]
  %v79 = vld [vmem:[%s1 + $0x150] sm:$0xff]
  %v80 = vld [vmem:[%s1 + $0x158] sm:$0xff]
  %v81 = vld [vmem:[%s1 + $0x160] sm:$0xff]
  %v82 = vld [vmem:[%s1 + $0x168] sm:$0xff]
  %v83 = vld [vmem:[%s1 + $0x170] sm:$0xff]
  %v84 = vld [vmem:[%s1 + $0x178] sm:$0xff]
  %v85 = vld [vmem:[%s1 + $0x180] sm:$0xff]
  %v86 = vld [vmem:[%s1 + $0x188] sm:$0xff]
  %v87 = vld [vmem:[%s1 + $0x190] sm:$0xff]
  %v88 = vld [vmem:[%s1 + $0x198] sm:$0xff]
  %v89 = vld [vmem:[%s1 + $0x1a0] sm:$0xff]
  %v90 = vld [vmem:[%s1 + $0x1a8] sm:$0xff]
  %v91 = vld [vmem:[%s1 + $0x1b0] sm:$0xff]
  %v92 = vld [vmem:[%s1 + $0x1b8] sm:$0xff]
  %v93 = vld [vmem:[%s1 + $0x1c0] sm:$0xff]
  %v94 = vld [vmem:[%s1 + $0x1c8] sm:$0xff]
  %v95 = vld [vmem:[%s1 + $0x1d0] sm:$0xff]
  %v96 = vld [vmem:[%s1 + $0x1d8] sm:$0xff]
  %v97 = vld [vmem:[%s1 + $0x1e0] sm:$0xff]
  %v98 = vld [vmem:[%s1 + $0x1e8] sm:$0xff]
  %v99 = vld [vmem:[%s1 + $0x1f0] sm:$0xff]
  %v100 = vld [vmem:[%s1 + $0x1f8] sm:$0xff]
  %v101 = vld [vmem:[%s1 + $0x200] sm:$0xff]
  %v102 = vld [vmem:[%s1 + $0x208] sm:$0xff]
  %v103 = vld [vmem:[%s1 + $0x210] sm:$0xff]
  %v104 = vld [vmem:[%s1 + $0x218] sm:$0xff]
  %v105 = vld [vmem:[%s1 + $0x220] sm:$0xff]
  %v106 = vld [vmem:[%s1 + $0x228] sm:$0xff]
  %v107 = vld [vmem:[%s1 + $0x230] sm:$0xff]
  %v108 = vld [vmem:[%s1 + $0x238] sm:$0xff]
  %v109 = vld [vmem:[%s1 + $0x240] sm:$0xff]
  %v110 = vld [vmem:[%s1 + $0x248] sm:$0xff]
  %v111 = vld [vmem:[%s1 + $0x250] sm:$0xff]
  %v112 = vld [vmem:[%s1 + $0x258] sm:$0xff]
  %v113 = vld [vmem:[%s1 + $0x260] sm:$0xff]
  %v114 = vld [vmem:[%s1 + $0x268] sm:$0xff]
  %v115 = vld [vmem:[%s1 + $0x270] sm:$0xff]
  %v116 = vld [vmem:[%s1 + $0x278] sm:$0xff]
  %v117 = vld [vmem:[%s1 + $0x280] sm:$0xff]
  %v118 = vld [vmem:[%s1 + $0x288] sm:$0xff]
  %v119 = vld [vmem:[%s1 + $0x290] sm:$0xff]
  %v120 = vld [vmem:[%s1 + $0x298] sm:$0xff]
  %v121 = vld [vmem:[%s1 + $0x2a0] sm:$0xff]
  %v122 = vld [vmem:[%s1 + $0x2a8] sm:$0xff]
  %v123 = vld [vmem:[%s1 + $0x2b0] sm:$0xff]
  %v124 = vld [vmem:[%s1 + $0x2b8] sm:$0xff]
  %v125 = vld [vmem:[%s1 + $0x2c0] sm:$0xff]
  %v126 = vld [vmem:[%s1 + $0x2c8] sm:$0xff]
  %v127 = vld [vmem:[%s1 + $0x2d0] sm:$0xff]
  %v128 = vld [vmem:[%s1 + $0x2d8] sm:$0xff]
  %v129 = vld [vmem:[%s1 + $0x2e0] sm:$0xff]
  %v130 = vld [vmem:[%s1 + $0x2e8] sm:$0xff]
  %v131 = vld [vmem:[%s1 + $0x2f0] sm:$0xff]
  %v132 = vld [vmem:[%s1 + $0x2f8] sm:$0xff]
  %v133 = vld [vmem:[%s1 + $0x300] sm:$0xff]
  %v134 = vld [vmem:[%s1 + $0x308] sm:$0xff]
  %v135 = vld [vmem:[%s1 + $0x310] sm:$0xff]
  %v136 = vld [vmem:[%s1 + $0x318] sm:$0xff]
  %v137 = vld [vmem:[%s1 + $0x320] sm:$0xff]
  %v138 = vld [vmem:[%s1 + $0x328] sm:$0xff]
  %v139 = vld [vmem:[%s1 + $0x330] sm:$0xff]
  %v140 = vld [vmem:[%s1 + $0x338] sm:$0xff]
  %v141 = vld [vmem:[%s1 + $0x340] sm:$0xff]
  %v142 = vld [vmem:[%s1 + $0x348] sm:$0xff]
  %v143 = vld [vmem:[%s1 + $0x350] sm:$0xff]
  %v144 = vld [vmem:[%s1 + $0x358] sm:$0xff]
  %v145 = vld [vmem:[%s1 + $0x360] sm:$0xff]
  %v146 = vld [vmem:[%s1 + $0x368] sm:$0xff]
  %v147 = vld [vmem:[%s1 + $0x370] sm:$0xff]
  %v148 = vld [vmem:[%s1 + $0x378] sm:$0xff]
  %v149 = vld [vmem:[%s1 + $0x380] sm:$0xff]
  %v150 = vld [vmem:[%s1 + $0x388] sm:$0xff]
  %v151 = vld [vmem:[%s1 + $0x390] sm:$0xff]
  %v152 = vld [vmem:[%s1 + $0x398] sm:$0xff]
  %v153 = vld [vmem:[%s1 + $0x3a0] sm:$0xff]
  %v154 = vld [vmem:[%s1 + $0x3a8] sm:$0xff]
  %v155 = vld [vmem:[%s1 + $0x3b0] sm:$0xff]
  %v156 = vld [vmem:[%s1 + $0x3b8] sm:$0xff]
  %v157 = vld [vmem:[%s1 + $0x3c0] sm:$0xff]
  %v158 = vld [vmem:[%s1 + $0x3c8] sm:$0xff]
  %v159 = vld [vmem:[%s1 + $0x3d0] sm:$0xff]
  %v160 = vld [vmem:[%s1 + $0x3d8] sm:$0xff]
  %v161 = vld [vmem:[%s1 + $0x3e0] sm:$0xff]
  %v162 = vld [vmem:[%s1 + $0x3e8] sm:$0xff]
  %v163 = vld [vmem:[%s1 + $0x3f0] sm:$0xff]
  %v164 = vld [vmem:[%s1 + $0x3f8] sm:$0xff]
  %v165 = vld [vmem:[%s1 + $0x400] sm:$0xff]
  %v166 = vld [vmem:[%s1 + $0x408] sm:$0xff]
  %v167 = vld [vmem:[%s1 + $0x410] sm:$0xff]
  %v168 = vld [vmem:[%s1 + $0x418] sm:$0xff]
  %v169 = vld [vmem:[%s1 + $0x420] sm:$0xff]
  %v170 = vld [vmem:[%s1 + $0x428] sm:$0xff]
  %v171 = vld [vmem:[%s1 + $0x430] sm:$0xff]
  %v172 = vld [vmem:[%s1 + $0x438] sm:$0xff]
  %v173 = vld [vmem:[%s1 + $0x440] sm:$0xff]
  %v174 = vld [vmem:[%s1 + $0x448] sm:$0xff]
  %v175 = vld [vmem:[%s1 + $0x450] sm:$0xff]
  %v176 = vld [vmem:[%s1 + $0x458] sm:$0xff]
  %v177 = vld [vmem:[%s1 + $0x460] sm:$0xff]
  %v178 = vld [vmem:[%s1 + $0x468] sm:$0xff]
  %v179 = vld [vmem:[%s1 + $0x470] sm:$0xff]
  %v180 = vld [vmem:[%s1 + $0x478] sm:$0xff]
  %v181 = vld [vmem:[%s1 + $0x480] sm:$0xff]
  %v182 = vld [vmem:[%s1 + $0x488] sm:$0xff]
  %v183 = vld [vmem:[%s1 + $0x490] sm:$0xff]
  %v184 = vld [vmem:[%s1 + $0x498] sm:$0xff]
  %v185 = vld [vmem:[%s1 + $0x4a0] sm:$0xff]
  %v186 = vld [vmem:[%s1 + $0x4a8] sm:$0xff]
  %v187 = vld [vmem:[%s1 + $0x4b0] sm:$0xff]
  %v188 = vld [vmem:[%s1 + $0x4b8] sm:$0xff]
  %v189 = vld [vmem:[%s1 + $0x4c0] sm:$0xff]
  %v190 = vld [vmem:[%s1 + $0x4c8] sm:$0xff]
  %v191 = vld [vmem:[%s1 + $0x4d0] sm:$0xff]
  %v192 = vld [vmem:[%s1 + $0x4d8] sm:$0xff]
  %v193 = vld [vmem:[%s1 + $0x4e0] sm:$0xff]
  %v194 = vld [vmem:[%s1 + $0x4e8] sm:$0xff]
  %v195 = vld [vmem:[%s1 + $0x4f0] sm:$0xff]
  %v196 = vld [vmem:[%s1 + $0x4f8] sm:$0xff]
  %v197 = vld [vmem:[%s1 + $0x500] sm:$0xff]
  %v198 = vld [vmem:[%s1 + $0x508] sm:$0xff]
  %v199 = vld [vmem:[%s1 + $0x510] sm:$0xff]
  %v200 = vld [vmem:[%s1 + $0x518] sm:$0xff]
  %v201 = vld [vmem:[%s1 + $0x520] sm:$0xff]
  %v202 = vld [vmem:[%s1 + $0x528] sm:$0xff]
  %v203 = vld [vmem:[%s1 + $0x530] sm:$0xff]
  %v204 = vld [vmem:[%s1 + $0x538] sm:$0xff]
  %v205 = vld [vmem:[%s1 + $0x540] sm:$0xff]
  %v206 = vld [vmem:[%s1 + $0x548] sm:$0xff]
  %v207 = vld [vmem:[%s1 + $0x550] sm:$0xff]
  %v208 = vld [vmem:[%s1 + $0x558] sm:$0xff]
  %v209 = vld [vmem:[%s1 + $0x560] sm:$0xff]
  %v210 = vld [vmem:[%s1 + $0x568] sm:$0xff]
  %v211 = vld [vmem:[%s1 + $0x570] sm:$0xff]
  %v212 = vld [vmem:[%s1 + $0x578] sm:$0xff]
  %v213 = vld [vmem:[%s1 + $0x580] sm:$0xff]
  %v214 = vld [vmem:[%s1 + $0x588] sm:$0xff]
  %v215 = vld [vmem:[%s1 + $0x590] sm:$0xff]
  %v216 = vld [vmem:[%s1 + $0x598] sm:$0xff]
  %v217 = vld [vmem:[%s1 + $0x5a0] sm:$0xff]
  %v218 = vld [vmem:[%s1 + $0x5a8] sm:$0xff]
  %v219 = vld [vmem:[%s1 + $0x5b0] sm:$0xff]
  %v220 = vld [vmem:[%s1 + $0x5b8] sm:$0xff]
  %v221 = vld [vmem:[%s1 + $0x5c0] sm:$0xff]
  %v222 = vld [vmem:[%s1 + $0x5c8] sm:$0xff]
  %v223 = vld [vmem:[%s1 + $0x5d0] sm:$0xff]
  %v224 = vld [vmem:[%s1 + $0x5d8] sm:$0xff]
  %v225 = vld [vmem:[%s1 + $0x5e0] sm:$0xff]
  %v226 = vld [vmem:[%s1 + $0x5e8] sm:$0xff]
  %v227 = vld [vmem:[%s1 + $0x5f0] sm:$0xff]
  %v228 = vld [vmem:[%s1 + $0x5f8] sm:$0xff]
  %v229 = vld [vmem:[%s1 + $0x600] sm:$0xff]
  %v230 = vld [vmem:[%s1 + $0x608] sm:$0xff]
  %v231 = vld [vmem:[%s1 + $0x610] sm:$0xff]
  %v232 = vld [vmem:[%s1 + $0x618] sm:$0xff]
  %v233 = vld [vmem:[%s1 + $0x620] sm:$0xff]
  %v234 = vld [vmem:[%s1 + $0x628] sm:$0xff]
  %v235 = vld [vmem:[%s1 + $0x630] sm:$0xff]
  %v236 = vld [vmem:[%s1 + $0x638] sm:$0xff]
  %v237 = vld [vmem:[%s1 + $0x640] sm:$0xff]
  %v238 = vld [vmem:[%s1 + $0x648] sm:$0xff]
  %v239 = vld [vmem:[%s1 + $0x650] sm:$0xff]
  %v240 = vld [vmem:[%s1 + $0x658] sm:$0xff]
  %v241 = vld [vmem:[%s1 + $0x660] sm:$0xff]
  %v242 = vld [vmem:[%s1 + $0x668] sm:$0xff]
  %v243 = vld [vmem:[%s1 + $0x670] sm:$0xff]
  %v244 = vld [vmem:[%s1 + $0x678] sm:$0xff]
  %v245 = vld [vmem:[%s1 + $0x680] sm:$0xff]
  %v246 = vld [vmem:[%s1 + $0x688] sm:$0xff]
  %v247 = vld [vmem:[%s1 + $0x690] sm:$0xff]
  %v248 = vld [vmem:[%s1 + $0x698] sm:$0xff]
  %v249 = vld [vmem:[%s1 + $0x6a0] sm:$0xff]
  %v250 = vld [vmem:[%s1 + $0x6a8] sm:$0xff]
  %v251 = vld [vmem:[%s1 + $0x6b0] sm:$0xff]
  %v252 = vld [vmem:[%s1 + $0x6b8] sm:$0xff]
  %v253 = vld [vmem:[%s1 + $0x6c0] sm:$0xff]
  %v254 = vld [vmem:[%s1 + $0x6c8] sm:$0xff]
  %v255 = vld [vmem:[%s1 + $0x6d0] sm:$0xff]
  %v256 = vld [vmem:[%s1 + $0x6d8] sm:$0xff]
  %v257 = vld [vmem:[%s1 + $0x6e0] sm:$0xff]
  %v258 = vld [vmem:[%s1 + $0x6e8] sm:$0xff]
  %v259 = vld [vmem:[%s1 + $0x6f0] sm:$0xff]
  %v260 = vld [vmem:[%s1 + $0x6f8] sm:$0xff]
  %v261 = vld [vmem:[%s1 + $0x700] sm:$0xff]
  %v262 = vld [vmem:[%s1 + $0x708] sm:$0xff]
  %v263 = vld [vmem:[%s1 + $0x710] sm:$0xff]
  %v264 = vld [vmem:[%s1 + $0x718] sm:$0xff]
  %v265 = vld [vmem:[%s1 + $0x720] sm:$0xff]
  %v266 = vld [vmem:[%s1 + $0x728] sm:$0xff]
  %v267 = vld [vmem:[%s1 + $0x730] sm:$0xff]
  %v268 = vld [vmem:[%s1 + $0x738] sm:$0xff]
  %v269 = vld [vmem:[%s1 + $0x740] sm:$0xff]
  %v270 = vld [vmem:[%s1 + $0x748] sm:$0xff]
  %v271 = vld [vmem:[%s1 + $0x750] sm:$0xff]
  %v272 = vld [vmem:[%s1 + $0x758] sm:$0xff]
  %v273 = vld [vmem:[%s1 + $0x760] sm:$0xff]
  %v274 = vld [vmem:[%s1 + $0x768] sm:$0xff]
  %v275 = vld [vmem:[%s1 + $0x770] sm:$0xff]
  %v276 = vld [vmem:[%s1 + $0x778] sm:$0xff]
  %v277 = vld [vmem:[%s1 + $0x780] sm:$0xff]
  %v278 = vld [vmem:[%s1 + $0x788] sm:$0xff]
  %v279 = vld [vmem:[%s1 + $0x790] sm:$0xff]
  %v280 = vld [vmem:[%s1 + $0x798] sm:$0xff]
  %v281 = vld [vmem:[%s1 + $0x7a0] sm:$0xff]
  %v282 = vld [vmem:[%s1 + $0x7a8] sm:$0xff]
  %v283 = vld [vmem:[%s1 + $0x7b0] sm:$0xff]
  %v284 = vld [vmem:[%s1 + $0x7b8] sm:$0xff]
  %v285 = vld [vmem:[%s1 + $0x7c0] sm:$0xff]
  %v286 = vld [vmem:[%s1 + $0x7c8] sm:$0xff]
  %v287 = vld [vmem:[%s1 + $0x7d0] sm:$0xff]
  %v288 = vld [vmem:[%s1 + $0x7d8] sm:$0xff]
  %v289 = vld [vmem:[%s1 + $0x7e0] sm:$0xff]
  %v290 = vld [vmem:[%s1 + $0x7e8] sm:$0xff]
  %v291 = vld [vmem:[%s1 + $0x7f0] sm:$0xff]
  %v292 = vld [vmem:[%s1 + $0x7f8] sm:$0xff]
  %v293 = vld [vmem:[%s1 + $0x800] sm:$0xff]
  %v294 = vld [vmem:[%s1 + $0x808] sm:$0xff]
  %v295 = vld [vmem:[%s1 + $0x810] sm:$0xff]
  %v296 = vld [vmem:[%s1 + $0x818] sm:$0xff]
  %v297 = vld [vmem:[%s1 + $0x820] sm:$0xff]
  %v298 = vld [vmem:[%s1 + $0x828] sm:$0xff]
  %v299 = vld [vmem:[%s1 + $0x830] sm:$0xff]
  %v300 = vld [vmem:[%s1 + $0x838] sm:$0xff]
  %v301 = vld [vmem:[%s1 + $0x840] sm:$0xff]
  %v302 = vld [vmem:[%s1 + $0x848] sm:$0xff]
  %v303 = vld [vmem:[%s1 + $0x850] sm:$0xff]
  %v304 = vld [vmem:[%s1 + $0x858] sm:$0xff]
  %v305 = vld [vmem:[%s1 + $0x860] sm:$0xff]
  %v306 = vld [vmem:[%s1 + $0x868] sm:$0xff]
  %v307 = vld [vmem:[%s1 + $0x870] sm:$0xff]
  %v308 = vld [vmem:[%s1 + $0x878] sm:$0xff]
  %v309 = vld [vmem:[%s1 + $0x880] sm:$0xff]
  %v310 = vld [vmem:[%s1 + $0x888] sm:$0xff]
  %v311 = vld [vmem:[%s1 + $0x890] sm:$0xff]
  %v312 = vld [vmem:[%s1 + $0x898] sm:$0xff]
  %v313 = vld [vmem:[%s1 + $0x8a0] sm:$0xff]
  %v314 = vld [vmem:[%s1 + $0x8a8] sm:$0xff]
  %v315 = vld [vmem:[%s1 + $0x8b0] sm:$0xff]
  %v316 = vld [vmem:[%s1 + $0x8b8] sm:$0xff]
  %v317 = vld [vmem:[%s1 + $0x8c0] sm:$0xff]
  %v318 = vld [vmem:[%s1 + $0x8c8] sm:$0xff]
  %v319 = vld [vmem:[%s1 + $0x8d0] sm:$0xff]
  %v320 = vld [vmem:[%s1 + $0x8d8] sm:$0xff]
  %v321 = vld [vmem:[%s1 + $0x8e0] sm:$0xff]
  %v322 = vld [vmem:[%s1 + $0x8e8] sm:$0xff]
  %v323 = vld [vmem:[%s1 + $0x8f0] sm:$0xff]
  %v324 = vld [vmem:[%s1 + $0x8f8] sm:$0xff]
  %v325 = vld [vmem:[%s1 + $0x900] sm:$0xff]
  %v326 = vld [vmem:[%s1 + $0x908] sm:$0xff]
  %v327 = vld [vmem:[%s1 + $0x910] sm:$0xff]
  %v328 = vld [vmem:[%s1 + $0x918] sm:$0xff]
  %v329 = vld [vmem:[%s1 + $0x920] sm:$0xff]
  %v330 = vld [vmem:[%s1 + $0x928] sm:$0xff]
  %v331 = vld [vmem:[%s1 + $0x930] sm:$0xff]
  %v332 = vld [vmem:[%s1 + $0x938] sm:$0xff]
  %v333 = vld [vmem:[%s1 + $0x940] sm:$0xff]
  %v334 = vld [vmem:[%s1 + $0x948] sm:$0xff]
  %v335 = vld [vmem:[%s1 + $0x950] sm:$0xff]
  %v336 = vld [vmem:[%s1 + $0x958] sm:$0xff]
  %v337 = vld [vmem:[%s1 + $0x960] sm:$0xff]
  %v338 = vld [vmem:[%s1 + $0x968] sm:$0xff]
  %v339 = vld [vmem:[%s1 + $0x970] sm:$0xff]
  %v340 = vld [vmem:[%s1 + $0x978] sm:$0xff]
  %v341 = vld [vmem:[%s1 + $0x980] sm:$0xff]
  %v342 = vld [vmem:[%s1 + $0x988] sm:$0xff]
  %v343 = vld [vmem:[%s1 + $0x990] sm:$0xff]
  %v344 = vld [vmem:[%s1 + $0x998] sm:$0xff]
  %v345 = vld [vmem:[%s1 + $0x9a0] sm:$0xff]
  %v346 = vld [vmem:[%s1 + $0x9a8] sm:$0xff]
  %v347 = vld [vmem:[%s1 + $0x9b0] sm:$0xff]
  %v348 = vld [vmem:[%s1 + $0x9b8] sm:$0xff]
  %v349 = vld [vmem:[%s1 + $0x9c0] sm:$0xff]
  %v350 = vld [vmem:[%s1 + $0x9c8] sm:$0xff]
  %v351 = vld [vmem:[%s1 + $0x9d0] sm:$0xff]
  %v352 = vld [vmem:[%s1 + $0x9d8] sm:$0xff]
  %v353 = vld [vmem:[%s1 + $0x9e0] sm:$0xff]
  %v354 = vld [vmem:[%s1 + $0x9e8] sm:$0xff]
  %v355 = vld [vmem:[%s1 + $0x9f0] sm:$0xff]
  %v356 = vld [vmem:[%s1 + $0x9f8] sm:$0xff]
  %v357 = vld [vmem:[%s1 + $0xa00] sm:$0xff]
  %v358 = vld [vmem:[%s1 + $0xa08] sm:$0xff]
  %v359 = vld [vmem:[%s1 + $0xa10] sm:$0xff]
  %v360 = vld [vmem:[%s1 + $0xa18] sm:$0xff]
  %v361 = vld [vmem:[%s1 + $0xa20] sm:$0xff]
  %v362 = vld [vmem:[%s1 + $0xa28] sm:$0xff]
  %v363 = vld [vmem:[%s1 + $0xa30] sm:$0xff]
  %v364 = vld [vmem:[%s1 + $0xa38] sm:$0xff]
  %v365 = vld [vmem:[%s1 + $0xa40] sm:$0xff]
  %v366 = vld [vmem:[%s1 + $0xa48] sm:$0xff]
  %v367 = vld [vmem:[%s1 + $0xa50] sm:$0xff]
  %v368 = vld [vmem:[%s1 + $0xa58] sm:$0xff]
  %v369 = vld [vmem:[%s1 + $0xa60] sm:$0xff]
  %v370 = vld [vmem:[%s1 + $0xa68] sm:$0xff]
  %v371 = vld [vmem:[%s1 + $0xa70] sm:$0xff]
  %v372 = vld [vmem:[%s1 + $0xa78] sm:$0xff]
  %v373 = vld [vmem:[%s1 + $0xa80] sm:$0xff]
  %v374 = vld [vmem:[%s1 + $0xa88] sm:$0xff]
  %v375 = vld [vmem:[%s1 + $0xa90] sm:$0xff]
  %v376 = vld [vmem:[%s1 + $0xa98] sm:$0xff]
  %v377 = vld [vmem:[%s1 + $0xaa0] sm:$0xff]
  %v378 = vld [vmem:[%s1 + $0xaa8] sm:$0xff]
  %v379 = vld [vmem:[%s1 + $0xab0] sm:$0xff]
  %v380 = vld [vmem:[%s1 + $0xab8] sm:$0xff]
  %v381 = vld [vmem:[%s1 + $0xac0] sm:$0xff]
  %v382 = vld [vmem:[%s1 + $0xac8] sm:$0xff]
  %v383 = vld [vmem:[%s1 + $0xad0] sm:$0xff]
  %v384 = vld [vmem:[%s1 + $0xad8] sm:$0xff]
  %v385 = vld [vmem:[%s1 + $0xae0] sm:$0xff]
  %v386 = vld [vmem:[%s1 + $0xae8] sm:$0xff]
  %v387 = vld [vmem:[%s1 + $0xaf0] sm:$0xff]
  %v388 = vld [vmem:[%s1 + $0xaf8] sm:$0xff]
  %v389 = vld [vmem:[%s1 + $0xb00] sm:$0xff]
  %v390 = vld [vmem:[%s1 + $0xb08] sm:$0xff]
  %v391 = vld [vmem:[%s1 + $0xb10] sm:$0xff]
  %v392 = vld [vmem:[%s1 + $0xb18] sm:$0xff]
  %v393 = vld [vmem:[%s1 + $0xb20] sm:$0xff]
  %v394 = vld [vmem:[%s1 + $0xb28] sm:$0xff]
  %v395 = vld [vmem:[%s1 + $0xb30] sm:$0xff]
  %v396 = vld [vmem:[%s1 + $0xb38] sm:$0xff]
  %v397 = vld [vmem:[%s1 + $0xb40] sm:$0xff]
  %v398 = vld [vmem:[%s1 + $0xb48] sm:$0xff]
  %v399 = vld [vmem:[%s1 + $0xb50] sm:$0xff]
  %v400 = vld [vmem:[%s1 + $0xb58] sm:$0xff]
  %v401 = vld [vmem:[%s1 + $0xb60] sm:$0xff]
  %v402 = vld [vmem:[%s1 + $0xb68] sm:$0xff]
  %v403 = vld [vmem:[%s1 + $0xb70] sm:$0xff]
  %v404 = vld [vmem:[%s1 + $0xb78] sm:$0xff]
  %v405 = vld [vmem:[%s1 + $0xb80] sm:$0xff]
  %v406 = vld [vmem:[%s1 + $0xb88] sm:$0xff]
  %v407 = vld [vmem:[%s1 + $0xb90] sm:$0xff]
  %v408 = vld [vmem:[%s1 + $0xb98] sm:$0xff]
  %v409 = vld [vmem:[%s1 + $0xba0] sm:$0xff]
  %v410 = vld [vmem:[%s1 + $0xba8] sm:$0xff]
  %v411 = vld [vmem:[%s1 + $0xbb0] sm:$0xff]
  %v412 = vld [vmem:[%s1 + $0xbb8] sm:$0xff]
  %v413 = vld [vmem:[%s1 + $0xbc0] sm:$0xff]
  %v414 = vld [vmem:[%s1 + $0xbc8] sm:$0xff]
  %v415 = vld [vmem:[%s1 + $0xbd0] sm:$0xff]
  %v416 = vld [vmem:[%s1 + $0xbd8] sm:$0xff]
  %v417 = vld [vmem:[%s1 + $0xbe0] sm:$0xff]
  %v418 = vld [vmem:[%s1 + $0xbe8] sm:$0xff]
  %v419 = vld [vmem:[%s1 + $0xbf0] sm:$0xff]
  %v420 = vld [vmem:[%s1 + $0xbf8] sm:$0xff]
  %v421 = vld [vmem:[%s1 + $0xc00] sm:$0xff]
  %v422 = vld [vmem:[%s1 + $0xc08] sm:$0xff]
  %v423 = vld [vmem:[%s1 + $0xc10] sm:$0xff]
  %v424 = vld [vmem:[%s1 + $0xc18] sm:$0xff]
  %v425 = vld [vmem:[%s1 + $0xc20] sm:$0xff]
  %v426 = vld [vmem:[%s1 + $0xc28] sm:$0xff]
  %v427 = vld [vmem:[%s1 + $0xc30] sm:$0xff]
  %v428 = vld [vmem:[%s1 + $0xc38] sm:$0xff]
  %v429 = vld [vmem:[%s1 + $0xc40] sm:$0xff]
  %v430 = vld [vmem:[%s1 + $0xc48] sm:$0xff]
  %v431 = vld [vmem:[%s1 + $0xc50] sm:$0xff]
  %v432 = vld [vmem:[%s1 + $0xc58] sm:$0xff]
  %v433 = vld [vmem:[%s1 + $0xc60] sm:$0xff]
  %v434 = vld [vmem:[%s1 + $0xc68] sm:$0xff]
  %v435 = vld [vmem:[%s1 + $0xc70] sm:$0xff]
  %v436 = vld [vmem:[%s1 + $0xc78] sm:$0xff]
  %v437 = vld [vmem:[%s1 + $0xc80] sm:$0xff]
  %v438 = vld [vmem:[%s1 + $0xc88] sm:$0xff]
  %v439 = vld [vmem:[%s1 + $0xc90] sm:$0xff]
  %v440 = vld [vmem:[%s1 + $0xc98] sm:$0xff]
  %v441 = vld [vmem:[%s1 + $0xca0] sm:$0xff]
  %v442 = vld [vmem:[%s1 + $0xca8] sm:$0xff]
  %v443 = vld [vmem:[%s1 + $0xcb0] sm:$0xff]
  %v444 = vld [vmem:[%s1 + $0xcb8] sm:$0xff]
  %v445 = vld [vmem:[%s1 + $0xcc0] sm:$0xff]
  %v446 = vld [vmem:[%s1 + $0xcc8] sm:$0xff]
  %v447 = vld [vmem:[%s1 + $0xcd0] sm:$0xff]
  %v448 = vld [vmem:[%s1 + $0xcd8] sm:$0xff]
  %v449 = vld [vmem:[%s1 + $0xce0] sm:$0xff]
  %v450 = vld [vmem:[%s1 + $0xce8] sm:$0xff]
  %v451 = vld [vmem:[%s1 + $0xcf0] sm:$0xff]
  %v452 = vld [vmem:[%s1 + $0xcf8] sm:$0xff]
  %v453 = vld [vmem:[%s1 + $0xd00] sm:$0xff]
  %v454 = vld [vmem:[%s1 + $0xd08] sm:$0xff]
  %v455 = vld [vmem:[%s1 + $0xd10] sm:$0xff]
  %v456 = vld [vmem:[%s1 + $0xd18] sm:$0xff]
  %v457 = vld [vmem:[%s1 + $0xd20] sm:$0xff]
  %v458 = vld [vmem:[%s1 + $0xd28] sm:$0xff]
  %v459 = vld [vmem:[%s1 + $0xd30] sm:$0xff]
  %v460 = vld [vmem:[%s1 + $0xd38] sm:$0xff]
  %v461 = vld [vmem:[%s1 + $0xd40] sm:$0xff]
  %v462 = vld [vmem:[%s1 + $0xd48] sm:$0xff]
  %v463 = vld [vmem:[%s1 + $0xd50] sm:$0xff]
  %v464 = vld [vmem:[%s1 + $0xd58] sm:$0xff]
  %v465 = vld [vmem:[%s1 + $0xd60] sm:$0xff]
  %v466 = vld [vmem:[%s1 + $0xd68] sm:$0xff]
  %v467 = vld [vmem:[%s1 + $0xd70] sm:$0xff]
  %v468 = vld [vmem:[%s1 + $0xd78] sm:$0xff]
  %v469 = vld [vmem:[%s1 + $0xd80] sm:$0xff]
  %v470 = vld [vmem:[%s1 + $0xd88] sm:$0xff]
  %v471 = vld [vmem:[%s1 + $0xd90] sm:$0xff]
  %v472 = vld [vmem:[%s1 + $0xd98] sm:$0xff]
  %v473 = vld [vmem:[%s1 + $0xda0] sm:$0xff]
  %v474 = vld [vmem:[%s1 + $0xda8] sm:$0xff]
  %v475 = vld [vmem:[%s1 + $0xdb0] sm:$0xff]
  %v476 = vld [vmem:[%s1 + $0xdb8] sm:$0xff]
  %v477 = vld [vmem:[%s1 + $0xdc0] sm:$0xff]
  %v478 = vld [vmem:[%s1 + $0xdc8] sm:$0xff]
  %v479 = vld [vmem:[%s1 + $0xdd0] sm:$0xff]
  %v480 = vld [vmem:[%s1 + $0xdd8] sm:$0xff]
  %v481 = vld [vmem:[%s1 + $0xde0] sm:$0xff]
  %v482 = vld [vmem:[%s1 + $0xde8] sm:$0xff]
  %v483 = vld [vmem:[%s1 + $0xdf0] sm:$0xff]
  %v484 = vld [vmem:[%s1 + $0xdf8] sm:$0xff]
  %v485 = vld [vmem:[%s1 + $0xe00] sm:$0xff]
  %v486 = vld [vmem:[%s1 + $0xe08] sm:$0xff]
  %v487 = vld [vmem:[%s1 + $0xe10] sm:$0xff]
  %v488 = vld [vmem:[%s1 + $0xe18] sm:$0xff]
  %v489 = vld [vmem:[%s1 + $0xe20] sm:$0xff]
  %v490 = vld [vmem:[%s1 + $0xe28] sm:$0xff]
  %v491 = vld [vmem:[%s1 + $0xe30] sm:$0xff]
  %v492 = vld [vmem:[%s1 + $0xe38] sm:$0xff]
  %v493 = vld [vmem:[%s1 + $0xe40] sm:$0xff]
  %v494 = vld [vmem:[%s1 + $0xe48] sm:$0xff]
  %v495 = vld [vmem:[%s1 + $0xe50] sm:$0xff]
  %v496 = vld [vmem:[%s1 + $0xe58] sm:$0xff]
  %v497 = vld [vmem:[%s1 + $0xe60] sm:$0xff]
  %v498 = vld [vmem:[%s1 + $0xe68] sm:$0xff]
  %v499 = vld [vmem:[%s1 + $0xe70] sm:$0xff]
  %v500 = vld [vmem:[%s1 + $0xe78] sm:$0xff]
  %v501 = vld [vmem:[%s1 + $0xe80] sm:$0xff]
  %v502 = vld [vmem:[%s1 + $0xe88] sm:$0xff]
  %v503 = vld [vmem:[%s1 + $0xe90] sm:$0xff]
  %v504 = vld [vmem:[%s1 + $0xe98] sm:$0xff]
  %v505 = vld [vmem:[%s1 + $0xea0] sm:$0xff]
  %v506 = vld [vmem:[%s1 + $0xea8] sm:$0xff]
  %v507 = vld [vmem:[%s1 + $0xeb0] sm:$0xff]
  %v508 = vld [vmem:[%s1 + $0xeb8] sm:$0xff]
  %v509 = vld [vmem:[%s1 + $0xec0] sm:$0xff]
  %v510 = vld [vmem:[%s1 + $0xec8] sm:$0xff]
  %v511 = vld [vmem:[%s1 + $0xed0] sm:$0xff]
  %v512 = vld [vmem:[%s1 + $0xed8] sm:$0xff]
  %v513 = vld [vmem:[%s1 + $0xee0] sm:$0xff]
  %v514 = vld [vmem:[%s1 + $0xee8] sm:$0xff]
  %v515 = vld [vmem:[%s1 + $0xef0] sm:$0xff]
  %v516 = vld [vmem:[%s1 + $0xef8] sm:$0xff]
  %v517 = vld [vmem:[%s1 + $0xf00] sm:$0xff]
  %v518 = vld [vmem:[%s1 + $0xf08] sm:$0xff]
  %v519 = vld [vmem:[%s1 + $0xf10] sm:$0xff]
  %v520 = vld [vmem:[%s1 + $0xf18] sm:$0xff]
  %v521 = vld [vmem:[%s1 + $0xf20] sm:$0xff]
  %v522 = vld [vmem:[%s1 + $0xf28] sm:$0xff]
  %v523 = vld [vmem:[%s1 + $0xf30] sm:$0xff]
  %v524 = vld [vmem:[%s1 + $0xf38] sm:$0xff]
  %v525 = vld [vmem:[%s1 + $0xf40] sm:$0xff]
  %v526 = vld [vmem:[%s1 + $0xf48] sm:$0xff]
  %v527 = vld [vmem:[%s1 + $0xf50] sm:$0xff]
  %v528 = vld [vmem:[%s1 + $0xf58] sm:$0xff]
  %v529 = vld [vmem:[%s1 + $0xf60] sm:$0xff]
  %v530 = vld [vmem:[%s1 + $0xf68] sm:$0xff]
  %v531 = vld [vmem:[%s1 + $0xf70] sm:$0xff]
  %v532 = vld [vmem:[%s1 + $0xf78] sm:$0xff]
  %v533 = vld [vmem:[%s1 + $0xf80] sm:$0xff]
  %v534 = vld [vmem:[%s1 + $0xf88] sm:$0xff]
  %v535 = vld [vmem:[%s1 + $0xf90] sm:$0xff]
  %v536 = vld [vmem:[%s1 + $0xf98] sm:$0xff]
  %v537 = vld [vmem:[%s1 + $0xfa0] sm:$0xff]
  %v538 = vld [vmem:[%s1 + $0xfa8] sm:$0xff]
  %v539 = vld [vmem:[%s1 + $0xfb0] sm:$0xff]
  %v540 = vld [vmem:[%s1 + $0xfb8] sm:$0xff]
  %v541 = vld [vmem:[%s1 + $0xfc0] sm:$0xff]
  %v542 = vld [vmem:[%s1 + $0xfc8] sm:$0xff]
  %v543 = vld [vmem:[%s1 + $0xfd0] sm:$0xff]
  %v544 = vld [vmem:[%s1 + $0xfd8] sm:$0xff]
  %v545 = vld [vmem:[%s1 + $0xfe0] sm:$0xff]
  %v546 = vld [vmem:[%s1 + $0xfe8] sm:$0xff]
  %v547 = vld [vmem:[%s1 + $0xff0] sm:$0xff]
  %v548 = vld [vmem:[%s1 + $0xff8] sm:$0xff]
  %v549 = vld [vmem:[%s2] sm:$0x3]
  %v551 = vlaneseq
  %v552 = vshrl.u32 %v551, 7
  %v553 = vsub.s32 0, %v552
  %v554 = vrot.slane %v549, %v553
  %v555 = vlaneseq
  %v556 = vshrl.u32 %v555, 7
  %v557 = vsub.s32 1, %v556
  %v558 = vrot.slane %v549, %v557
  %v577 = vunpack.c.l.b16 %v21
  %v578 = vunpack.c.h.b16 %v21
  %v579 = vunpack.c.l.b16 %v22
  %v580 = vunpack.c.h.b16 %v22
  %v581 = vunpack.c.l.b16 %v23
  %v582 = vunpack.c.h.b16 %v23
  %v583 = vunpack.c.l.b16 %v24
  %v584 = vunpack.c.h.b16 %v24
  %v585 = vunpack.c.l.b16 %v25
  %v586 = vunpack.c.h.b16 %v25
  %v587 = vunpack.c.l.b16 %v26
  %v588 = vunpack.c.h.b16 %v26
  %v589 = vunpack.c.l.b16 %v27
  %v590 = vunpack.c.h.b16 %v27
  %v591 = vunpack.c.l.b16 %v28
  %v592 = vunpack.c.h.b16 %v28
  %v593 = vunpack.c.l.b16 %v29
  %v594 = vunpack.c.h.b16 %v29
  %v595 = vunpack.c.l.b16 %v30
  %v596 = vunpack.c.h.b16 %v30
  %v597 = vunpack.c.l.b16 %v31
  %v598 = vunpack.c.h.b16 %v31
  %v599 = vunpack.c.l.b16 %v32
  %v600 = vunpack.c.h.b16 %v32
  %v601 = vunpack.c.l.b16 %v33
  %v602 = vunpack.c.h.b16 %v33
  %v603 = vunpack.c.l.b16 %v34
  %v604 = vunpack.c.h.b16 %v34
  %v605 = vunpack.c.l.b16 %v35
  %v606 = vunpack.c.h.b16 %v35
  %v607 = vunpack.c.l.b16 %v36
  %v608 = vunpack.c.h.b16 %v36
  %v609 = vpack.c.b16 %v577, %v577
  %v610 = vpack.c.b16 %v578, %v578
  %v611 = vpack.c.b16 %v579, %v579
  %v612 = vpack.c.b16 %v580, %v580
  %v613 = vpack.c.b16 %v581, %v581
  %v614 = vpack.c.b16 %v582, %v582
  %v615 = vpack.c.b16 %v583, %v583
  %v616 = vpack.c.b16 %v584, %v584
  %v617 = vpack.c.b16 %v585, %v585
  %v618 = vpack.c.b16 %v586, %v586
  %v619 = vpack.c.b16 %v587, %v587
  %v620 = vpack.c.b16 %v588, %v588
  %v621 = vpack.c.b16 %v589, %v589
  %v622 = vpack.c.b16 %v590, %v590
  %v623 = vpack.c.b16 %v591, %v591
  %v624 = vpack.c.b16 %v592, %v592
  %v625 = vpack.c.b16 %v593, %v593
  %v626 = vpack.c.b16 %v594, %v594
  %v627 = vpack.c.b16 %v595, %v595
  %v628 = vpack.c.b16 %v596, %v596
  %v629 = vpack.c.b16 %v597, %v597
  %v630 = vpack.c.b16 %v598, %v598
  %v631 = vpack.c.b16 %v599, %v599
  %v632 = vpack.c.b16 %v600, %v600
  %v633 = vpack.c.b16 %v601, %v601
  %v634 = vpack.c.b16 %v602, %v602
  %v635 = vpack.c.b16 %v603, %v603
  %v636 = vpack.c.b16 %v604, %v604
  %v637 = vpack.c.b16 %v605, %v605
  %v638 = vpack.c.b16 %v606, %v606
  %v639 = vpack.c.b16 %v607, %v607
  %v640 = vpack.c.b16 %v608, %v608
  %v1185 = vunpack.c.l.b16 %v37
  %v1186 = vunpack.c.h.b16 %v37
  %v1187 = vunpack.c.l.b16 %v38
  %v1188 = vunpack.c.h.b16 %v38
  %v1189 = vunpack.c.l.b16 %v39
  %v1190 = vunpack.c.h.b16 %v39
  %v1191 = vunpack.c.l.b16 %v40
  %v1192 = vunpack.c.h.b16 %v40
  %v1193 = vunpack.c.l.b16 %v41
  %v1194 = vunpack.c.h.b16 %v41
  %v1195 = vunpack.c.l.b16 %v42
  %v1196 = vunpack.c.h.b16 %v42
  %v1197 = vunpack.c.l.b16 %v43
  %v1198 = vunpack.c.h.b16 %v43
  %v1199 = vunpack.c.l.b16 %v44
  %v1200 = vunpack.c.h.b16 %v44
  %v1201 = vunpack.c.l.b16 %v45
  %v1202 = vunpack.c.h.b16 %v45
  %v1203 = vunpack.c.l.b16 %v46
  %v1204 = vunpack.c.h.b16 %v46
  %v1205 = vunpack.c.l.b16 %v47
  %v1206 = vunpack.c.h.b16 %v47
  %v1207 = vunpack.c.l.b16 %v48
  %v1208 = vunpack.c.h.b16 %v48
  %v1209 = vunpack.c.l.b16 %v49
  %v1210 = vunpack.c.h.b16 %v49
  %v1211 = vunpack.c.l.b16 %v50
  %v1212 = vunpack.c.h.b16 %v50
  %v1213 = vunpack.c.l.b16 %v51
  %v1214 = vunpack.c.h.b16 %v51
  %v1215 = vunpack.c.l.b16 %v52
  %v1216 = vunpack.c.h.b16 %v52
  %v1217 = vunpack.c.l.b16 %v53
  %v1218 = vunpack.c.h.b16 %v53
  %v1219 = vunpack.c.l.b16 %v54
  %v1220 = vunpack.c.h.b16 %v54
  %v1221 = vunpack.c.l.b16 %v55
  %v1222 = vunpack.c.h.b16 %v55
  %v1223 = vunpack.c.l.b16 %v56
  %v1224 = vunpack.c.h.b16 %v56
  %v1225 = vunpack.c.l.b16 %v57
  %v1226 = vunpack.c.h.b16 %v57
  %v1227 = vunpack.c.l.b16 %v58
  %v1228 = vunpack.c.h.b16 %v58
  %v1229 = vunpack.c.l.b16 %v59
  %v1230 = vunpack.c.h.b16 %v59
  %v1231 = vunpack.c.l.b16 %v60
  %v1232 = vunpack.c.h.b16 %v60
  %v1233 = vunpack.c.l.b16 %v61
  %v1234 = vunpack.c.h.b16 %v61
  %v1235 = vunpack.c.l.b16 %v62
  %v1236 = vunpack.c.h.b16 %v62
  %v1237 = vunpack.c.l.b16 %v63
  %v1238 = vunpack.c.h.b16 %v63
  %v1239 = vunpack.c.l.b16 %v64
  %v1240 = vunpack.c.h.b16 %v64
  %v1241 = vunpack.c.l.b16 %v65
  %v1242 = vunpack.c.h.b16 %v65
  %v1243 = vunpack.c.l.b16 %v66
  %v1244 = vunpack.c.h.b16 %v66
  %v1245 = vunpack.c.l.b16 %v67
  %v1246 = vunpack.c.h.b16 %v67
  %v1247 = vunpack.c.l.b16 %v68
  %v1248 = vunpack.c.h.b16 %v68
  %v1249 = vunpack.c.l.b16 %v69
  %v1250 = vunpack.c.h.b16 %v69
  %v1251 = vunpack.c.l.b16 %v70
  %v1252 = vunpack.c.h.b16 %v70
  %v1253 = vunpack.c.l.b16 %v71
  %v1254 = vunpack.c.h.b16 %v71
  %v1255 = vunpack.c.l.b16 %v72
  %v1256 = vunpack.c.h.b16 %v72
  %v1257 = vunpack.c.l.b16 %v73
  %v1258 = vunpack.c.h.b16 %v73
  %v1259 = vunpack.c.l.b16 %v74
  %v1260 = vunpack.c.h.b16 %v74
  %v1261 = vunpack.c.l.b16 %v75
  %v1262 = vunpack.c.h.b16 %v75
  %v1263 = vunpack.c.l.b16 %v76
  %v1264 = vunpack.c.h.b16 %v76
  %v1265 = vunpack.c.l.b16 %v77
  %v1266 = vunpack.c.h.b16 %v77
  %v1267 = vunpack.c.l.b16 %v78
  %v1268 = vunpack.c.h.b16 %v78
  %v1269 = vunpack.c.l.b16 %v79
  %v1270 = vunpack.c.h.b16 %v79
  %v1271 = vunpack.c.l.b16 %v80
  %v1272 = vunpack.c.h.b16 %v80
  %v1273 = vunpack.c.l.b16 %v81
  %v1274 = vunpack.c.h.b16 %v81
  %v1275 = vunpack.c.l.b16 %v82
  %v1276 = vunpack.c.h.b16 %v82
  %v1277 = vunpack.c.l.b16 %v83
  %v1278 = vunpack.c.h.b16 %v83
  %v1279 = vunpack.c.l.b16 %v84
  %v1280 = vunpack.c.h.b16 %v84
  %v1281 = vunpack.c.l.b16 %v85
  %v1282 = vunpack.c.h.b16 %v85
  %v1283 = vunpack.c.l.b16 %v86
  %v1284 = vunpack.c.h.b16 %v86
  %v1285 = vunpack.c.l.b16 %v87
  %v1286 = vunpack.c.h.b16 %v87
  %v1287 = vunpack.c.l.b16 %v88
  %v1288 = vunpack.c.h.b16 %v88
  %v1289 = vunpack.c.l.b16 %v89
  %v1290 = vunpack.c.h.b16 %v89
  %v1291 = vunpack.c.l.b16 %v90
  %v1292 = vunpack.c.h.b16 %v90
  %v1293 = vunpack.c.l.b16 %v91
  %v1294 = vunpack.c.h.b16 %v91
  %v1295 = vunpack.c.l.b16 %v92
  %v1296 = vunpack.c.h.b16 %v92
  %v1297 = vunpack.c.l.b16 %v93
  %v1298 = vunpack.c.h.b16 %v93
  %v1299 = vunpack.c.l.b16 %v94
  %v1300 = vunpack.c.h.b16 %v94
  %v1301 = vunpack.c.l.b16 %v95
  %v1302 = vunpack.c.h.b16 %v95
  %v1303 = vunpack.c.l.b16 %v96
  %v1304 = vunpack.c.h.b16 %v96
  %v1305 = vunpack.c.l.b16 %v97
  %v1306 = vunpack.c.h.b16 %v97
  %v1307 = vunpack.c.l.b16 %v98
  %v1308 = vunpack.c.h.b16 %v98
  %v1309 = vunpack.c.l.b16 %v99
  %v1310 = vunpack.c.h.b16 %v99
  %v1311 = vunpack.c.l.b16 %v100
  %v1312 = vunpack.c.h.b16 %v100
  %v1313 = vunpack.c.l.b16 %v101
  %v1314 = vunpack.c.h.b16 %v101
  %v1315 = vunpack.c.l.b16 %v102
  %v1316 = vunpack.c.h.b16 %v102
  %v1317 = vunpack.c.l.b16 %v103
  %v1318 = vunpack.c.h.b16 %v103
  %v1319 = vunpack.c.l.b16 %v104
  %v1320 = vunpack.c.h.b16 %v104
  %v1321 = vunpack.c.l.b16 %v105
  %v1322 = vunpack.c.h.b16 %v105
  %v1323 = vunpack.c.l.b16 %v106
  %v1324 = vunpack.c.h.b16 %v106
  %v1325 = vunpack.c.l.b16 %v107
  %v1326 = vunpack.c.h.b16 %v107
  %v1327 = vunpack.c.l.b16 %v108
  %v1328 = vunpack.c.h.b16 %v108
  %v1329 = vunpack.c.l.b16 %v109
  %v1330 = vunpack.c.h.b16 %v109
  %v1331 = vunpack.c.l.b16 %v110
  %v1332 = vunpack.c.h.b16 %v110
  %v1333 = vunpack.c.l.b16 %v111
  %v1334 = vunpack.c.h.b16 %v111
  %v1335 = vunpack.c.l.b16 %v112
  %v1336 = vunpack.c.h.b16 %v112
  %v1337 = vunpack.c.l.b16 %v113
  %v1338 = vunpack.c.h.b16 %v113
  %v1339 = vunpack.c.l.b16 %v114
  %v1340 = vunpack.c.h.b16 %v114
  %v1341 = vunpack.c.l.b16 %v115
  %v1342 = vunpack.c.h.b16 %v115
  %v1343 = vunpack.c.l.b16 %v116
  %v1344 = vunpack.c.h.b16 %v116
  %v1345 = vunpack.c.l.b16 %v117
  %v1346 = vunpack.c.h.b16 %v117
  %v1347 = vunpack.c.l.b16 %v118
  %v1348 = vunpack.c.h.b16 %v118
  %v1349 = vunpack.c.l.b16 %v119
  %v1350 = vunpack.c.h.b16 %v119
  %v1351 = vunpack.c.l.b16 %v120
  %v1352 = vunpack.c.h.b16 %v120
  %v1353 = vunpack.c.l.b16 %v121
  %v1354 = vunpack.c.h.b16 %v121
  %v1355 = vunpack.c.l.b16 %v122
  %v1356 = vunpack.c.h.b16 %v122
  %v1357 = vunpack.c.l.b16 %v123
  %v1358 = vunpack.c.h.b16 %v123
  %v1359 = vunpack.c.l.b16 %v124
  %v1360 = vunpack.c.h.b16 %v124
  %v1361 = vunpack.c.l.b16 %v125
  %v1362 = vunpack.c.h.b16 %v125
  %v1363 = vunpack.c.l.b16 %v126
  %v1364 = vunpack.c.h.b16 %v126
  %v1365 = vunpack.c.l.b16 %v127
  %v1366 = vunpack.c.h.b16 %v127
  %v1367 = vunpack.c.l.b16 %v128
  %v1368 = vunpack.c.h.b16 %v128
  %v1369 = vunpack.c.l.b16 %v129
  %v1370 = vunpack.c.h.b16 %v129
  %v1371 = vunpack.c.l.b16 %v130
  %v1372 = vunpack.c.h.b16 %v130
  %v1373 = vunpack.c.l.b16 %v131
  %v1374 = vunpack.c.h.b16 %v131
  %v1375 = vunpack.c.l.b16 %v132
  %v1376 = vunpack.c.h.b16 %v132
  %v1377 = vunpack.c.l.b16 %v133
  %v1378 = vunpack.c.h.b16 %v133
  %v1379 = vunpack.c.l.b16 %v134
  %v1380 = vunpack.c.h.b16 %v134
  %v1381 = vunpack.c.l.b16 %v135
  %v1382 = vunpack.c.h.b16 %v135
  %v1383 = vunpack.c.l.b16 %v136
  %v1384 = vunpack.c.h.b16 %v136
  %v1385 = vunpack.c.l.b16 %v137
  %v1386 = vunpack.c.h.b16 %v137
  %v1387 = vunpack.c.l.b16 %v138
  %v1388 = vunpack.c.h.b16 %v138
  %v1389 = vunpack.c.l.b16 %v139
  %v1390 = vunpack.c.h.b16 %v139
  %v1391 = vunpack.c.l.b16 %v140
  %v1392 = vunpack.c.h.b16 %v140
  %v1393 = vunpack.c.l.b16 %v141
  %v1394 = vunpack.c.h.b16 %v141
  %v1395 = vunpack.c.l.b16 %v142
  %v1396 = vunpack.c.h.b16 %v142
  %v1397 = vunpack.c.l.b16 %v143
  %v1398 = vunpack.c.h.b16 %v143
  %v1399 = vunpack.c.l.b16 %v144
  %v1400 = vunpack.c.h.b16 %v144
  %v1401 = vunpack.c.l.b16 %v145
  %v1402 = vunpack.c.h.b16 %v145
  %v1403 = vunpack.c.l.b16 %v146
  %v1404 = vunpack.c.h.b16 %v146
  %v1405 = vunpack.c.l.b16 %v147
  %v1406 = vunpack.c.h.b16 %v147
  %v1407 = vunpack.c.l.b16 %v148
  %v1408 = vunpack.c.h.b16 %v148
  %v1409 = vunpack.c.l.b16 %v149
  %v1410 = vunpack.c.h.b16 %v149
  %v1411 = vunpack.c.l.b16 %v150
  %v1412 = vunpack.c.h.b16 %v150
  %v1413 = vunpack.c.l.b16 %v151
  %v1414 = vunpack.c.h.b16 %v151
  %v1415 = vunpack.c.l.b16 %v152
  %v1416 = vunpack.c.h.b16 %v152
  %v1417 = vunpack.c.l.b16 %v153
  %v1418 = vunpack.c.h.b16 %v153
  %v1419 = vunpack.c.l.b16 %v154
  %v1420 = vunpack.c.h.b16 %v154
  %v1421 = vunpack.c.l.b16 %v155
  %v1422 = vunpack.c.h.b16 %v155
  %v1423 = vunpack.c.l.b16 %v156
  %v1424 = vunpack.c.h.b16 %v156
  %v1425 = vunpack.c.l.b16 %v157
  %v1426 = vunpack.c.h.b16 %v157
  %v1427 = vunpack.c.l.b16 %v158
  %v1428 = vunpack.c.h.b16 %v158
  %v1429 = vunpack.c.l.b16 %v159
  %v1430 = vunpack.c.h.b16 %v159
  %v1431 = vunpack.c.l.b16 %v160
  %v1432 = vunpack.c.h.b16 %v160
  %v1433 = vunpack.c.l.b16 %v161
  %v1434 = vunpack.c.h.b16 %v161
  %v1435 = vunpack.c.l.b16 %v162
  %v1436 = vunpack.c.h.b16 %v162
  %v1437 = vunpack.c.l.b16 %v163
  %v1438 = vunpack.c.h.b16 %v163
  %v1439 = vunpack.c.l.b16 %v164
  %v1440 = vunpack.c.h.b16 %v164
  %v1441 = vunpack.c.l.b16 %v165
  %v1442 = vunpack.c.h.b16 %v165
  %v1443 = vunpack.c.l.b16 %v166
  %v1444 = vunpack.c.h.b16 %v166
  %v1445 = vunpack.c.l.b16 %v167
  %v1446 = vunpack.c.h.b16 %v167
  %v1447 = vunpack.c.l.b16 %v168
  %v1448 = vunpack.c.h.b16 %v168
  %v1449 = vunpack.c.l.b16 %v169
  %v1450 = vunpack.c.h.b16 %v169
  %v1451 = vunpack.c.l.b16 %v170
  %v1452 = vunpack.c.h.b16 %v170
  %v1453 = vunpack.c.l.b16 %v171
  %v1454 = vunpack.c.h.b16 %v171
  %v1455 = vunpack.c.l.b16 %v172
  %v1456 = vunpack.c.h.b16 %v172
  %v1457 = vunpack.c.l.b16 %v173
  %v1458 = vunpack.c.h.b16 %v173
  %v1459 = vunpack.c.l.b16 %v174
  %v1460 = vunpack.c.h.b16 %v174
  %v1461 = vunpack.c.l.b16 %v175
  %v1462 = vunpack.c.h.b16 %v175
  %v1463 = vunpack.c.l.b16 %v176
  %v1464 = vunpack.c.h.b16 %v176
  %v1465 = vunpack.c.l.b16 %v177
  %v1466 = vunpack.c.h.b16 %v177
  %v1467 = vunpack.c.l.b16 %v178
  %v1468 = vunpack.c.h.b16 %v178
  %v1469 = vunpack.c.l.b16 %v179
  %v1470 = vunpack.c.h.b16 %v179
  %v1471 = vunpack.c.l.b16 %v180
  %v1472 = vunpack.c.h.b16 %v180
  %v1473 = vunpack.c.l.b16 %v181
  %v1474 = vunpack.c.h.b16 %v181
  %v1475 = vunpack.c.l.b16 %v182
  %v1476 = vunpack.c.h.b16 %v182
  %v1477 = vunpack.c.l.b16 %v183
  %v1478 = vunpack.c.h.b16 %v183
  %v1479 = vunpack.c.l.b16 %v184
  %v1480 = vunpack.c.h.b16 %v184
  %v1481 = vunpack.c.l.b16 %v185
  %v1482 = vunpack.c.h.b16 %v185
  %v1483 = vunpack.c.l.b16 %v186
  %v1484 = vunpack.c.h.b16 %v186
  %v1485 = vunpack.c.l.b16 %v187
  %v1486 = vunpack.c.h.b16 %v187
  %v1487 = vunpack.c.l.b16 %v188
  %v1488 = vunpack.c.h.b16 %v188
  %v1489 = vunpack.c.l.b16 %v189
  %v1490 = vunpack.c.h.b16 %v189
  %v1491 = vunpack.c.l.b16 %v190
  %v1492 = vunpack.c.h.b16 %v190
  %v1493 = vunpack.c.l.b16 %v191
  %v1494 = vunpack.c.h.b16 %v191
  %v1495 = vunpack.c.l.b16 %v192
  %v1496 = vunpack.c.h.b16 %v192
  %v1497 = vunpack.c.l.b16 %v193
  %v1498 = vunpack.c.h.b16 %v193
  %v1499 = vunpack.c.l.b16 %v194
  %v1500 = vunpack.c.h.b16 %v194
  %v1501 = vunpack.c.l.b16 %v195
  %v1502 = vunpack.c.h.b16 %v195
  %v1503 = vunpack.c.l.b16 %v196
  %v1504 = vunpack.c.h.b16 %v196
  %v1505 = vunpack.c.l.b16 %v197
  %v1506 = vunpack.c.h.b16 %v197
  %v1507 = vunpack.c.l.b16 %v198
  %v1508 = vunpack.c.h.b16 %v198
  %v1509 = vunpack.c.l.b16 %v199
  %v1510 = vunpack.c.h.b16 %v199
  %v1511 = vunpack.c.l.b16 %v200
  %v1512 = vunpack.c.h.b16 %v200
  %v1513 = vunpack.c.l.b16 %v201
  %v1514 = vunpack.c.h.b16 %v201
  %v1515 = vunpack.c.l.b16 %v202
  %v1516 = vunpack.c.h.b16 %v202
  %v1517 = vunpack.c.l.b16 %v203
  %v1518 = vunpack.c.h.b16 %v203
  %v1519 = vunpack.c.l.b16 %v204
  %v1520 = vunpack.c.h.b16 %v204
  %v1521 = vunpack.c.l.b16 %v205
  %v1522 = vunpack.c.h.b16 %v205
  %v1523 = vunpack.c.l.b16 %v206
  %v1524 = vunpack.c.h.b16 %v206
  %v1525 = vunpack.c.l.b16 %v207
  %v1526 = vunpack.c.h.b16 %v207
  %v1527 = vunpack.c.l.b16 %v208
  %v1528 = vunpack.c.h.b16 %v208
  %v1529 = vunpack.c.l.b16 %v209
  %v1530 = vunpack.c.h.b16 %v209
  %v1531 = vunpack.c.l.b16 %v210
  %v1532 = vunpack.c.h.b16 %v210
  %v1533 = vunpack.c.l.b16 %v211
  %v1534 = vunpack.c.h.b16 %v211
  %v1535 = vunpack.c.l.b16 %v212
  %v1536 = vunpack.c.h.b16 %v212
  %v1537 = vunpack.c.l.b16 %v213
  %v1538 = vunpack.c.h.b16 %v213
  %v1539 = vunpack.c.l.b16 %v214
  %v1540 = vunpack.c.h.b16 %v214
  %v1541 = vunpack.c.l.b16 %v215
  %v1542 = vunpack.c.h.b16 %v215
  %v1543 = vunpack.c.l.b16 %v216
  %v1544 = vunpack.c.h.b16 %v216
  %v1545 = vunpack.c.l.b16 %v217
  %v1546 = vunpack.c.h.b16 %v217
  %v1547 = vunpack.c.l.b16 %v218
  %v1548 = vunpack.c.h.b16 %v218
  %v1549 = vunpack.c.l.b16 %v219
  %v1550 = vunpack.c.h.b16 %v219
  %v1551 = vunpack.c.l.b16 %v220
  %v1552 = vunpack.c.h.b16 %v220
  %v1553 = vunpack.c.l.b16 %v221
  %v1554 = vunpack.c.h.b16 %v221
  %v1555 = vunpack.c.l.b16 %v222
  %v1556 = vunpack.c.h.b16 %v222
  %v1557 = vunpack.c.l.b16 %v223
  %v1558 = vunpack.c.h.b16 %v223
  %v1559 = vunpack.c.l.b16 %v224
  %v1560 = vunpack.c.h.b16 %v224
  %v1561 = vunpack.c.l.b16 %v225
  %v1562 = vunpack.c.h.b16 %v225
  %v1563 = vunpack.c.l.b16 %v226
  %v1564 = vunpack.c.h.b16 %v226
  %v1565 = vunpack.c.l.b16 %v227
  %v1566 = vunpack.c.h.b16 %v227
  %v1567 = vunpack.c.l.b16 %v228
  %v1568 = vunpack.c.h.b16 %v228
  %v1569 = vunpack.c.l.b16 %v229
  %v1570 = vunpack.c.h.b16 %v229
  %v1571 = vunpack.c.l.b16 %v230
  %v1572 = vunpack.c.h.b16 %v230
  %v1573 = vunpack.c.l.b16 %v231
  %v1574 = vunpack.c.h.b16 %v231
  %v1575 = vunpack.c.l.b16 %v232
  %v1576 = vunpack.c.h.b16 %v232
  %v1577 = vunpack.c.l.b16 %v233
  %v1578 = vunpack.c.h.b16 %v233
  %v1579 = vunpack.c.l.b16 %v234
  %v1580 = vunpack.c.h.b16 %v234
  %v1581 = vunpack.c.l.b16 %v235
  %v1582 = vunpack.c.h.b16 %v235
  %v1583 = vunpack.c.l.b16 %v236
  %v1584 = vunpack.c.h.b16 %v236
  %v1585 = vunpack.c.l.b16 %v237
  %v1586 = vunpack.c.h.b16 %v237
  %v1587 = vunpack.c.l.b16 %v238
  %v1588 = vunpack.c.h.b16 %v238
  %v1589 = vunpack.c.l.b16 %v239
  %v1590 = vunpack.c.h.b16 %v239
  %v1591 = vunpack.c.l.b16 %v240
  %v1592 = vunpack.c.h.b16 %v240
  %v1593 = vunpack.c.l.b16 %v241
  %v1594 = vunpack.c.h.b16 %v241
  %v1595 = vunpack.c.l.b16 %v242
  %v1596 = vunpack.c.h.b16 %v242
  %v1597 = vunpack.c.l.b16 %v243
  %v1598 = vunpack.c.h.b16 %v243
  %v1599 = vunpack.c.l.b16 %v244
  %v1600 = vunpack.c.h.b16 %v244
  %v1601 = vunpack.c.l.b16 %v245
  %v1602 = vunpack.c.h.b16 %v245
  %v1603 = vunpack.c.l.b16 %v246
  %v1604 = vunpack.c.h.b16 %v246
  %v1605 = vunpack.c.l.b16 %v247
  %v1606 = vunpack.c.h.b16 %v247
  %v1607 = vunpack.c.l.b16 %v248
  %v1608 = vunpack.c.h.b16 %v248
  %v1609 = vunpack.c.l.b16 %v249
  %v1610 = vunpack.c.h.b16 %v249
  %v1611 = vunpack.c.l.b16 %v250
  %v1612 = vunpack.c.h.b16 %v250
  %v1613 = vunpack.c.l.b16 %v251
  %v1614 = vunpack.c.h.b16 %v251
  %v1615 = vunpack.c.l.b16 %v252
  %v1616 = vunpack.c.h.b16 %v252
  %v1617 = vunpack.c.l.b16 %v253
  %v1618 = vunpack.c.h.b16 %v253
  %v1619 = vunpack.c.l.b16 %v254
  %v1620 = vunpack.c.h.b16 %v254
  %v1621 = vunpack.c.l.b16 %v255
  %v1622 = vunpack.c.h.b16 %v255
  %v1623 = vunpack.c.l.b16 %v256
  %v1624 = vunpack.c.h.b16 %v256
  %v1625 = vunpack.c.l.b16 %v257
  %v1626 = vunpack.c.h.b16 %v257
  %v1627 = vunpack.c.l.b16 %v258
  %v1628 = vunpack.c.h.b16 %v258
  %v1629 = vunpack.c.l.b16 %v259
  %v1630 = vunpack.c.h.b16 %v259
  %v1631 = vunpack.c.l.b16 %v260
  %v1632 = vunpack.c.h.b16 %v260
  %v1633 = vunpack.c.l.b16 %v261
  %v1634 = vunpack.c.h.b16 %v261
  %v1635 = vunpack.c.l.b16 %v262
  %v1636 = vunpack.c.h.b16 %v262
  %v1637 = vunpack.c.l.b16 %v263
  %v1638 = vunpack.c.h.b16 %v263
  %v1639 = vunpack.c.l.b16 %v264
  %v1640 = vunpack.c.h.b16 %v264
  %v1641 = vunpack.c.l.b16 %v265
  %v1642 = vunpack.c.h.b16 %v265
  %v1643 = vunpack.c.l.b16 %v266
  %v1644 = vunpack.c.h.b16 %v266
  %v1645 = vunpack.c.l.b16 %v267
  %v1646 = vunpack.c.h.b16 %v267
  %v1647 = vunpack.c.l.b16 %v268
  %v1648 = vunpack.c.h.b16 %v268
  %v1649 = vunpack.c.l.b16 %v269
  %v1650 = vunpack.c.h.b16 %v269
  %v1651 = vunpack.c.l.b16 %v270
  %v1652 = vunpack.c.h.b16 %v270
  %v1653 = vunpack.c.l.b16 %v271
  %v1654 = vunpack.c.h.b16 %v271
  %v1655 = vunpack.c.l.b16 %v272
  %v1656 = vunpack.c.h.b16 %v272
  %v1657 = vunpack.c.l.b16 %v273
  %v1658 = vunpack.c.h.b16 %v273
  %v1659 = vunpack.c.l.b16 %v274
  %v1660 = vunpack.c.h.b16 %v274
  %v1661 = vunpack.c.l.b16 %v275
  %v1662 = vunpack.c.h.b16 %v275
  %v1663 = vunpack.c.l.b16 %v276
  %v1664 = vunpack.c.h.b16 %v276
  %v1665 = vunpack.c.l.b16 %v277
  %v1666 = vunpack.c.h.b16 %v277
  %v1667 = vunpack.c.l.b16 %v278
  %v1668 = vunpack.c.h.b16 %v278
  %v1669 = vunpack.c.l.b16 %v279
  %v1670 = vunpack.c.h.b16 %v279
  %v1671 = vunpack.c.l.b16 %v280
  %v1672 = vunpack.c.h.b16 %v280
  %v1673 = vunpack.c.l.b16 %v281
  %v1674 = vunpack.c.h.b16 %v281
  %v1675 = vunpack.c.l.b16 %v282
  %v1676 = vunpack.c.h.b16 %v282
  %v1677 = vunpack.c.l.b16 %v283
  %v1678 = vunpack.c.h.b16 %v283
  %v1679 = vunpack.c.l.b16 %v284
  %v1680 = vunpack.c.h.b16 %v284
  %v1681 = vunpack.c.l.b16 %v285
  %v1682 = vunpack.c.h.b16 %v285
  %v1683 = vunpack.c.l.b16 %v286
  %v1684 = vunpack.c.h.b16 %v286
  %v1685 = vunpack.c.l.b16 %v287
  %v1686 = vunpack.c.h.b16 %v287
  %v1687 = vunpack.c.l.b16 %v288
  %v1688 = vunpack.c.h.b16 %v288
  %v1689 = vunpack.c.l.b16 %v289
  %v1690 = vunpack.c.h.b16 %v289
  %v1691 = vunpack.c.l.b16 %v290
  %v1692 = vunpack.c.h.b16 %v290
  %v1693 = vunpack.c.l.b16 %v291
  %v1694 = vunpack.c.h.b16 %v291
  %v1695 = vunpack.c.l.b16 %v292
  %v1696 = vunpack.c.h.b16 %v292
  %v1697 = vunpack.c.l.b16 %v293
  %v1698 = vunpack.c.h.b16 %v293
  %v1699 = vunpack.c.l.b16 %v294
  %v1700 = vunpack.c.h.b16 %v294
  %v1701 = vunpack.c.l.b16 %v295
  %v1702 = vunpack.c.h.b16 %v295
  %v1703 = vunpack.c.l.b16 %v296
  %v1704 = vunpack.c.h.b16 %v296
  %v1705 = vunpack.c.l.b16 %v297
  %v1706 = vunpack.c.h.b16 %v297
  %v1707 = vunpack.c.l.b16 %v298
  %v1708 = vunpack.c.h.b16 %v298
  %v1709 = vunpack.c.l.b16 %v299
  %v1710 = vunpack.c.h.b16 %v299
  %v1711 = vunpack.c.l.b16 %v300
  %v1712 = vunpack.c.h.b16 %v300
  %v1713 = vunpack.c.l.b16 %v301
  %v1714 = vunpack.c.h.b16 %v301
  %v1715 = vunpack.c.l.b16 %v302
  %v1716 = vunpack.c.h.b16 %v302
  %v1717 = vunpack.c.l.b16 %v303
  %v1718 = vunpack.c.h.b16 %v303
  %v1719 = vunpack.c.l.b16 %v304
  %v1720 = vunpack.c.h.b16 %v304
  %v1721 = vunpack.c.l.b16 %v305
  %v1722 = vunpack.c.h.b16 %v305
  %v1723 = vunpack.c.l.b16 %v306
  %v1724 = vunpack.c.h.b16 %v306
  %v1725 = vunpack.c.l.b16 %v307
  %v1726 = vunpack.c.h.b16 %v307
  %v1727 = vunpack.c.l.b16 %v308
  %v1728 = vunpack.c.h.b16 %v308
  %v1729 = vunpack.c.l.b16 %v309
  %v1730 = vunpack.c.h.b16 %v309
  %v1731 = vunpack.c.l.b16 %v310
  %v1732 = vunpack.c.h.b16 %v310
  %v1733 = vunpack.c.l.b16 %v311
  %v1734 = vunpack.c.h.b16 %v311
  %v1735 = vunpack.c.l.b16 %v312
  %v1736 = vunpack.c.h.b16 %v312
  %v1737 = vunpack.c.l.b16 %v313
  %v1738 = vunpack.c.h.b16 %v313
  %v1739 = vunpack.c.l.b16 %v314
  %v1740 = vunpack.c.h.b16 %v314
  %v1741 = vunpack.c.l.b16 %v315
  %v1742 = vunpack.c.h.b16 %v315
  %v1743 = vunpack.c.l.b16 %v316
  %v1744 = vunpack.c.h.b16 %v316
  %v1745 = vunpack.c.l.b16 %v317
  %v1746 = vunpack.c.h.b16 %v317
  %v1747 = vunpack.c.l.b16 %v318
  %v1748 = vunpack.c.h.b16 %v318
  %v1749 = vunpack.c.l.b16 %v319
  %v1750 = vunpack.c.h.b16 %v319
  %v1751 = vunpack.c.l.b16 %v320
  %v1752 = vunpack.c.h.b16 %v320
  %v1753 = vunpack.c.l.b16 %v321
  %v1754 = vunpack.c.h.b16 %v321
  %v1755 = vunpack.c.l.b16 %v322
  %v1756 = vunpack.c.h.b16 %v322
  %v1757 = vunpack.c.l.b16 %v323
  %v1758 = vunpack.c.h.b16 %v323
  %v1759 = vunpack.c.l.b16 %v324
  %v1760 = vunpack.c.h.b16 %v324
  %v1761 = vunpack.c.l.b16 %v325
  %v1762 = vunpack.c.h.b16 %v325
  %v1763 = vunpack.c.l.b16 %v326
  %v1764 = vunpack.c.h.b16 %v326
  %v1765 = vunpack.c.l.b16 %v327
  %v1766 = vunpack.c.h.b16 %v327
  %v1767 = vunpack.c.l.b16 %v328
  %v1768 = vunpack.c.h.b16 %v328
  %v1769 = vunpack.c.l.b16 %v329
  %v1770 = vunpack.c.h.b16 %v329
  %v1771 = vunpack.c.l.b16 %v330
  %v1772 = vunpack.c.h.b16 %v330
  %v1773 = vunpack.c.l.b16 %v331
  %v1774 = vunpack.c.h.b16 %v331
  %v1775 = vunpack.c.l.b16 %v332
  %v1776 = vunpack.c.h.b16 %v332
  %v1777 = vunpack.c.l.b16 %v333
  %v1778 = vunpack.c.h.b16 %v333
  %v1779 = vunpack.c.l.b16 %v334
  %v1780 = vunpack.c.h.b16 %v334
  %v1781 = vunpack.c.l.b16 %v335
  %v1782 = vunpack.c.h.b16 %v335
  %v1783 = vunpack.c.l.b16 %v336
  %v1784 = vunpack.c.h.b16 %v336
  %v1785 = vunpack.c.l.b16 %v337
  %v1786 = vunpack.c.h.b16 %v337
  %v1787 = vunpack.c.l.b16 %v338
  %v1788 = vunpack.c.h.b16 %v338
  %v1789 = vunpack.c.l.b16 %v339
  %v1790 = vunpack.c.h.b16 %v339
  %v1791 = vunpack.c.l.b16 %v340
  %v1792 = vunpack.c.h.b16 %v340
  %v1793 = vunpack.c.l.b16 %v341
  %v1794 = vunpack.c.h.b16 %v341
  %v1795 = vunpack.c.l.b16 %v342
  %v1796 = vunpack.c.h.b16 %v342
  %v1797 = vunpack.c.l.b16 %v343
  %v1798 = vunpack.c.h.b16 %v343
  %v1799 = vunpack.c.l.b16 %v344
  %v1800 = vunpack.c.h.b16 %v344
  %v1801 = vunpack.c.l.b16 %v345
  %v1802 = vunpack.c.h.b16 %v345
  %v1803 = vunpack.c.l.b16 %v346
  %v1804 = vunpack.c.h.b16 %v346
  %v1805 = vunpack.c.l.b16 %v347
  %v1806 = vunpack.c.h.b16 %v347
  %v1807 = vunpack.c.l.b16 %v348
  %v1808 = vunpack.c.h.b16 %v348
  %v1809 = vunpack.c.l.b16 %v349
  %v1810 = vunpack.c.h.b16 %v349
  %v1811 = vunpack.c.l.b16 %v350
  %v1812 = vunpack.c.h.b16 %v350
  %v1813 = vunpack.c.l.b16 %v351
  %v1814 = vunpack.c.h.b16 %v351
  %v1815 = vunpack.c.l.b16 %v352
  %v1816 = vunpack.c.h.b16 %v352
  %v1817 = vunpack.c.l.b16 %v353
  %v1818 = vunpack.c.h.b16 %v353
  %v1819 = vunpack.c.l.b16 %v354
  %v1820 = vunpack.c.h.b16 %v354
  %v1821 = vunpack.c.l.b16 %v355
  %v1822 = vunpack.c.h.b16 %v355
  %v1823 = vunpack.c.l.b16 %v356
  %v1824 = vunpack.c.h.b16 %v356
  %v1825 = vunpack.c.l.b16 %v357
  %v1826 = vunpack.c.h.b16 %v357
  %v1827 = vunpack.c.l.b16 %v358
  %v1828 = vunpack.c.h.b16 %v358
  %v1829 = vunpack.c.l.b16 %v359
  %v1830 = vunpack.c.h.b16 %v359
  %v1831 = vunpack.c.l.b16 %v360
  %v1832 = vunpack.c.h.b16 %v360
  %v1833 = vunpack.c.l.b16 %v361
  %v1834 = vunpack.c.h.b16 %v361
  %v1835 = vunpack.c.l.b16 %v362
  %v1836 = vunpack.c.h.b16 %v362
  %v1837 = vunpack.c.l.b16 %v363
  %v1838 = vunpack.c.h.b16 %v363
  %v1839 = vunpack.c.l.b16 %v364
  %v1840 = vunpack.c.h.b16 %v364
  %v1841 = vunpack.c.l.b16 %v365
  %v1842 = vunpack.c.h.b16 %v365
  %v1843 = vunpack.c.l.b16 %v366
  %v1844 = vunpack.c.h.b16 %v366
  %v1845 = vunpack.c.l.b16 %v367
  %v1846 = vunpack.c.h.b16 %v367
  %v1847 = vunpack.c.l.b16 %v368
  %v1848 = vunpack.c.h.b16 %v368
  %v1849 = vunpack.c.l.b16 %v369
  %v1850 = vunpack.c.h.b16 %v369
  %v1851 = vunpack.c.l.b16 %v370
  %v1852 = vunpack.c.h.b16 %v370
  %v1853 = vunpack.c.l.b16 %v371
  %v1854 = vunpack.c.h.b16 %v371
  %v1855 = vunpack.c.l.b16 %v372
  %v1856 = vunpack.c.h.b16 %v372
  %v1857 = vunpack.c.l.b16 %v373
  %v1858 = vunpack.c.h.b16 %v373
  %v1859 = vunpack.c.l.b16 %v374
  %v1860 = vunpack.c.h.b16 %v374
  %v1861 = vunpack.c.l.b16 %v375
  %v1862 = vunpack.c.h.b16 %v375
  %v1863 = vunpack.c.l.b16 %v376
  %v1864 = vunpack.c.h.b16 %v376
  %v1865 = vunpack.c.l.b16 %v377
  %v1866 = vunpack.c.h.b16 %v377
  %v1867 = vunpack.c.l.b16 %v378
  %v1868 = vunpack.c.h.b16 %v378
  %v1869 = vunpack.c.l.b16 %v379
  %v1870 = vunpack.c.h.b16 %v379
  %v1871 = vunpack.c.l.b16 %v380
  %v1872 = vunpack.c.h.b16 %v380
  %v1873 = vunpack.c.l.b16 %v381
  %v1874 = vunpack.c.h.b16 %v381
  %v1875 = vunpack.c.l.b16 %v382
  %v1876 = vunpack.c.h.b16 %v382
  %v1877 = vunpack.c.l.b16 %v383
  %v1878 = vunpack.c.h.b16 %v383
  %v1879 = vunpack.c.l.b16 %v384
  %v1880 = vunpack.c.h.b16 %v384
  %v1881 = vunpack.c.l.b16 %v385
  %v1882 = vunpack.c.h.b16 %v385
  %v1883 = vunpack.c.l.b16 %v386
  %v1884 = vunpack.c.h.b16 %v386
  %v1885 = vunpack.c.l.b16 %v387
  %v1886 = vunpack.c.h.b16 %v387
  %v1887 = vunpack.c.l.b16 %v388
  %v1888 = vunpack.c.h.b16 %v388
  %v1889 = vunpack.c.l.b16 %v389
  %v1890 = vunpack.c.h.b16 %v389
  %v1891 = vunpack.c.l.b16 %v390
  %v1892 = vunpack.c.h.b16 %v390
  %v1893 = vunpack.c.l.b16 %v391
  %v1894 = vunpack.c.h.b16 %v391
  %v1895 = vunpack.c.l.b16 %v392
  %v1896 = vunpack.c.h.b16 %v392
  %v1897 = vunpack.c.l.b16 %v393
  %v1898 = vunpack.c.h.b16 %v393
  %v1899 = vunpack.c.l.b16 %v394
  %v1900 = vunpack.c.h.b16 %v394
  %v1901 = vunpack.c.l.b16 %v395
  %v1902 = vunpack.c.h.b16 %v395
  %v1903 = vunpack.c.l.b16 %v396
  %v1904 = vunpack.c.h.b16 %v396
  %v1905 = vunpack.c.l.b16 %v397
  %v1906 = vunpack.c.h.b16 %v397
  %v1907 = vunpack.c.l.b16 %v398
  %v1908 = vunpack.c.h.b16 %v398
  %v1909 = vunpack.c.l.b16 %v399
  %v1910 = vunpack.c.h.b16 %v399
  %v1911 = vunpack.c.l.b16 %v400
  %v1912 = vunpack.c.h.b16 %v400
  %v1913 = vunpack.c.l.b16 %v401
  %v1914 = vunpack.c.h.b16 %v401
  %v1915 = vunpack.c.l.b16 %v402
  %v1916 = vunpack.c.h.b16 %v402
  %v1917 = vunpack.c.l.b16 %v403
  %v1918 = vunpack.c.h.b16 %v403
  %v1919 = vunpack.c.l.b16 %v404
  %v1920 = vunpack.c.h.b16 %v404
  %v1921 = vunpack.c.l.b16 %v405
  %v1922 = vunpack.c.h.b16 %v405
  %v1923 = vunpack.c.l.b16 %v406
  %v1924 = vunpack.c.h.b16 %v406
  %v1925 = vunpack.c.l.b16 %v407
  %v1926 = vunpack.c.h.b16 %v407
  %v1927 = vunpack.c.l.b16 %v408
  %v1928 = vunpack.c.h.b16 %v408
  %v1929 = vunpack.c.l.b16 %v409
  %v1930 = vunpack.c.h.b16 %v409
  %v1931 = vunpack.c.l.b16 %v410
  %v1932 = vunpack.c.h.b16 %v410
  %v1933 = vunpack.c.l.b16 %v411
  %v1934 = vunpack.c.h.b16 %v411
  %v1935 = vunpack.c.l.b16 %v412
  %v1936 = vunpack.c.h.b16 %v412
  %v1937 = vunpack.c.l.b16 %v413
  %v1938 = vunpack.c.h.b16 %v413
  %v1939 = vunpack.c.l.b16 %v414
  %v1940 = vunpack.c.h.b16 %v414
  %v1941 = vunpack.c.l.b16 %v415
  %v1942 = vunpack.c.h.b16 %v415
  %v1943 = vunpack.c.l.b16 %v416
  %v1944 = vunpack.c.h.b16 %v416
  %v1945 = vunpack.c.l.b16 %v417
  %v1946 = vunpack.c.h.b16 %v417
  %v1947 = vunpack.c.l.b16 %v418
  %v1948 = vunpack.c.h.b16 %v418
  %v1949 = vunpack.c.l.b16 %v419
  %v1950 = vunpack.c.h.b16 %v419
  %v1951 = vunpack.c.l.b16 %v420
  %v1952 = vunpack.c.h.b16 %v420
  %v1953 = vunpack.c.l.b16 %v421
  %v1954 = vunpack.c.h.b16 %v421
  %v1955 = vunpack.c.l.b16 %v422
  %v1956 = vunpack.c.h.b16 %v422
  %v1957 = vunpack.c.l.b16 %v423
  %v1958 = vunpack.c.h.b16 %v423
  %v1959 = vunpack.c.l.b16 %v424
  %v1960 = vunpack.c.h.b16 %v424
  %v1961 = vunpack.c.l.b16 %v425
  %v1962 = vunpack.c.h.b16 %v425
  %v1963 = vunpack.c.l.b16 %v426
  %v1964 = vunpack.c.h.b16 %v426
  %v1965 = vunpack.c.l.b16 %v427
  %v1966 = vunpack.c.h.b16 %v427
  %v1967 = vunpack.c.l.b16 %v428
  %v1968 = vunpack.c.h.b16 %v428
  %v1969 = vunpack.c.l.b16 %v429
  %v1970 = vunpack.c.h.b16 %v429
  %v1971 = vunpack.c.l.b16 %v430
  %v1972 = vunpack.c.h.b16 %v430
  %v1973 = vunpack.c.l.b16 %v431
  %v1974 = vunpack.c.h.b16 %v431
  %v1975 = vunpack.c.l.b16 %v432
  %v1976 = vunpack.c.h.b16 %v432
  %v1977 = vunpack.c.l.b16 %v433
  %v1978 = vunpack.c.h.b16 %v433
  %v1979 = vunpack.c.l.b16 %v434
  %v1980 = vunpack.c.h.b16 %v434
  %v1981 = vunpack.c.l.b16 %v435
  %v1982 = vunpack.c.h.b16 %v435
  %v1983 = vunpack.c.l.b16 %v436
  %v1984 = vunpack.c.h.b16 %v436
  %v1985 = vunpack.c.l.b16 %v437
  %v1986 = vunpack.c.h.b16 %v437
  %v1987 = vunpack.c.l.b16 %v438
  %v1988 = vunpack.c.h.b16 %v438
  %v1989 = vunpack.c.l.b16 %v439
  %v1990 = vunpack.c.h.b16 %v439
  %v1991 = vunpack.c.l.b16 %v440
  %v1992 = vunpack.c.h.b16 %v440
  %v1993 = vunpack.c.l.b16 %v441
  %v1994 = vunpack.c.h.b16 %v441
  %v1995 = vunpack.c.l.b16 %v442
  %v1996 = vunpack.c.h.b16 %v442
  %v1997 = vunpack.c.l.b16 %v443
  %v1998 = vunpack.c.h.b16 %v443
  %v1999 = vunpack.c.l.b16 %v444
  %v2000 = vunpack.c.h.b16 %v444
  %v2001 = vunpack.c.l.b16 %v445
  %v2002 = vunpack.c.h.b16 %v445
  %v2003 = vunpack.c.l.b16 %v446
  %v2004 = vunpack.c.h.b16 %v446
  %v2005 = vunpack.c.l.b16 %v447
  %v2006 = vunpack.c.h.b16 %v447
  %v2007 = vunpack.c.l.b16 %v448
  %v2008 = vunpack.c.h.b16 %v448
  %v2009 = vunpack.c.l.b16 %v449
  %v2010 = vunpack.c.h.b16 %v449
  %v2011 = vunpack.c.l.b16 %v450
  %v2012 = vunpack.c.h.b16 %v450
  %v2013 = vunpack.c.l.b16 %v451
  %v2014 = vunpack.c.h.b16 %v451
  %v2015 = vunpack.c.l.b16 %v452
  %v2016 = vunpack.c.h.b16 %v452
  %v2017 = vunpack.c.l.b16 %v453
  %v2018 = vunpack.c.h.b16 %v453
  %v2019 = vunpack.c.l.b16 %v454
  %v2020 = vunpack.c.h.b16 %v454
  %v2021 = vunpack.c.l.b16 %v455
  %v2022 = vunpack.c.h.b16 %v455
  %v2023 = vunpack.c.l.b16 %v456
  %v2024 = vunpack.c.h.b16 %v456
  %v2025 = vunpack.c.l.b16 %v457
  %v2026 = vunpack.c.h.b16 %v457
  %v2027 = vunpack.c.l.b16 %v458
  %v2028 = vunpack.c.h.b16 %v458
  %v2029 = vunpack.c.l.b16 %v459
  %v2030 = vunpack.c.h.b16 %v459
  %v2031 = vunpack.c.l.b16 %v460
  %v2032 = vunpack.c.h.b16 %v460
  %v2033 = vunpack.c.l.b16 %v461
  %v2034 = vunpack.c.h.b16 %v461
  %v2035 = vunpack.c.l.b16 %v462
  %v2036 = vunpack.c.h.b16 %v462
  %v2037 = vunpack.c.l.b16 %v463
  %v2038 = vunpack.c.h.b16 %v463
  %v2039 = vunpack.c.l.b16 %v464
  %v2040 = vunpack.c.h.b16 %v464
  %v2041 = vunpack.c.l.b16 %v465
  %v2042 = vunpack.c.h.b16 %v465
  %v2043 = vunpack.c.l.b16 %v466
  %v2044 = vunpack.c.h.b16 %v466
  %v2045 = vunpack.c.l.b16 %v467
  %v2046 = vunpack.c.h.b16 %v467
  %v2047 = vunpack.c.l.b16 %v468
  %v2048 = vunpack.c.h.b16 %v468
  %v2049 = vunpack.c.l.b16 %v469
  %v2050 = vunpack.c.h.b16 %v469
  %v2051 = vunpack.c.l.b16 %v470
  %v2052 = vunpack.c.h.b16 %v470
  %v2053 = vunpack.c.l.b16 %v471
  %v2054 = vunpack.c.h.b16 %v471
  %v2055 = vunpack.c.l.b16 %v472
  %v2056 = vunpack.c.h.b16 %v472
  %v2057 = vunpack.c.l.b16 %v473
  %v2058 = vunpack.c.h.b16 %v473
  %v2059 = vunpack.c.l.b16 %v474
  %v2060 = vunpack.c.h.b16 %v474
  %v2061 = vunpack.c.l.b16 %v475
  %v2062 = vunpack.c.h.b16 %v475
  %v2063 = vunpack.c.l.b16 %v476
  %v2064 = vunpack.c.h.b16 %v476
  %v2065 = vunpack.c.l.b16 %v477
  %v2066 = vunpack.c.h.b16 %v477
  %v2067 = vunpack.c.l.b16 %v478
  %v2068 = vunpack.c.h.b16 %v478
  %v2069 = vunpack.c.l.b16 %v479
  %v2070 = vunpack.c.h.b16 %v479
  %v2071 = vunpack.c.l.b16 %v480
  %v2072 = vunpack.c.h.b16 %v480
  %v2073 = vunpack.c.l.b16 %v481
  %v2074 = vunpack.c.h.b16 %v481
  %v2075 = vunpack.c.l.b16 %v482
  %v2076 = vunpack.c.h.b16 %v482
  %v2077 = vunpack.c.l.b16 %v483
  %v2078 = vunpack.c.h.b16 %v483
  %v2079 = vunpack.c.l.b16 %v484
  %v2080 = vunpack.c.h.b16 %v484
  %v2081 = vunpack.c.l.b16 %v485
  %v2082 = vunpack.c.h.b16 %v485
  %v2083 = vunpack.c.l.b16 %v486
  %v2084 = vunpack.c.h.b16 %v486
  %v2085 = vunpack.c.l.b16 %v487
  %v2086 = vunpack.c.h.b16 %v487
  %v2087 = vunpack.c.l.b16 %v488
  %v2088 = vunpack.c.h.b16 %v488
  %v2089 = vunpack.c.l.b16 %v489
  %v2090 = vunpack.c.h.b16 %v489
  %v2091 = vunpack.c.l.b16 %v490
  %v2092 = vunpack.c.h.b16 %v490
  %v2093 = vunpack.c.l.b16 %v491
  %v2094 = vunpack.c.h.b16 %v491
  %v2095 = vunpack.c.l.b16 %v492
  %v2096 = vunpack.c.h.b16 %v492
  %v2097 = vunpack.c.l.b16 %v493
  %v2098 = vunpack.c.h.b16 %v493
  %v2099 = vunpack.c.l.b16 %v494
  %v2100 = vunpack.c.h.b16 %v494
  %v2101 = vunpack.c.l.b16 %v495
  %v2102 = vunpack.c.h.b16 %v495
  %v2103 = vunpack.c.l.b16 %v496
  %v2104 = vunpack.c.h.b16 %v496
  %v2105 = vunpack.c.l.b16 %v497
  %v2106 = vunpack.c.h.b16 %v497
  %v2107 = vunpack.c.l.b16 %v498
  %v2108 = vunpack.c.h.b16 %v498
  %v2109 = vunpack.c.l.b16 %v499
  %v2110 = vunpack.c.h.b16 %v499
  %v2111 = vunpack.c.l.b16 %v500
  %v2112 = vunpack.c.h.b16 %v500
  %v2113 = vunpack.c.l.b16 %v501
  %v2114 = vunpack.c.h.b16 %v501
  %v2115 = vunpack.c.l.b16 %v502
  %v2116 = vunpack.c.h.b16 %v502
  %v2117 = vunpack.c.l.b16 %v503
  %v2118 = vunpack.c.h.b16 %v503
  %v2119 = vunpack.c.l.b16 %v504
  %v2120 = vunpack.c.h.b16 %v504
  %v2121 = vunpack.c.l.b16 %v505
  %v2122 = vunpack.c.h.b16 %v505
  %v2123 = vunpack.c.l.b16 %v506
  %v2124 = vunpack.c.h.b16 %v506
  %v2125 = vunpack.c.l.b16 %v507
  %v2126 = vunpack.c.h.b16 %v507
  %v2127 = vunpack.c.l.b16 %v508
  %v2128 = vunpack.c.h.b16 %v508
  %v2129 = vunpack.c.l.b16 %v509
  %v2130 = vunpack.c.h.b16 %v509
  %v2131 = vunpack.c.l.b16 %v510
  %v2132 = vunpack.c.h.b16 %v510
  %v2133 = vunpack.c.l.b16 %v511
  %v2134 = vunpack.c.h.b16 %v511
  %v2135 = vunpack.c.l.b16 %v512
  %v2136 = vunpack.c.h.b16 %v512
  %v2137 = vunpack.c.l.b16 %v513
  %v2138 = vunpack.c.h.b16 %v513
  %v2139 = vunpack.c.l.b16 %v514
  %v2140 = vunpack.c.h.b16 %v514
  %v2141 = vunpack.c.l.b16 %v515
  %v2142 = vunpack.c.h.b16 %v515
  %v2143 = vunpack.c.l.b16 %v516
  %v2144 = vunpack.c.h.b16 %v516
  %v2145 = vunpack.c.l.b16 %v517
  %v2146 = vunpack.c.h.b16 %v517
  %v2147 = vunpack.c.l.b16 %v518
  %v2148 = vunpack.c.h.b16 %v518
  %v2149 = vunpack.c.l.b16 %v519
  %v2150 = vunpack.c.h.b16 %v519
  %v2151 = vunpack.c.l.b16 %v520
  %v2152 = vunpack.c.h.b16 %v520
  %v2153 = vunpack.c.l.b16 %v521
  %v2154 = vunpack.c.h.b16 %v521
  %v2155 = vunpack.c.l.b16 %v522
  %v2156 = vunpack.c.h.b16 %v522
  %v2157 = vunpack.c.l.b16 %v523
  %v2158 = vunpack.c.h.b16 %v523
  %v2159 = vunpack.c.l.b16 %v524
  %v2160 = vunpack.c.h.b16 %v524
  %v2161 = vunpack.c.l.b16 %v525
  %v2162 = vunpack.c.h.b16 %v525
  %v2163 = vunpack.c.l.b16 %v526
  %v2164 = vunpack.c.h.b16 %v526
  %v2165 = vunpack.c.l.b16 %v527
  %v2166 = vunpack.c.h.b16 %v527
  %v2167 = vunpack.c.l.b16 %v528
  %v2168 = vunpack.c.h.b16 %v528
  %v2169 = vunpack.c.l.b16 %v529
  %v2170 = vunpack.c.h.b16 %v529
  %v2171 = vunpack.c.l.b16 %v530
  %v2172 = vunpack.c.h.b16 %v530
  %v2173 = vunpack.c.l.b16 %v531
  %v2174 = vunpack.c.h.b16 %v531
  %v2175 = vunpack.c.l.b16 %v532
  %v2176 = vunpack.c.h.b16 %v532
  %v2177 = vunpack.c.l.b16 %v533
  %v2178 = vunpack.c.h.b16 %v533
  %v2179 = vunpack.c.l.b16 %v534
  %v2180 = vunpack.c.h.b16 %v534
  %v2181 = vunpack.c.l.b16 %v535
  %v2182 = vunpack.c.h.b16 %v535
  %v2183 = vunpack.c.l.b16 %v536
  %v2184 = vunpack.c.h.b16 %v536
  %v2185 = vunpack.c.l.b16 %v537
  %v2186 = vunpack.c.h.b16 %v537
  %v2187 = vunpack.c.l.b16 %v538
  %v2188 = vunpack.c.h.b16 %v538
  %v2189 = vunpack.c.l.b16 %v539
  %v2190 = vunpack.c.h.b16 %v539
  %v2191 = vunpack.c.l.b16 %v540
  %v2192 = vunpack.c.h.b16 %v540
  %v2193 = vunpack.c.l.b16 %v541
  %v2194 = vunpack.c.h.b16 %v541
  %v2195 = vunpack.c.l.b16 %v542
  %v2196 = vunpack.c.h.b16 %v542
  %v2197 = vunpack.c.l.b16 %v543
  %v2198 = vunpack.c.h.b16 %v543
  %v2199 = vunpack.c.l.b16 %v544
  %v2200 = vunpack.c.h.b16 %v544
  %v2201 = vunpack.c.l.b16 %v545
  %v2202 = vunpack.c.h.b16 %v545
  %v2203 = vunpack.c.l.b16 %v546
  %v2204 = vunpack.c.h.b16 %v546
  %v2205 = vunpack.c.l.b16 %v547
  %v2206 = vunpack.c.h.b16 %v547
  %v2207 = vunpack.c.l.b16 %v548
  %v2208 = vunpack.c.h.b16 %v548
  %v2209 = vpack.c.b16 %v1187, %v1185
  %v2210 = vpack.c.b16 %v1188, %v1186
  %v2211 = vpack.c.b16 %v1191, %v1189
  %v2212 = vpack.c.b16 %v1192, %v1190
  %v2213 = vpack.c.b16 %v1195, %v1193
  %v2214 = vpack.c.b16 %v1196, %v1194
  %v2215 = vpack.c.b16 %v1199, %v1197
  %v2216 = vpack.c.b16 %v1200, %v1198
  %v2217 = vpack.c.b16 %v1203, %v1201
  %v2218 = vpack.c.b16 %v1204, %v1202
  %v2219 = vpack.c.b16 %v1207, %v1205
  %v2220 = vpack.c.b16 %v1208, %v1206
  %v2221 = vpack.c.b16 %v1211, %v1209
  %v2222 = vpack.c.b16 %v1212, %v1210
  %v2223 = vpack.c.b16 %v1215, %v1213
  %v2224 = vpack.c.b16 %v1216, %v1214
  %v2225 = vpack.c.b16 %v1219, %v1217
  %v2226 = vpack.c.b16 %v1220, %v1218
  %v2227 = vpack.c.b16 %v1223, %v1221
  %v2228 = vpack.c.b16 %v1224, %v1222
  %v2229 = vpack.c.b16 %v1227, %v1225
  %v2230 = vpack.c.b16 %v1228, %v1226
  %v2231 = vpack.c.b16 %v1231, %v1229
  %v2232 = vpack.c.b16 %v1232, %v1230
  %v2233 = vpack.c.b16 %v1235, %v1233
  %v2234 = vpack.c.b16 %v1236, %v1234
  %v2235 = vpack.c.b16 %v1239, %v1237
  %v2236 = vpack.c.b16 %v1240, %v1238
  %v2237 = vpack.c.b16 %v1243, %v1241
  %v2238 = vpack.c.b16 %v1244, %v1242
  %v2239 = vpack.c.b16 %v1247, %v1245
  %v2240 = vpack.c.b16 %v1248, %v1246
  %v2241 = vpack.c.b16 %v1251, %v1249
  %v2242 = vpack.c.b16 %v1252, %v1250
  %v2243 = vpack.c.b16 %v1255, %v1253
  %v2244 = vpack.c.b16 %v1256, %v1254
  %v2245 = vpack.c.b16 %v1259, %v1257
  %v2246 = vpack.c.b16 %v1260, %v1258
  %v2247 = vpack.c.b16 %v1263, %v1261
  %v2248 = vpack.c.b16 %v1264, %v1262
  %v2249 = vpack.c.b16 %v1267, %v1265
  %v2250 = vpack.c.b16 %v1268, %v1266
  %v2251 = vpack.c.b16 %v1271, %v1269
  %v2252 = vpack.c.b16 %v1272, %v1270
  %v2253 = vpack.c.b16 %v1275, %v1273
  %v2254 = vpack.c.b16 %v1276, %v1274
  %v2255 = vpack.c.b16 %v1279, %v1277
  %v2256 = vpack.c.b16 %v1280, %v1278
  %v2257 = vpack.c.b16 %v1283, %v1281
  %v2258 = vpack.c.b16 %v1284, %v1282
  %v2259 = vpack.c.b16 %v1287, %v1285
  %v2260 = vpack.c.b16 %v1288, %v1286
  %v2261 = vpack.c.b16 %v1291, %v1289
  %v2262 = vpack.c.b16 %v1292, %v1290
  %v2263 = vpack.c.b16 %v1295, %v1293
  %v2264 = vpack.c.b16 %v1296, %v1294
  %v2265 = vpack.c.b16 %v1299, %v1297
  %v2266 = vpack.c.b16 %v1300, %v1298
  %v2267 = vpack.c.b16 %v1303, %v1301
  %v2268 = vpack.c.b16 %v1304, %v1302
  %v2269 = vpack.c.b16 %v1307, %v1305
  %v2270 = vpack.c.b16 %v1308, %v1306
  %v2271 = vpack.c.b16 %v1311, %v1309
  %v2272 = vpack.c.b16 %v1312, %v1310
  %v2273 = vpack.c.b16 %v1315, %v1313
  %v2274 = vpack.c.b16 %v1316, %v1314
  %v2275 = vpack.c.b16 %v1319, %v1317
  %v2276 = vpack.c.b16 %v1320, %v1318
  %v2277 = vpack.c.b16 %v1323, %v1321
  %v2278 = vpack.c.b16 %v1324, %v1322
  %v2279 = vpack.c.b16 %v1327, %v1325
  %v2280 = vpack.c.b16 %v1328, %v1326
  %v2281 = vpack.c.b16 %v1331, %v1329
  %v2282 = vpack.c.b16 %v1332, %v1330
  %v2283 = vpack.c.b16 %v1335, %v1333
  %v2284 = vpack.c.b16 %v1336, %v1334
  %v2285 = vpack.c.b16 %v1339, %v1337
  %v2286 = vpack.c.b16 %v1340, %v1338
  %v2287 = vpack.c.b16 %v1343, %v1341
  %v2288 = vpack.c.b16 %v1344, %v1342
  %v2289 = vpack.c.b16 %v1347, %v1345
  %v2290 = vpack.c.b16 %v1348, %v1346
  %v2291 = vpack.c.b16 %v1351, %v1349
  %v2292 = vpack.c.b16 %v1352, %v1350
  %v2293 = vpack.c.b16 %v1355, %v1353
  %v2294 = vpack.c.b16 %v1356, %v1354
  %v2295 = vpack.c.b16 %v1359, %v1357
  %v2296 = vpack.c.b16 %v1360, %v1358
  %v2297 = vpack.c.b16 %v1363, %v1361
  %v2298 = vpack.c.b16 %v1364, %v1362
  %v2299 = vpack.c.b16 %v1367, %v1365
  %v2300 = vpack.c.b16 %v1368, %v1366
  %v2301 = vpack.c.b16 %v1371, %v1369
  %v2302 = vpack.c.b16 %v1372, %v1370
  %v2303 = vpack.c.b16 %v1375, %v1373
  %v2304 = vpack.c.b16 %v1376, %v1374
  %v2305 = vpack.c.b16 %v1379, %v1377
  %v2306 = vpack.c.b16 %v1380, %v1378
  %v2307 = vpack.c.b16 %v1383, %v1381
  %v2308 = vpack.c.b16 %v1384, %v1382
  %v2309 = vpack.c.b16 %v1387, %v1385
  %v2310 = vpack.c.b16 %v1388, %v1386
  %v2311 = vpack.c.b16 %v1391, %v1389
  %v2312 = vpack.c.b16 %v1392, %v1390
  %v2313 = vpack.c.b16 %v1395, %v1393
  %v2314 = vpack.c.b16 %v1396, %v1394
  %v2315 = vpack.c.b16 %v1399, %v1397
  %v2316 = vpack.c.b16 %v1400, %v1398
  %v2317 = vpack.c.b16 %v1403, %v1401
  %v2318 = vpack.c.b16 %v1404, %v1402
  %v2319 = vpack.c.b16 %v1407, %v1405
  %v2320 = vpack.c.b16 %v1408, %v1406
  %v2321 = vpack.c.b16 %v1411, %v1409
  %v2322 = vpack.c.b16 %v1412, %v1410
  %v2323 = vpack.c.b16 %v1415, %v1413
  %v2324 = vpack.c.b16 %v1416, %v1414
  %v2325 = vpack.c.b16 %v1419, %v1417
  %v2326 = vpack.c.b16 %v1420, %v1418
  %v2327 = vpack.c.b16 %v1423, %v1421
  %v2328 = vpack.c.b16 %v1424, %v1422
  %v2329 = vpack.c.b16 %v1427, %v1425
  %v2330 = vpack.c.b16 %v1428, %v1426
  %v2331 = vpack.c.b16 %v1431, %v1429
  %v2332 = vpack.c.b16 %v1432, %v1430
  %v2333 = vpack.c.b16 %v1435, %v1433
  %v2334 = vpack.c.b16 %v1436, %v1434
  %v2335 = vpack.c.b16 %v1439, %v1437
  %v2336 = vpack.c.b16 %v1440, %v1438
  %v2337 = vpack.c.b16 %v1443, %v1441
  %v2338 = vpack.c.b16 %v1444, %v1442
  %v2339 = vpack.c.b16 %v1447, %v1445
  %v2340 = vpack.c.b16 %v1448, %v1446
  %v2341 = vpack.c.b16 %v1451, %v1449
  %v2342 = vpack.c.b16 %v1452, %v1450
  %v2343 = vpack.c.b16 %v1455, %v1453
  %v2344 = vpack.c.b16 %v1456, %v1454
  %v2345 = vpack.c.b16 %v1459, %v1457
  %v2346 = vpack.c.b16 %v1460, %v1458
  %v2347 = vpack.c.b16 %v1463, %v1461
  %v2348 = vpack.c.b16 %v1464, %v1462
  %v2349 = vpack.c.b16 %v1467, %v1465
  %v2350 = vpack.c.b16 %v1468, %v1466
  %v2351 = vpack.c.b16 %v1471, %v1469
  %v2352 = vpack.c.b16 %v1472, %v1470
  %v2353 = vpack.c.b16 %v1475, %v1473
  %v2354 = vpack.c.b16 %v1476, %v1474
  %v2355 = vpack.c.b16 %v1479, %v1477
  %v2356 = vpack.c.b16 %v1480, %v1478
  %v2357 = vpack.c.b16 %v1483, %v1481
  %v2358 = vpack.c.b16 %v1484, %v1482
  %v2359 = vpack.c.b16 %v1487, %v1485
  %v2360 = vpack.c.b16 %v1488, %v1486
  %v2361 = vpack.c.b16 %v1491, %v1489
  %v2362 = vpack.c.b16 %v1492, %v1490
  %v2363 = vpack.c.b16 %v1495, %v1493
  %v2364 = vpack.c.b16 %v1496, %v1494
  %v2365 = vpack.c.b16 %v1499, %v1497
  %v2366 = vpack.c.b16 %v1500, %v1498
  %v2367 = vpack.c.b16 %v1503, %v1501
  %v2368 = vpack.c.b16 %v1504, %v1502
  %v2369 = vpack.c.b16 %v1507, %v1505
  %v2370 = vpack.c.b16 %v1508, %v1506
  %v2371 = vpack.c.b16 %v1511, %v1509
  %v2372 = vpack.c.b16 %v1512, %v1510
  %v2373 = vpack.c.b16 %v1515, %v1513
  %v2374 = vpack.c.b16 %v1516, %v1514
  %v2375 = vpack.c.b16 %v1519, %v1517
  %v2376 = vpack.c.b16 %v1520, %v1518
  %v2377 = vpack.c.b16 %v1523, %v1521
  %v2378 = vpack.c.b16 %v1524, %v1522
  %v2379 = vpack.c.b16 %v1527, %v1525
  %v2380 = vpack.c.b16 %v1528, %v1526
  %v2381 = vpack.c.b16 %v1531, %v1529
  %v2382 = vpack.c.b16 %v1532, %v1530
  %v2383 = vpack.c.b16 %v1535, %v1533
  %v2384 = vpack.c.b16 %v1536, %v1534
  %v2385 = vpack.c.b16 %v1539, %v1537
  %v2386 = vpack.c.b16 %v1540, %v1538
  %v2387 = vpack.c.b16 %v1543, %v1541
  %v2388 = vpack.c.b16 %v1544, %v1542
  %v2389 = vpack.c.b16 %v1547, %v1545
  %v2390 = vpack.c.b16 %v1548, %v1546
  %v2391 = vpack.c.b16 %v1551, %v1549
  %v2392 = vpack.c.b16 %v1552, %v1550
  %v2393 = vpack.c.b16 %v1555, %v1553
  %v2394 = vpack.c.b16 %v1556, %v1554
  %v2395 = vpack.c.b16 %v1559, %v1557
  %v2396 = vpack.c.b16 %v1560, %v1558
  %v2397 = vpack.c.b16 %v1563, %v1561
  %v2398 = vpack.c.b16 %v1564, %v1562
  %v2399 = vpack.c.b16 %v1567, %v1565
  %v2400 = vpack.c.b16 %v1568, %v1566
  %v2401 = vpack.c.b16 %v1571, %v1569
  %v2402 = vpack.c.b16 %v1572, %v1570
  %v2403 = vpack.c.b16 %v1575, %v1573
  %v2404 = vpack.c.b16 %v1576, %v1574
  %v2405 = vpack.c.b16 %v1579, %v1577
  %v2406 = vpack.c.b16 %v1580, %v1578
  %v2407 = vpack.c.b16 %v1583, %v1581
  %v2408 = vpack.c.b16 %v1584, %v1582
  %v2409 = vpack.c.b16 %v1587, %v1585
  %v2410 = vpack.c.b16 %v1588, %v1586
  %v2411 = vpack.c.b16 %v1591, %v1589
  %v2412 = vpack.c.b16 %v1592, %v1590
  %v2413 = vpack.c.b16 %v1595, %v1593
  %v2414 = vpack.c.b16 %v1596, %v1594
  %v2415 = vpack.c.b16 %v1599, %v1597
  %v2416 = vpack.c.b16 %v1600, %v1598
  %v2417 = vpack.c.b16 %v1603, %v1601
  %v2418 = vpack.c.b16 %v1604, %v1602
  %v2419 = vpack.c.b16 %v1607, %v1605
  %v2420 = vpack.c.b16 %v1608, %v1606
  %v2421 = vpack.c.b16 %v1611, %v1609
  %v2422 = vpack.c.b16 %v1612, %v1610
  %v2423 = vpack.c.b16 %v1615, %v1613
  %v2424 = vpack.c.b16 %v1616, %v1614
  %v2425 = vpack.c.b16 %v1619, %v1617
  %v2426 = vpack.c.b16 %v1620, %v1618
  %v2427 = vpack.c.b16 %v1623, %v1621
  %v2428 = vpack.c.b16 %v1624, %v1622
  %v2429 = vpack.c.b16 %v1627, %v1625
  %v2430 = vpack.c.b16 %v1628, %v1626
  %v2431 = vpack.c.b16 %v1631, %v1629
  %v2432 = vpack.c.b16 %v1632, %v1630
  %v2433 = vpack.c.b16 %v1635, %v1633
  %v2434 = vpack.c.b16 %v1636, %v1634
  %v2435 = vpack.c.b16 %v1639, %v1637
  %v2436 = vpack.c.b16 %v1640, %v1638
  %v2437 = vpack.c.b16 %v1643, %v1641
  %v2438 = vpack.c.b16 %v1644, %v1642
  %v2439 = vpack.c.b16 %v1647, %v1645
  %v2440 = vpack.c.b16 %v1648, %v1646
  %v2441 = vpack.c.b16 %v1651, %v1649
  %v2442 = vpack.c.b16 %v1652, %v1650
  %v2443 = vpack.c.b16 %v1655, %v1653
  %v2444 = vpack.c.b16 %v1656, %v1654
  %v2445 = vpack.c.b16 %v1659, %v1657
  %v2446 = vpack.c.b16 %v1660, %v1658
  %v2447 = vpack.c.b16 %v1663, %v1661
  %v2448 = vpack.c.b16 %v1664, %v1662
  %v2449 = vpack.c.b16 %v1667, %v1665
  %v2450 = vpack.c.b16 %v1668, %v1666
  %v2451 = vpack.c.b16 %v1671, %v1669
  %v2452 = vpack.c.b16 %v1672, %v1670
  %v2453 = vpack.c.b16 %v1675, %v1673
  %v2454 = vpack.c.b16 %v1676, %v1674
  %v2455 = vpack.c.b16 %v1679, %v1677
  %v2456 = vpack.c.b16 %v1680, %v1678
  %v2457 = vpack.c.b16 %v1683, %v1681
  %v2458 = vpack.c.b16 %v1684, %v1682
  %v2459 = vpack.c.b16 %v1687, %v1685
  %v2460 = vpack.c.b16 %v1688, %v1686
  %v2461 = vpack.c.b16 %v1691, %v1689
  %v2462 = vpack.c.b16 %v1692, %v1690
  %v2463 = vpack.c.b16 %v1695, %v1693
  %v2464 = vpack.c.b16 %v1696, %v1694
  %v2465 = vpack.c.b16 %v1699, %v1697
  %v2466 = vpack.c.b16 %v1700, %v1698
  %v2467 = vpack.c.b16 %v1703, %v1701
  %v2468 = vpack.c.b16 %v1704, %v1702
  %v2469 = vpack.c.b16 %v1707, %v1705
  %v2470 = vpack.c.b16 %v1708, %v1706
  %v2471 = vpack.c.b16 %v1711, %v1709
  %v2472 = vpack.c.b16 %v1712, %v1710
  %v2473 = vpack.c.b16 %v1715, %v1713
  %v2474 = vpack.c.b16 %v1716, %v1714
  %v2475 = vpack.c.b16 %v1719, %v1717
  %v2476 = vpack.c.b16 %v1720, %v1718
  %v2477 = vpack.c.b16 %v1723, %v1721
  %v2478 = vpack.c.b16 %v1724, %v1722
  %v2479 = vpack.c.b16 %v1727, %v1725
  %v2480 = vpack.c.b16 %v1728, %v1726
  %v2481 = vpack.c.b16 %v1731, %v1729
  %v2482 = vpack.c.b16 %v1732, %v1730
  %v2483 = vpack.c.b16 %v1735, %v1733
  %v2484 = vpack.c.b16 %v1736, %v1734
  %v2485 = vpack.c.b16 %v1739, %v1737
  %v2486 = vpack.c.b16 %v1740, %v1738
  %v2487 = vpack.c.b16 %v1743, %v1741
  %v2488 = vpack.c.b16 %v1744, %v1742
  %v2489 = vpack.c.b16 %v1747, %v1745
  %v2490 = vpack.c.b16 %v1748, %v1746
  %v2491 = vpack.c.b16 %v1751, %v1749
  %v2492 = vpack.c.b16 %v1752, %v1750
  %v2493 = vpack.c.b16 %v1755, %v1753
  %v2494 = vpack.c.b16 %v1756, %v1754
  %v2495 = vpack.c.b16 %v1759, %v1757
  %v2496 = vpack.c.b16 %v1760, %v1758
  %v2497 = vpack.c.b16 %v1763, %v1761
  %v2498 = vpack.c.b16 %v1764, %v1762
  %v2499 = vpack.c.b16 %v1767, %v1765
  %v2500 = vpack.c.b16 %v1768, %v1766
  %v2501 = vpack.c.b16 %v1771, %v1769
  %v2502 = vpack.c.b16 %v1772, %v1770
  %v2503 = vpack.c.b16 %v1775, %v1773
  %v2504 = vpack.c.b16 %v1776, %v1774
  %v2505 = vpack.c.b16 %v1779, %v1777
  %v2506 = vpack.c.b16 %v1780, %v1778
  %v2507 = vpack.c.b16 %v1783, %v1781
  %v2508 = vpack.c.b16 %v1784, %v1782
  %v2509 = vpack.c.b16 %v1787, %v1785
  %v2510 = vpack.c.b16 %v1788, %v1786
  %v2511 = vpack.c.b16 %v1791, %v1789
  %v2512 = vpack.c.b16 %v1792, %v1790
  %v2513 = vpack.c.b16 %v1795, %v1793
  %v2514 = vpack.c.b16 %v1796, %v1794
  %v2515 = vpack.c.b16 %v1799, %v1797
  %v2516 = vpack.c.b16 %v1800, %v1798
  %v2517 = vpack.c.b16 %v1803, %v1801
  %v2518 = vpack.c.b16 %v1804, %v1802
  %v2519 = vpack.c.b16 %v1807, %v1805
  %v2520 = vpack.c.b16 %v1808, %v1806
  %v2521 = vpack.c.b16 %v1811, %v1809
  %v2522 = vpack.c.b16 %v1812, %v1810
  %v2523 = vpack.c.b16 %v1815, %v1813
  %v2524 = vpack.c.b16 %v1816, %v1814
  %v2525 = vpack.c.b16 %v1819, %v1817
  %v2526 = vpack.c.b16 %v1820, %v1818
  %v2527 = vpack.c.b16 %v1823, %v1821
  %v2528 = vpack.c.b16 %v1824, %v1822
  %v2529 = vpack.c.b16 %v1827, %v1825
  %v2530 = vpack.c.b16 %v1828, %v1826
  %v2531 = vpack.c.b16 %v1831, %v1829
  %v2532 = vpack.c.b16 %v1832, %v1830
  %v2533 = vpack.c.b16 %v1835, %v1833
  %v2534 = vpack.c.b16 %v1836, %v1834
  %v2535 = vpack.c.b16 %v1839, %v1837
  %v2536 = vpack.c.b16 %v1840, %v1838
  %v2537 = vpack.c.b16 %v1843, %v1841
  %v2538 = vpack.c.b16 %v1844, %v1842
  %v2539 = vpack.c.b16 %v1847, %v1845
  %v2540 = vpack.c.b16 %v1848, %v1846
  %v2541 = vpack.c.b16 %v1851, %v1849
  %v2542 = vpack.c.b16 %v1852, %v1850
  %v2543 = vpack.c.b16 %v1855, %v1853
  %v2544 = vpack.c.b16 %v1856, %v1854
  %v2545 = vpack.c.b16 %v1859, %v1857
  %v2546 = vpack.c.b16 %v1860, %v1858
  %v2547 = vpack.c.b16 %v1863, %v1861
  %v2548 = vpack.c.b16 %v1864, %v1862
  %v2549 = vpack.c.b16 %v1867, %v1865
  %v2550 = vpack.c.b16 %v1868, %v1866
  %v2551 = vpack.c.b16 %v1871, %v1869
  %v2552 = vpack.c.b16 %v1872, %v1870
  %v2553 = vpack.c.b16 %v1875, %v1873
  %v2554 = vpack.c.b16 %v1876, %v1874
  %v2555 = vpack.c.b16 %v1879, %v1877
  %v2556 = vpack.c.b16 %v1880, %v1878
  %v2557 = vpack.c.b16 %v1883, %v1881
  %v2558 = vpack.c.b16 %v1884, %v1882
  %v2559 = vpack.c.b16 %v1887, %v1885
  %v2560 = vpack.c.b16 %v1888, %v1886
  %v2561 = vpack.c.b16 %v1891, %v1889
  %v2562 = vpack.c.b16 %v1892, %v1890
  %v2563 = vpack.c.b16 %v1895, %v1893
  %v2564 = vpack.c.b16 %v1896, %v1894
  %v2565 = vpack.c.b16 %v1899, %v1897
  %v2566 = vpack.c.b16 %v1900, %v1898
  %v2567 = vpack.c.b16 %v1903, %v1901
  %v2568 = vpack.c.b16 %v1904, %v1902
  %v2569 = vpack.c.b16 %v1907, %v1905
  %v2570 = vpack.c.b16 %v1908, %v1906
  %v2571 = vpack.c.b16 %v1911, %v1909
  %v2572 = vpack.c.b16 %v1912, %v1910
  %v2573 = vpack.c.b16 %v1915, %v1913
  %v2574 = vpack.c.b16 %v1916, %v1914
  %v2575 = vpack.c.b16 %v1919, %v1917
  %v2576 = vpack.c.b16 %v1920, %v1918
  %v2577 = vpack.c.b16 %v1923, %v1921
  %v2578 = vpack.c.b16 %v1924, %v1922
  %v2579 = vpack.c.b16 %v1927, %v1925
  %v2580 = vpack.c.b16 %v1928, %v1926
  %v2581 = vpack.c.b16 %v1931, %v1929
  %v2582 = vpack.c.b16 %v1932, %v1930
  %v2583 = vpack.c.b16 %v1935, %v1933
  %v2584 = vpack.c.b16 %v1936, %v1934
  %v2585 = vpack.c.b16 %v1939, %v1937
  %v2586 = vpack.c.b16 %v1940, %v1938
  %v2587 = vpack.c.b16 %v1943, %v1941
  %v2588 = vpack.c.b16 %v1944, %v1942
  %v2589 = vpack.c.b16 %v1947, %v1945
  %v2590 = vpack.c.b16 %v1948, %v1946
  %v2591 = vpack.c.b16 %v1951, %v1949
  %v2592 = vpack.c.b16 %v1952, %v1950
  %v2593 = vpack.c.b16 %v1955, %v1953
  %v2594 = vpack.c.b16 %v1956, %v1954
  %v2595 = vpack.c.b16 %v1959, %v1957
  %v2596 = vpack.c.b16 %v1960, %v1958
  %v2597 = vpack.c.b16 %v1963, %v1961
  %v2598 = vpack.c.b16 %v1964, %v1962
  %v2599 = vpack.c.b16 %v1967, %v1965
  %v2600 = vpack.c.b16 %v1968, %v1966
  %v2601 = vpack.c.b16 %v1971, %v1969
  %v2602 = vpack.c.b16 %v1972, %v1970
  %v2603 = vpack.c.b16 %v1975, %v1973
  %v2604 = vpack.c.b16 %v1976, %v1974
  %v2605 = vpack.c.b16 %v1979, %v1977
  %v2606 = vpack.c.b16 %v1980, %v1978
  %v2607 = vpack.c.b16 %v1983, %v1981
  %v2608 = vpack.c.b16 %v1984, %v1982
  %v2609 = vpack.c.b16 %v1987, %v1985
  %v2610 = vpack.c.b16 %v1988, %v1986
  %v2611 = vpack.c.b16 %v1991, %v1989
  %v2612 = vpack.c.b16 %v1992, %v1990
  %v2613 = vpack.c.b16 %v1995, %v1993
  %v2614 = vpack.c.b16 %v1996, %v1994
  %v2615 = vpack.c.b16 %v1999, %v1997
  %v2616 = vpack.c.b16 %v2000, %v1998
  %v2617 = vpack.c.b16 %v2003, %v2001
  %v2618 = vpack.c.b16 %v2004, %v2002
  %v2619 = vpack.c.b16 %v2007, %v2005
  %v2620 = vpack.c.b16 %v2008, %v2006
  %v2621 = vpack.c.b16 %v2011, %v2009
  %v2622 = vpack.c.b16 %v2012, %v2010
  %v2623 = vpack.c.b16 %v2015, %v2013
  %v2624 = vpack.c.b16 %v2016, %v2014
  %v2625 = vpack.c.b16 %v2019, %v2017
  %v2626 = vpack.c.b16 %v2020, %v2018
  %v2627 = vpack.c.b16 %v2023, %v2021
  %v2628 = vpack.c.b16 %v2024, %v2022
  %v2629 = vpack.c.b16 %v2027, %v2025
  %v2630 = vpack.c.b16 %v2028, %v2026
  %v2631 = vpack.c.b16 %v2031, %v2029
  %v2632 = vpack.c.b16 %v2032, %v2030
  %v2633 = vpack.c.b16 %v2035, %v2033
  %v2634 = vpack.c.b16 %v2036, %v2034
  %v2635 = vpack.c.b16 %v2039, %v2037
  %v2636 = vpack.c.b16 %v2040, %v2038
  %v2637 = vpack.c.b16 %v2043, %v2041
  %v2638 = vpack.c.b16 %v2044, %v2042
  %v2639 = vpack.c.b16 %v2047, %v2045
  %v2640 = vpack.c.b16 %v2048, %v2046
  %v2641 = vpack.c.b16 %v2051, %v2049
  %v2642 = vpack.c.b16 %v2052, %v2050
  %v2643 = vpack.c.b16 %v2055, %v2053
  %v2644 = vpack.c.b16 %v2056, %v2054
  %v2645 = vpack.c.b16 %v2059, %v2057
  %v2646 = vpack.c.b16 %v2060, %v2058
  %v2647 = vpack.c.b16 %v2063, %v2061
  %v2648 = vpack.c.b16 %v2064, %v2062
  %v2649 = vpack.c.b16 %v2067, %v2065
  %v2650 = vpack.c.b16 %v2068, %v2066
  %v2651 = vpack.c.b16 %v2071, %v2069
  %v2652 = vpack.c.b16 %v2072, %v2070
  %v2653 = vpack.c.b16 %v2075, %v2073
  %v2654 = vpack.c.b16 %v2076, %v2074
  %v2655 = vpack.c.b16 %v2079, %v2077
  %v2656 = vpack.c.b16 %v2080, %v2078
  %v2657 = vpack.c.b16 %v2083, %v2081
  %v2658 = vpack.c.b16 %v2084, %v2082
  %v2659 = vpack.c.b16 %v2087, %v2085
  %v2660 = vpack.c.b16 %v2088, %v2086
  %v2661 = vpack.c.b16 %v2091, %v2089
  %v2662 = vpack.c.b16 %v2092, %v2090
  %v2663 = vpack.c.b16 %v2095, %v2093
  %v2664 = vpack.c.b16 %v2096, %v2094
  %v2665 = vpack.c.b16 %v2099, %v2097
  %v2666 = vpack.c.b16 %v2100, %v2098
  %v2667 = vpack.c.b16 %v2103, %v2101
  %v2668 = vpack.c.b16 %v2104, %v2102
  %v2669 = vpack.c.b16 %v2107, %v2105
  %v2670 = vpack.c.b16 %v2108, %v2106
  %v2671 = vpack.c.b16 %v2111, %v2109
  %v2672 = vpack.c.b16 %v2112, %v2110
  %v2673 = vpack.c.b16 %v2115, %v2113
  %v2674 = vpack.c.b16 %v2116, %v2114
  %v2675 = vpack.c.b16 %v2119, %v2117
  %v2676 = vpack.c.b16 %v2120, %v2118
  %v2677 = vpack.c.b16 %v2123, %v2121
  %v2678 = vpack.c.b16 %v2124, %v2122
  %v2679 = vpack.c.b16 %v2127, %v2125
  %v2680 = vpack.c.b16 %v2128, %v2126
  %v2681 = vpack.c.b16 %v2131, %v2129
  %v2682 = vpack.c.b16 %v2132, %v2130
  %v2683 = vpack.c.b16 %v2135, %v2133
  %v2684 = vpack.c.b16 %v2136, %v2134
  %v2685 = vpack.c.b16 %v2139, %v2137
  %v2686 = vpack.c.b16 %v2140, %v2138
  %v2687 = vpack.c.b16 %v2143, %v2141
  %v2688 = vpack.c.b16 %v2144, %v2142
  %v2689 = vpack.c.b16 %v2147, %v2145
  %v2690 = vpack.c.b16 %v2148, %v2146
  %v2691 = vpack.c.b16 %v2151, %v2149
  %v2692 = vpack.c.b16 %v2152, %v2150
  %v2693 = vpack.c.b16 %v2155, %v2153
  %v2694 = vpack.c.b16 %v2156, %v2154
  %v2695 = vpack.c.b16 %v2159, %v2157
  %v2696 = vpack.c.b16 %v2160, %v2158
  %v2697 = vpack.c.b16 %v2163, %v2161
  %v2698 = vpack.c.b16 %v2164, %v2162
  %v2699 = vpack.c.b16 %v2167, %v2165
  %v2700 = vpack.c.b16 %v2168, %v2166
  %v2701 = vpack.c.b16 %v2171, %v2169
  %v2702 = vpack.c.b16 %v2172, %v2170
  %v2703 = vpack.c.b16 %v2175, %v2173
  %v2704 = vpack.c.b16 %v2176, %v2174
  %v2705 = vpack.c.b16 %v2179, %v2177
  %v2706 = vpack.c.b16 %v2180, %v2178
  %v2707 = vpack.c.b16 %v2183, %v2181
  %v2708 = vpack.c.b16 %v2184, %v2182
  %v2709 = vpack.c.b16 %v2187, %v2185
  %v2710 = vpack.c.b16 %v2188, %v2186
  %v2711 = vpack.c.b16 %v2191, %v2189
  %v2712 = vpack.c.b16 %v2192, %v2190
  %v2713 = vpack.c.b16 %v2195, %v2193
  %v2714 = vpack.c.b16 %v2196, %v2194
  %v2715 = vpack.c.b16 %v2199, %v2197
  %v2716 = vpack.c.b16 %v2200, %v2198
  %v2717 = vpack.c.b16 %v2203, %v2201
  %v2718 = vpack.c.b16 %v2204, %v2202
  %v2719 = vpack.c.b16 %v2207, %v2205
  %v2720 = vpack.c.b16 %v2208, %v2206
  %3233 = vmatprep.subr.bf16.mxu0 %v2224
  %3234 = vmatpush1.bf16.msra.mxu0 %v2223
  %3235 = vmatprep.subr.bf16.mxu0 %v2222
  %3236 = vmatpush1.bf16.msra.mxu0 %v2221
  %3237 = vmatprep.subr.bf16.mxu0 %v2220
  %3238 = vmatpush1.bf16.msra.mxu0 %v2219
  %3239 = vmatprep.subr.bf16.mxu0 %v2218
  %3240 = vmatpush1.bf16.msra.mxu0 %v2217
  %3241 = vmatprep.subr.bf16.mxu0 %v2216
  %3242 = vmatpush1.bf16.msra.mxu0 %v2215
  %3243 = vmatprep.subr.bf16.mxu0 %v2214
  %3244 = vmatpush1.bf16.msra.mxu0 %v2213
  %3245 = vmatprep.subr.bf16.mxu0 %v2212
  %3246 = vmatpush1.bf16.msra.mxu0 %v2211
  %3247 = vmatprep.subr.bf16.mxu0 %v2210
  %3248 = vmatpush1.bf16.msra.mxu0 %v2209
  %3249 = vmatprep.subr.bf16.mxu0 %v2240
  %3250 = vmatpush2.bf16.msra.mxu0 %v2239
  %3251 = vmatprep.subr.bf16.mxu0 %v2238
  %3252 = vmatpush2.bf16.msra.mxu0 %v2237
  %3253 = vmatprep.subr.bf16.mxu0 %v2236
  %3254 = vmatpush2.bf16.msra.mxu0 %v2235
  %3255 = vmatprep.subr.bf16.mxu0 %v2234
  %3256 = vmatpush2.bf16.msra.mxu0 %v2233
  %3257 = vmatprep.subr.bf16.mxu0 %v2232
  %3258 = vmatpush2.bf16.msra.mxu0 %v2231
  %3259 = vmatprep.subr.bf16.mxu0 %v2230
  %3260 = vmatpush2.bf16.msra.mxu0 %v2229
  %3261 = vmatprep.subr.bf16.mxu0 %v2228
  %3262 = vmatpush2.bf16.msra.mxu0 %v2227
  %3263 = vmatprep.subr.bf16.mxu0 %v2226
  %3264 = vmatpush2.bf16.msra.mxu0 %v2225
  %3265 = vmatprep.mubr.bf16.mxu0 %v610
  %3266 = vmatmul.mubr.bf16.gmra.mxu0 %v609
  %v3267 = vpop.f32.mrf.mxu0
  %v3268 = vadd.f32 %v554, %v3267
  %v3269 = vpop.f32.mrf.mxu0
  %v3270 = vadd.f32 %v558, %v3269
  %v3271 = vpop.f32.mrf.mxu0
  %v3272 = vpop.f32.mrf.mxu0
  %3273 = vdwg.mxu0
  %3274 = vmatprep.subr.bf16.mxu0 %v2256
  %3275 = vmatpush1.bf16.msra.mxu0 %v2255
  %3276 = vmatprep.subr.bf16.mxu0 %v2254
  %3277 = vmatpush1.bf16.msra.mxu0 %v2253
  %3278 = vmatprep.subr.bf16.mxu0 %v2252
  %3279 = vmatpush1.bf16.msra.mxu0 %v2251
  %3280 = vmatprep.subr.bf16.mxu0 %v2250
  %3281 = vmatpush1.bf16.msra.mxu0 %v2249
  %3282 = vmatprep.subr.bf16.mxu0 %v2248
  %3283 = vmatpush1.bf16.msra.mxu0 %v2247
  %3284 = vmatprep.subr.bf16.mxu0 %v2246
  %3285 = vmatpush1.bf16.msra.mxu0 %v2245
  %3286 = vmatprep.subr.bf16.mxu0 %v2244
  %3287 = vmatpush1.bf16.msra.mxu0 %v2243
  %3288 = vmatprep.subr.bf16.mxu0 %v2242
  %3289 = vmatpush1.bf16.msra.mxu0 %v2241
  %3290 = vmatprep.subr.bf16.mxu0 %v2272
  %3291 = vmatpush2.bf16.msra.mxu0 %v2271
  %3292 = vmatprep.subr.bf16.mxu0 %v2270
  %3293 = vmatpush2.bf16.msra.mxu0 %v2269
  %3294 = vmatprep.subr.bf16.mxu0 %v2268
  %3295 = vmatpush2.bf16.msra.mxu0 %v2267
  %3296 = vmatprep.subr.bf16.mxu0 %v2266
  %3297 = vmatpush2.bf16.msra.mxu0 %v2265
  %3298 = vmatprep.subr.bf16.mxu0 %v2264
  %3299 = vmatpush2.bf16.msra.mxu0 %v2263
  %3300 = vmatprep.subr.bf16.mxu0 %v2262
  %3301 = vmatpush2.bf16.msra.mxu0 %v2261
  %3302 = vmatprep.subr.bf16.mxu0 %v2260
  %3303 = vmatpush2.bf16.msra.mxu0 %v2259
  %3304 = vmatprep.subr.bf16.mxu0 %v2258
  %3305 = vmatpush2.bf16.msra.mxu0 %v2257
  %3306 = vmatprep.mubr.bf16.mxu0 %v612
  %3307 = vmatmul.mubr.bf16.gmra.mxu0 %v611
  %v3308 = vpop.f32.mrf.mxu0
  %v3309 = vadd.f32 %v3268, %v3308
  %v3310 = vpop.f32.mrf.mxu0
  %v3311 = vadd.f32 %v3270, %v3310
  %v3312 = vpop.f32.mrf.mxu0
  %v3313 = vpop.f32.mrf.mxu0
  %3314 = vdwg.mxu0
  %3315 = vmatprep.subr.bf16.mxu0 %v2288
  %3316 = vmatpush1.bf16.msra.mxu0 %v2287
  %3317 = vmatprep.subr.bf16.mxu0 %v2286
  %3318 = vmatpush1.bf16.msra.mxu0 %v2285
  %3319 = vmatprep.subr.bf16.mxu0 %v2284
  %3320 = vmatpush1.bf16.msra.mxu0 %v2283
  %3321 = vmatprep.subr.bf16.mxu0 %v2282
  %3322 = vmatpush1.bf16.msra.mxu0 %v2281
  %3323 = vmatprep.subr.bf16.mxu0 %v2280
  %3324 = vmatpush1.bf16.msra.mxu0 %v2279
  %3325 = vmatprep.subr.bf16.mxu0 %v2278
  %3326 = vmatpush1.bf16.msra.mxu0 %v2277
  %3327 = vmatprep.subr.bf16.mxu0 %v2276
  %3328 = vmatpush1.bf16.msra.mxu0 %v2275
  %3329 = vmatprep.subr.bf16.mxu0 %v2274
  %3330 = vmatpush1.bf16.msra.mxu0 %v2273
  %3331 = vmatprep.subr.bf16.mxu0 %v2304
  %3332 = vmatpush2.bf16.msra.mxu0 %v2303
  %3333 = vmatprep.subr.bf16.mxu0 %v2302
  %3334 = vmatpush2.bf16.msra.mxu0 %v2301
  %3335 = vmatprep.subr.bf16.mxu0 %v2300
  %3336 = vmatpush2.bf16.msra.mxu0 %v2299
  %3337 = vmatprep.subr.bf16.mxu0 %v2298
  %3338 = vmatpush2.bf16.msra.mxu0 %v2297
  %3339 = vmatprep.subr.bf16.mxu0 %v2296
  %3340 = vmatpush2.bf16.msra.mxu0 %v2295
  %3341 = vmatprep.subr.bf16.mxu0 %v2294
  %3342 = vmatpush2.bf16.msra.mxu0 %v2293
  %3343 = vmatprep.subr.bf16.mxu0 %v2292
  %3344 = vmatpush2.bf16.msra.mxu0 %v2291
  %3345 = vmatprep.subr.bf16.mxu0 %v2290
  %3346 = vmatpush2.bf16.msra.mxu0 %v2289
  %3347 = vmatprep.mubr.bf16.mxu0 %v614
  %3348 = vmatmul.mubr.bf16.gmra.mxu0 %v613
  %v3349 = vpop.f32.mrf.mxu0
  %v3350 = vadd.f32 %v3309, %v3349
  %v3351 = vpop.f32.mrf.mxu0
  %v3352 = vadd.f32 %v3311, %v3351
  %v3353 = vpop.f32.mrf.mxu0
  %v3354 = vpop.f32.mrf.mxu0
  %3355 = vdwg.mxu0
  %3356 = vmatprep.subr.bf16.mxu0 %v2320
  %3357 = vmatpush1.bf16.msra.mxu0 %v2319
  %3358 = vmatprep.subr.bf16.mxu0 %v2318
  %3359 = vmatpush1.bf16.msra.mxu0 %v2317
  %3360 = vmatprep.subr.bf16.mxu0 %v2316
  %3361 = vmatpush1.bf16.msra.mxu0 %v2315
  %3362 = vmatprep.subr.bf16.mxu0 %v2314
  %3363 = vmatpush1.bf16.msra.mxu0 %v2313
  %3364 = vmatprep.subr.bf16.mxu0 %v2312
  %3365 = vmatpush1.bf16.msra.mxu0 %v2311
  %3366 = vmatprep.subr.bf16.mxu0 %v2310
  %3367 = vmatpush1.bf16.msra.mxu0 %v2309
  %3368 = vmatprep.subr.bf16.mxu0 %v2308
  %3369 = vmatpush1.bf16.msra.mxu0 %v2307
  %3370 = vmatprep.subr.bf16.mxu0 %v2306
  %3371 = vmatpush1.bf16.msra.mxu0 %v2305
  %3372 = vmatprep.subr.bf16.mxu0 %v2336
  %3373 = vmatpush2.bf16.msra.mxu0 %v2335
  %3374 = vmatprep.subr.bf16.mxu0 %v2334
  %3375 = vmatpush2.bf16.msra.mxu0 %v2333
  %3376 = vmatprep.subr.bf16.mxu0 %v2332
  %3377 = vmatpush2.bf16.msra.mxu0 %v2331
  %3378 = vmatprep.subr.bf16.mxu0 %v2330
  %3379 = vmatpush2.bf16.msra.mxu0 %v2329
  %3380 = vmatprep.subr.bf16.mxu0 %v2328
  %3381 = vmatpush2.bf16.msra.mxu0 %v2327
  %3382 = vmatprep.subr.bf16.mxu0 %v2326
  %3383 = vmatpush2.bf16.msra.mxu0 %v2325
  %3384 = vmatprep.subr.bf16.mxu0 %v2324
  %3385 = vmatpush2.bf16.msra.mxu0 %v2323
  %3386 = vmatprep.subr.bf16.mxu0 %v2322
  %3387 = vmatpush2.bf16.msra.mxu0 %v2321
  %3388 = vmatprep.mubr.bf16.mxu0 %v616
  %3389 = vmatmul.mubr.bf16.gmra.mxu0 %v615
  %v3390 = vpop.f32.mrf.mxu0
  %v3391 = vadd.f32 %v3350, %v3390
  %v3392 = vpop.f32.mrf.mxu0
  %v3393 = vadd.f32 %v3352, %v3392
  %v3394 = vpop.f32.mrf.mxu0
  %v3395 = vpop.f32.mrf.mxu0
  %3396 = vdwg.mxu0
  %3397 = vmatprep.subr.bf16.mxu0 %v2352
  %3398 = vmatpush1.bf16.msra.mxu0 %v2351
  %3399 = vmatprep.subr.bf16.mxu0 %v2350
  %3400 = vmatpush1.bf16.msra.mxu0 %v2349
  %3401 = vmatprep.subr.bf16.mxu0 %v2348
  %3402 = vmatpush1.bf16.msra.mxu0 %v2347
  %3403 = vmatprep.subr.bf16.mxu0 %v2346
  %3404 = vmatpush1.bf16.msra.mxu0 %v2345
  %3405 = vmatprep.subr.bf16.mxu0 %v2344
  %3406 = vmatpush1.bf16.msra.mxu0 %v2343
  %3407 = vmatprep.subr.bf16.mxu0 %v2342
  %3408 = vmatpush1.bf16.msra.mxu0 %v2341
  %3409 = vmatprep.subr.bf16.mxu0 %v2340
  %3410 = vmatpush1.bf16.msra.mxu0 %v2339
  %3411 = vmatprep.subr.bf16.mxu0 %v2338
  %3412 = vmatpush1.bf16.msra.mxu0 %v2337
  %3413 = vmatprep.subr.bf16.mxu0 %v2368
  %3414 = vmatpush2.bf16.msra.mxu0 %v2367
  %3415 = vmatprep.subr.bf16.mxu0 %v2366
  %3416 = vmatpush2.bf16.msra.mxu0 %v2365
  %3417 = vmatprep.subr.bf16.mxu0 %v2364
  %3418 = vmatpush2.bf16.msra.mxu0 %v2363
  %3419 = vmatprep.subr.bf16.mxu0 %v2362
  %3420 = vmatpush2.bf16.msra.mxu0 %v2361
  %3421 = vmatprep.subr.bf16.mxu0 %v2360
  %3422 = vmatpush2.bf16.msra.mxu0 %v2359
  %3423 = vmatprep.subr.bf16.mxu0 %v2358
  %3424 = vmatpush2.bf16.msra.mxu0 %v2357
  %3425 = vmatprep.subr.bf16.mxu0 %v2356
  %3426 = vmatpush2.bf16.msra.mxu0 %v2355
  %3427 = vmatprep.subr.bf16.mxu0 %v2354
  %3428 = vmatpush2.bf16.msra.mxu0 %v2353
  %3429 = vmatprep.mubr.bf16.mxu0 %v618
  %3430 = vmatmul.mubr.bf16.gmra.mxu0 %v617
  %v3431 = vpop.f32.mrf.mxu0
  %v3432 = vadd.f32 %v3391, %v3431
  %v3433 = vpop.f32.mrf.mxu0
  %v3434 = vadd.f32 %v3393, %v3433
  %v3435 = vpop.f32.mrf.mxu0
  %v3436 = vpop.f32.mrf.mxu0
  %3437 = vdwg.mxu0
  %3438 = vmatprep.subr.bf16.mxu0 %v2384
  %3439 = vmatpush1.bf16.msra.mxu0 %v2383
  %3440 = vmatprep.subr.bf16.mxu0 %v2382
  %3441 = vmatpush1.bf16.msra.mxu0 %v2381
  %3442 = vmatprep.subr.bf16.mxu0 %v2380
  %3443 = vmatpush1.bf16.msra.mxu0 %v2379
  %3444 = vmatprep.subr.bf16.mxu0 %v2378
  %3445 = vmatpush1.bf16.msra.mxu0 %v2377
  %3446 = vmatprep.subr.bf16.mxu0 %v2376
  %3447 = vmatpush1.bf16.msra.mxu0 %v2375
  %3448 = vmatprep.subr.bf16.mxu0 %v2374
  %3449 = vmatpush1.bf16.msra.mxu0 %v2373
  %3450 = vmatprep.subr.bf16.mxu0 %v2372
  %3451 = vmatpush1.bf16.msra.mxu0 %v2371
  %3452 = vmatprep.subr.bf16.mxu0 %v2370
  %3453 = vmatpush1.bf16.msra.mxu0 %v2369
  %3454 = vmatprep.subr.bf16.mxu0 %v2400
  %3455 = vmatpush2.bf16.msra.mxu0 %v2399
  %3456 = vmatprep.subr.bf16.mxu0 %v2398
  %3457 = vmatpush2.bf16.msra.mxu0 %v2397
  %3458 = vmatprep.subr.bf16.mxu0 %v2396
  %3459 = vmatpush2.bf16.msra.mxu0 %v2395
  %3460 = vmatprep.subr.bf16.mxu0 %v2394
  %3461 = vmatpush2.bf16.msra.mxu0 %v2393
  %3462 = vmatprep.subr.bf16.mxu0 %v2392
  %3463 = vmatpush2.bf16.msra.mxu0 %v2391
  %3464 = vmatprep.subr.bf16.mxu0 %v2390
  %3465 = vmatpush2.bf16.msra.mxu0 %v2389
  %3466 = vmatprep.subr.bf16.mxu0 %v2388
  %3467 = vmatpush2.bf16.msra.mxu0 %v2387
  %3468 = vmatprep.subr.bf16.mxu0 %v2386
  %3469 = vmatpush2.bf16.msra.mxu0 %v2385
  %3470 = vmatprep.mubr.bf16.mxu0 %v620
  %3471 = vmatmul.mubr.bf16.gmra.mxu0 %v619
  %v3472 = vpop.f32.mrf.mxu0
  %v3473 = vadd.f32 %v3432, %v3472
  %v3474 = vpop.f32.mrf.mxu0
  %v3475 = vadd.f32 %v3434, %v3474
  %v3476 = vpop.f32.mrf.mxu0
  %v3477 = vpop.f32.mrf.mxu0
  %3478 = vdwg.mxu0
  %3479 = vmatprep.subr.bf16.mxu0 %v2416
  %3480 = vmatpush1.bf16.msra.mxu0 %v2415
  %3481 = vmatprep.subr.bf16.mxu0 %v2414
  %3482 = vmatpush1.bf16.msra.mxu0 %v2413
  %3483 = vmatprep.subr.bf16.mxu0 %v2412
  %3484 = vmatpush1.bf16.msra.mxu0 %v2411
  %3485 = vmatprep.subr.bf16.mxu0 %v2410
  %3486 = vmatpush1.bf16.msra.mxu0 %v2409
  %3487 = vmatprep.subr.bf16.mxu0 %v2408
  %3488 = vmatpush1.bf16.msra.mxu0 %v2407
  %3489 = vmatprep.subr.bf16.mxu0 %v2406
  %3490 = vmatpush1.bf16.msra.mxu0 %v2405
  %3491 = vmatprep.subr.bf16.mxu0 %v2404
  %3492 = vmatpush1.bf16.msra.mxu0 %v2403
  %3493 = vmatprep.subr.bf16.mxu0 %v2402
  %3494 = vmatpush1.bf16.msra.mxu0 %v2401
  %3495 = vmatprep.subr.bf16.mxu0 %v2432
  %3496 = vmatpush2.bf16.msra.mxu0 %v2431
  %3497 = vmatprep.subr.bf16.mxu0 %v2430
  %3498 = vmatpush2.bf16.msra.mxu0 %v2429
  %3499 = vmatprep.subr.bf16.mxu0 %v2428
  %3500 = vmatpush2.bf16.msra.mxu0 %v2427
  %3501 = vmatprep.subr.bf16.mxu0 %v2426
  %3502 = vmatpush2.bf16.msra.mxu0 %v2425
  %3503 = vmatprep.subr.bf16.mxu0 %v2424
  %3504 = vmatpush2.bf16.msra.mxu0 %v2423
  %3505 = vmatprep.subr.bf16.mxu0 %v2422
  %3506 = vmatpush2.bf16.msra.mxu0 %v2421
  %3507 = vmatprep.subr.bf16.mxu0 %v2420
  %3508 = vmatpush2.bf16.msra.mxu0 %v2419
  %3509 = vmatprep.subr.bf16.mxu0 %v2418
  %3510 = vmatpush2.bf16.msra.mxu0 %v2417
  %3511 = vmatprep.mubr.bf16.mxu0 %v622
  %3512 = vmatmul.mubr.bf16.gmra.mxu0 %v621
  %v3513 = vpop.f32.mrf.mxu0
  %v3514 = vadd.f32 %v3473, %v3513
  %v3515 = vpop.f32.mrf.mxu0
  %v3516 = vadd.f32 %v3475, %v3515
  %v3517 = vpop.f32.mrf.mxu0
  %v3518 = vpop.f32.mrf.mxu0
  %3519 = vdwg.mxu0
  %3520 = vmatprep.subr.bf16.mxu0 %v2448
  %3521 = vmatpush1.bf16.msra.mxu0 %v2447
  %3522 = vmatprep.subr.bf16.mxu0 %v2446
  %3523 = vmatpush1.bf16.msra.mxu0 %v2445
  %3524 = vmatprep.subr.bf16.mxu0 %v2444
  %3525 = vmatpush1.bf16.msra.mxu0 %v2443
  %3526 = vmatprep.subr.bf16.mxu0 %v2442
  %3527 = vmatpush1.bf16.msra.mxu0 %v2441
  %3528 = vmatprep.subr.bf16.mxu0 %v2440
  %3529 = vmatpush1.bf16.msra.mxu0 %v2439
  %3530 = vmatprep.subr.bf16.mxu0 %v2438
  %3531 = vmatpush1.bf16.msra.mxu0 %v2437
  %3532 = vmatprep.subr.bf16.mxu0 %v2436
  %3533 = vmatpush1.bf16.msra.mxu0 %v2435
  %3534 = vmatprep.subr.bf16.mxu0 %v2434
  %3535 = vmatpush1.bf16.msra.mxu0 %v2433
  %3536 = vmatprep.subr.bf16.mxu0 %v2464
  %3537 = vmatpush2.bf16.msra.mxu0 %v2463
  %3538 = vmatprep.subr.bf16.mxu0 %v2462
  %3539 = vmatpush2.bf16.msra.mxu0 %v2461
  %3540 = vmatprep.subr.bf16.mxu0 %v2460
  %3541 = vmatpush2.bf16.msra.mxu0 %v2459
  %3542 = vmatprep.subr.bf16.mxu0 %v2458
  %3543 = vmatpush2.bf16.msra.mxu0 %v2457
  %3544 = vmatprep.subr.bf16.mxu0 %v2456
  %3545 = vmatpush2.bf16.msra.mxu0 %v2455
  %3546 = vmatprep.subr.bf16.mxu0 %v2454
  %3547 = vmatpush2.bf16.msra.mxu0 %v2453
  %3548 = vmatprep.subr.bf16.mxu0 %v2452
  %3549 = vmatpush2.bf16.msra.mxu0 %v2451
  %3550 = vmatprep.subr.bf16.mxu0 %v2450
  %3551 = vmatpush2.bf16.msra.mxu0 %v2449
  %3552 = vmatprep.mubr.bf16.mxu0 %v624
  %3553 = vmatmul.mubr.bf16.gmra.mxu0 %v623
  %v3554 = vpop.f32.mrf.mxu0
  %v3555 = vadd.f32 %v3514, %v3554
  %v3556 = vpop.f32.mrf.mxu0
  %v3557 = vadd.f32 %v3516, %v3556
  %v3558 = vpop.f32.mrf.mxu0
  %v3559 = vpop.f32.mrf.mxu0
  %3560 = vdwg.mxu0
  %3561 = vmatprep.subr.bf16.mxu0 %v2480
  %3562 = vmatpush1.bf16.msra.mxu0 %v2479
  %3563 = vmatprep.subr.bf16.mxu0 %v2478
  %3564 = vmatpush1.bf16.msra.mxu0 %v2477
  %3565 = vmatprep.subr.bf16.mxu0 %v2476
  %3566 = vmatpush1.bf16.msra.mxu0 %v2475
  %3567 = vmatprep.subr.bf16.mxu0 %v2474
  %3568 = vmatpush1.bf16.msra.mxu0 %v2473
  %3569 = vmatprep.subr.bf16.mxu0 %v2472
  %3570 = vmatpush1.bf16.msra.mxu0 %v2471
  %3571 = vmatprep.subr.bf16.mxu0 %v2470
  %3572 = vmatpush1.bf16.msra.mxu0 %v2469
  %3573 = vmatprep.subr.bf16.mxu0 %v2468
  %3574 = vmatpush1.bf16.msra.mxu0 %v2467
  %3575 = vmatprep.subr.bf16.mxu0 %v2466
  %3576 = vmatpush1.bf16.msra.mxu0 %v2465
  %3577 = vmatprep.subr.bf16.mxu0 %v2496
  %3578 = vmatpush2.bf16.msra.mxu0 %v2495
  %3579 = vmatprep.subr.bf16.mxu0 %v2494
  %3580 = vmatpush2.bf16.msra.mxu0 %v2493
  %3581 = vmatprep.subr.bf16.mxu0 %v2492
  %3582 = vmatpush2.bf16.msra.mxu0 %v2491
  %3583 = vmatprep.subr.bf16.mxu0 %v2490
  %3584 = vmatpush2.bf16.msra.mxu0 %v2489
  %3585 = vmatprep.subr.bf16.mxu0 %v2488
  %3586 = vmatpush2.bf16.msra.mxu0 %v2487
  %3587 = vmatprep.subr.bf16.mxu0 %v2486
  %3588 = vmatpush2.bf16.msra.mxu0 %v2485
  %3589 = vmatprep.subr.bf16.mxu0 %v2484
  %3590 = vmatpush2.bf16.msra.mxu0 %v2483
  %3591 = vmatprep.subr.bf16.mxu0 %v2482
  %3592 = vmatpush2.bf16.msra.mxu0 %v2481
  %3593 = vmatprep.mubr.bf16.mxu0 %v626
  %3594 = vmatmul.mubr.bf16.gmra.mxu0 %v625
  %v3595 = vpop.f32.mrf.mxu0
  %v3596 = vadd.f32 %v3555, %v3595
  %v3597 = vpop.f32.mrf.mxu0
  %v3598 = vadd.f32 %v3557, %v3597
  %v3599 = vpop.f32.mrf.mxu0
  %v3600 = vpop.f32.mrf.mxu0
  %3601 = vdwg.mxu0
  %3602 = vmatprep.subr.bf16.mxu0 %v2512
  %3603 = vmatpush1.bf16.msra.mxu0 %v2511
  %3604 = vmatprep.subr.bf16.mxu0 %v2510
  %3605 = vmatpush1.bf16.msra.mxu0 %v2509
  %3606 = vmatprep.subr.bf16.mxu0 %v2508
  %3607 = vmatpush1.bf16.msra.mxu0 %v2507
  %3608 = vmatprep.subr.bf16.mxu0 %v2506
  %3609 = vmatpush1.bf16.msra.mxu0 %v2505
  %3610 = vmatprep.subr.bf16.mxu0 %v2504
  %3611 = vmatpush1.bf16.msra.mxu0 %v2503
  %3612 = vmatprep.subr.bf16.mxu0 %v2502
  %3613 = vmatpush1.bf16.msra.mxu0 %v2501
  %3614 = vmatprep.subr.bf16.mxu0 %v2500
  %3615 = vmatpush1.bf16.msra.mxu0 %v2499
  %3616 = vmatprep.subr.bf16.mxu0 %v2498
  %3617 = vmatpush1.bf16.msra.mxu0 %v2497
  %3618 = vmatprep.subr.bf16.mxu0 %v2528
  %3619 = vmatpush2.bf16.msra.mxu0 %v2527
  %3620 = vmatprep.subr.bf16.mxu0 %v2526
  %3621 = vmatpush2.bf16.msra.mxu0 %v2525
  %3622 = vmatprep.subr.bf16.mxu0 %v2524
  %3623 = vmatpush2.bf16.msra.mxu0 %v2523
  %3624 = vmatprep.subr.bf16.mxu0 %v2522
  %3625 = vmatpush2.bf16.msra.mxu0 %v2521
  %3626 = vmatprep.subr.bf16.mxu0 %v2520
  %3627 = vmatpush2.bf16.msra.mxu0 %v2519
  %3628 = vmatprep.subr.bf16.mxu0 %v2518
  %3629 = vmatpush2.bf16.msra.mxu0 %v2517
  %3630 = vmatprep.subr.bf16.mxu0 %v2516
  %3631 = vmatpush2.bf16.msra.mxu0 %v2515
  %3632 = vmatprep.subr.bf16.mxu0 %v2514
  %3633 = vmatpush2.bf16.msra.mxu0 %v2513
  %3634 = vmatprep.mubr.bf16.mxu0 %v628
  %3635 = vmatmul.mubr.bf16.gmra.mxu0 %v627
  %v3636 = vpop.f32.mrf.mxu0
  %v3637 = vadd.f32 %v3596, %v3636
  %v3638 = vpop.f32.mrf.mxu0
  %v3639 = vadd.f32 %v3598, %v3638
  %v3640 = vpop.f32.mrf.mxu0
  %v3641 = vpop.f32.mrf.mxu0
  %3642 = vdwg.mxu0
  %3643 = vmatprep.subr.bf16.mxu0 %v2544
  %3644 = vmatpush1.bf16.msra.mxu0 %v2543
  %3645 = vmatprep.subr.bf16.mxu0 %v2542
  %3646 = vmatpush1.bf16.msra.mxu0 %v2541
  %3647 = vmatprep.subr.bf16.mxu0 %v2540
  %3648 = vmatpush1.bf16.msra.mxu0 %v2539
  %3649 = vmatprep.subr.bf16.mxu0 %v2538
  %3650 = vmatpush1.bf16.msra.mxu0 %v2537
  %3651 = vmatprep.subr.bf16.mxu0 %v2536
  %3652 = vmatpush1.bf16.msra.mxu0 %v2535
  %3653 = vmatprep.subr.bf16.mxu0 %v2534
  %3654 = vmatpush1.bf16.msra.mxu0 %v2533
  %3655 = vmatprep.subr.bf16.mxu0 %v2532
  %3656 = vmatpush1.bf16.msra.mxu0 %v2531
  %3657 = vmatprep.subr.bf16.mxu0 %v2530
  %3658 = vmatpush1.bf16.msra.mxu0 %v2529
  %3659 = vmatprep.subr.bf16.mxu0 %v2560
  %3660 = vmatpush2.bf16.msra.mxu0 %v2559
  %3661 = vmatprep.subr.bf16.mxu0 %v2558
  %3662 = vmatpush2.bf16.msra.mxu0 %v2557
  %3663 = vmatprep.subr.bf16.mxu0 %v2556
  %3664 = vmatpush2.bf16.msra.mxu0 %v2555
  %3665 = vmatprep.subr.bf16.mxu0 %v2554
  %3666 = vmatpush2.bf16.msra.mxu0 %v2553
  %3667 = vmatprep.subr.bf16.mxu0 %v2552
  %3668 = vmatpush2.bf16.msra.mxu0 %v2551
  %3669 = vmatprep.subr.bf16.mxu0 %v2550
  %3670 = vmatpush2.bf16.msra.mxu0 %v2549
  %3671 = vmatprep.subr.bf16.mxu0 %v2548
  %3672 = vmatpush2.bf16.msra.mxu0 %v2547
  %3673 = vmatprep.subr.bf16.mxu0 %v2546
  %3674 = vmatpush2.bf16.msra.mxu0 %v2545
  %3675 = vmatprep.mubr.bf16.mxu0 %v630
  %3676 = vmatmul.mubr.bf16.gmra.mxu0 %v629
  %v3677 = vpop.f32.mrf.mxu0
  %v3678 = vadd.f32 %v3637, %v3677
  %v3679 = vpop.f32.mrf.mxu0
  %v3680 = vadd.f32 %v3639, %v3679
  %v3681 = vpop.f32.mrf.mxu0
  %v3682 = vpop.f32.mrf.mxu0
  %3683 = vdwg.mxu0
  %3684 = vmatprep.subr.bf16.mxu0 %v2576
  %3685 = vmatpush1.bf16.msra.mxu0 %v2575
  %3686 = vmatprep.subr.bf16.mxu0 %v2574
  %3687 = vmatpush1.bf16.msra.mxu0 %v2573
  %3688 = vmatprep.subr.bf16.mxu0 %v2572
  %3689 = vmatpush1.bf16.msra.mxu0 %v2571
  %3690 = vmatprep.subr.bf16.mxu0 %v2570
  %3691 = vmatpush1.bf16.msra.mxu0 %v2569
  %3692 = vmatprep.subr.bf16.mxu0 %v2568
  %3693 = vmatpush1.bf16.msra.mxu0 %v2567
  %3694 = vmatprep.subr.bf16.mxu0 %v2566
  %3695 = vmatpush1.bf16.msra.mxu0 %v2565
  %3696 = vmatprep.subr.bf16.mxu0 %v2564
  %3697 = vmatpush1.bf16.msra.mxu0 %v2563
  %3698 = vmatprep.subr.bf16.mxu0 %v2562
  %3699 = vmatpush1.bf16.msra.mxu0 %v2561
  %3700 = vmatprep.subr.bf16.mxu0 %v2592
  %3701 = vmatpush2.bf16.msra.mxu0 %v2591
  %3702 = vmatprep.subr.bf16.mxu0 %v2590
  %3703 = vmatpush2.bf16.msra.mxu0 %v2589
  %3704 = vmatprep.subr.bf16.mxu0 %v2588
  %3705 = vmatpush2.bf16.msra.mxu0 %v2587
  %3706 = vmatprep.subr.bf16.mxu0 %v2586
  %3707 = vmatpush2.bf16.msra.mxu0 %v2585
  %3708 = vmatprep.subr.bf16.mxu0 %v2584
  %3709 = vmatpush2.bf16.msra.mxu0 %v2583
  %3710 = vmatprep.subr.bf16.mxu0 %v2582
  %3711 = vmatpush2.bf16.msra.mxu0 %v2581
  %3712 = vmatprep.subr.bf16.mxu0 %v2580
  %3713 = vmatpush2.bf16.msra.mxu0 %v2579
  %3714 = vmatprep.subr.bf16.mxu0 %v2578
  %3715 = vmatpush2.bf16.msra.mxu0 %v2577
  %3716 = vmatprep.mubr.bf16.mxu0 %v632
  %3717 = vmatmul.mubr.bf16.gmra.mxu0 %v631
  %v3718 = vpop.f32.mrf.mxu0
  %v3719 = vadd.f32 %v3678, %v3718
  %v3720 = vpop.f32.mrf.mxu0
  %v3721 = vadd.f32 %v3680, %v3720
  %v3722 = vpop.f32.mrf.mxu0
  %v3723 = vpop.f32.mrf.mxu0
  %3724 = vdwg.mxu0
  %3725 = vmatprep.subr.bf16.mxu0 %v2608
  %3726 = vmatpush1.bf16.msra.mxu0 %v2607
  %3727 = vmatprep.subr.bf16.mxu0 %v2606
  %3728 = vmatpush1.bf16.msra.mxu0 %v2605
  %3729 = vmatprep.subr.bf16.mxu0 %v2604
  %3730 = vmatpush1.bf16.msra.mxu0 %v2603
  %3731 = vmatprep.subr.bf16.mxu0 %v2602
  %3732 = vmatpush1.bf16.msra.mxu0 %v2601
  %3733 = vmatprep.subr.bf16.mxu0 %v2600
  %3734 = vmatpush1.bf16.msra.mxu0 %v2599
  %3735 = vmatprep.subr.bf16.mxu0 %v2598
  %3736 = vmatpush1.bf16.msra.mxu0 %v2597
  %3737 = vmatprep.subr.bf16.mxu0 %v2596
  %3738 = vmatpush1.bf16.msra.mxu0 %v2595
  %3739 = vmatprep.subr.bf16.mxu0 %v2594
  %3740 = vmatpush1.bf16.msra.mxu0 %v2593
  %3741 = vmatprep.subr.bf16.mxu0 %v2624
  %3742 = vmatpush2.bf16.msra.mxu0 %v2623
  %3743 = vmatprep.subr.bf16.mxu0 %v2622
  %3744 = vmatpush2.bf16.msra.mxu0 %v2621
  %3745 = vmatprep.subr.bf16.mxu0 %v2620
  %3746 = vmatpush2.bf16.msra.mxu0 %v2619
  %3747 = vmatprep.subr.bf16.mxu0 %v2618
  %3748 = vmatpush2.bf16.msra.mxu0 %v2617
  %3749 = vmatprep.subr.bf16.mxu0 %v2616
  %3750 = vmatpush2.bf16.msra.mxu0 %v2615
  %3751 = vmatprep.subr.bf16.mxu0 %v2614
  %3752 = vmatpush2.bf16.msra.mxu0 %v2613
  %3753 = vmatprep.subr.bf16.mxu0 %v2612
  %3754 = vmatpush2.bf16.msra.mxu0 %v2611
  %3755 = vmatprep.subr.bf16.mxu0 %v2610
  %3756 = vmatpush2.bf16.msra.mxu0 %v2609
  %3757 = vmatprep.mubr.bf16.mxu0 %v634
  %3758 = vmatmul.mubr.bf16.gmra.mxu0 %v633
  %v3759 = vpop.f32.mrf.mxu0
  %v3760 = vadd.f32 %v3719, %v3759
  %v3761 = vpop.f32.mrf.mxu0
  %v3762 = vadd.f32 %v3721, %v3761
  %v3763 = vpop.f32.mrf.mxu0
  %v3764 = vpop.f32.mrf.mxu0
  %3765 = vdwg.mxu0
  %3766 = vmatprep.subr.bf16.mxu0 %v2640
  %3767 = vmatpush1.bf16.msra.mxu0 %v2639
  %3768 = vmatprep.subr.bf16.mxu0 %v2638
  %3769 = vmatpush1.bf16.msra.mxu0 %v2637
  %3770 = vmatprep.subr.bf16.mxu0 %v2636
  %3771 = vmatpush1.bf16.msra.mxu0 %v2635
  %3772 = vmatprep.subr.bf16.mxu0 %v2634
  %3773 = vmatpush1.bf16.msra.mxu0 %v2633
  %3774 = vmatprep.subr.bf16.mxu0 %v2632
  %3775 = vmatpush1.bf16.msra.mxu0 %v2631
  %3776 = vmatprep.subr.bf16.mxu0 %v2630
  %3777 = vmatpush1.bf16.msra.mxu0 %v2629
  %3778 = vmatprep.subr.bf16.mxu0 %v2628
  %3779 = vmatpush1.bf16.msra.mxu0 %v2627
  %3780 = vmatprep.subr.bf16.mxu0 %v2626
  %3781 = vmatpush1.bf16.msra.mxu0 %v2625
  %3782 = vmatprep.subr.bf16.mxu0 %v2656
  %3783 = vmatpush2.bf16.msra.mxu0 %v2655
  %3784 = vmatprep.subr.bf16.mxu0 %v2654
  %3785 = vmatpush2.bf16.msra.mxu0 %v2653
  %3786 = vmatprep.subr.bf16.mxu0 %v2652
  %3787 = vmatpush2.bf16.msra.mxu0 %v2651
  %3788 = vmatprep.subr.bf16.mxu0 %v2650
  %3789 = vmatpush2.bf16.msra.mxu0 %v2649
  %3790 = vmatprep.subr.bf16.mxu0 %v2648
  %3791 = vmatpush2.bf16.msra.mxu0 %v2647
  %3792 = vmatprep.subr.bf16.mxu0 %v2646
  %3793 = vmatpush2.bf16.msra.mxu0 %v2645
  %3794 = vmatprep.subr.bf16.mxu0 %v2644
  %3795 = vmatpush2.bf16.msra.mxu0 %v2643
  %3796 = vmatprep.subr.bf16.mxu0 %v2642
  %3797 = vmatpush2.bf16.msra.mxu0 %v2641
  %3798 = vmatprep.mubr.bf16.mxu0 %v636
  %3799 = vmatmul.mubr.bf16.gmra.mxu0 %v635
  %v3800 = vpop.f32.mrf.mxu0
  %v3801 = vadd.f32 %v3760, %v3800
  %v3802 = vpop.f32.mrf.mxu0
  %v3803 = vadd.f32 %v3762, %v3802
  %v3804 = vpop.f32.mrf.mxu0
  %v3805 = vpop.f32.mrf.mxu0
  %3806 = vdwg.mxu0
  %3807 = vmatprep.subr.bf16.mxu0 %v2672
  %3808 = vmatpush1.bf16.msra.mxu0 %v2671
  %3809 = vmatprep.subr.bf16.mxu0 %v2670
  %3810 = vmatpush1.bf16.msra.mxu0 %v2669
  %3811 = vmatprep.subr.bf16.mxu0 %v2668
  %3812 = vmatpush1.bf16.msra.mxu0 %v2667
  %3813 = vmatprep.subr.bf16.mxu0 %v2666
  %3814 = vmatpush1.bf16.msra.mxu0 %v2665
  %3815 = vmatprep.subr.bf16.mxu0 %v2664
  %3816 = vmatpush1.bf16.msra.mxu0 %v2663
  %3817 = vmatprep.subr.bf16.mxu0 %v2662
  %3818 = vmatpush1.bf16.msra.mxu0 %v2661
  %3819 = vmatprep.subr.bf16.mxu0 %v2660
  %3820 = vmatpush1.bf16.msra.mxu0 %v2659
  %3821 = vmatprep.subr.bf16.mxu0 %v2658
  %3822 = vmatpush1.bf16.msra.mxu0 %v2657
  %3823 = vmatprep.subr.bf16.mxu0 %v2688
  %3824 = vmatpush2.bf16.msra.mxu0 %v2687
  %3825 = vmatprep.subr.bf16.mxu0 %v2686
  %3826 = vmatpush2.bf16.msra.mxu0 %v2685
  %3827 = vmatprep.subr.bf16.mxu0 %v2684
  %3828 = vmatpush2.bf16.msra.mxu0 %v2683
  %3829 = vmatprep.subr.bf16.mxu0 %v2682
  %3830 = vmatpush2.bf16.msra.mxu0 %v2681
  %3831 = vmatprep.subr.bf16.mxu0 %v2680
  %3832 = vmatpush2.bf16.msra.mxu0 %v2679
  %3833 = vmatprep.subr.bf16.mxu0 %v2678
  %3834 = vmatpush2.bf16.msra.mxu0 %v2677
  %3835 = vmatprep.subr.bf16.mxu0 %v2676
  %3836 = vmatpush2.bf16.msra.mxu0 %v2675
  %3837 = vmatprep.subr.bf16.mxu0 %v2674
  %3838 = vmatpush2.bf16.msra.mxu0 %v2673
  %3839 = vmatprep.mubr.bf16.mxu0 %v638
  %3840 = vmatmul.mubr.bf16.gmra.mxu0 %v637
  %v3841 = vpop.f32.mrf.mxu0
  %v3842 = vadd.f32 %v3801, %v3841
  %v3843 = vpop.f32.mrf.mxu0
  %v3844 = vadd.f32 %v3803, %v3843
  %v3845 = vpop.f32.mrf.mxu0
  %v3846 = vpop.f32.mrf.mxu0
  %3847 = vdwg.mxu0
  %3848 = vmatprep.subr.bf16.mxu0 %v2704
  %3849 = vmatpush1.bf16.msra.mxu0 %v2703
  %3850 = vmatprep.subr.bf16.mxu0 %v2702
  %3851 = vmatpush1.bf16.msra.mxu0 %v2701
  %3852 = vmatprep.subr.bf16.mxu0 %v2700
  %3853 = vmatpush1.bf16.msra.mxu0 %v2699
  %3854 = vmatprep.subr.bf16.mxu0 %v2698
  %3855 = vmatpush1.bf16.msra.mxu0 %v2697
  %3856 = vmatprep.subr.bf16.mxu0 %v2696
  %3857 = vmatpush1.bf16.msra.mxu0 %v2695
  %3858 = vmatprep.subr.bf16.mxu0 %v2694
  %3859 = vmatpush1.bf16.msra.mxu0 %v2693
  %3860 = vmatprep.subr.bf16.mxu0 %v2692
  %3861 = vmatpush1.bf16.msra.mxu0 %v2691
  %3862 = vmatprep.subr.bf16.mxu0 %v2690
  %3863 = vmatpush1.bf16.msra.mxu0 %v2689
  %3864 = vmatprep.subr.bf16.mxu0 %v2720
  %3865 = vmatpush2.bf16.msra.mxu0 %v2719
  %3866 = vmatprep.subr.bf16.mxu0 %v2718
  %3867 = vmatpush2.bf16.msra.mxu0 %v2717
  %3868 = vmatprep.subr.bf16.mxu0 %v2716
  %3869 = vmatpush2.bf16.msra.mxu0 %v2715
  %3870 = vmatprep.subr.bf16.mxu0 %v2714
  %3871 = vmatpush2.bf16.msra.mxu0 %v2713
  %3872 = vmatprep.subr.bf16.mxu0 %v2712
  %3873 = vmatpush2.bf16.msra.mxu0 %v2711
  %3874 = vmatprep.subr.bf16.mxu0 %v2710
  %3875 = vmatpush2.bf16.msra.mxu0 %v2709
  %3876 = vmatprep.subr.bf16.mxu0 %v2708
  %3877 = vmatpush2.bf16.msra.mxu0 %v2707
  %3878 = vmatprep.subr.bf16.mxu0 %v2706
  %3879 = vmatpush2.bf16.msra.mxu0 %v2705
  %3880 = vmatprep.mubr.bf16.mxu0 %v640
  %3881 = vmatmul.mubr.bf16.gmra.mxu0 %v639
  %v3882 = vpop.f32.mrf.mxu0
  %v3883 = vadd.f32 %v3842, %v3882
  %v3884 = vpop.f32.mrf.mxu0
  %v3885 = vadd.f32 %v3844, %v3884
  %v3886 = vpop.f32.mrf.mxu0
  %v3887 = vpop.f32.mrf.mxu0
  %3888 = vdwg.mxu0
  %v3889 = vmax.f32 %v3883, 0.0
  %v3890 = vmax.f32 %v3885, 0.0
  %v3891 = vpack.c.bf16 %v3889, %v3889
  %v3892 = vpack.c.bf16 %v3890, %v3890
  %v3893 = vld [vmem:[%s3] sm:$0xf]
  %v3894 = vld [vmem:[%s3 + $0x4] sm:$0xf]
  %v3895 = vld [vmem:[%s3 + $0x8] sm:$0xf]
  %v3896 = vld [vmem:[%s3 + $0xc] sm:$0xf]
  %v3897 = vld [vmem:[%s3 + $0x10] sm:$0xf]
  %v3898 = vld [vmem:[%s3 + $0x14] sm:$0xf]
  %v3899 = vld [vmem:[%s3 + $0x18] sm:$0xf]
  %v3900 = vld [vmem:[%s3 + $0x1c] sm:$0xf]
  %v3901 = vld [vmem:[%s3 + $0x20] sm:$0xf]
  %v3902 = vld [vmem:[%s3 + $0x24] sm:$0xf]
  %v3903 = vld [vmem:[%s3 + $0x28] sm:$0xf]
  %v3904 = vld [vmem:[%s3 + $0x2c] sm:$0xf]
  %v3905 = vld [vmem:[%s3 + $0x30] sm:$0xf]
  %v3906 = vld [vmem:[%s3 + $0x34] sm:$0xf]
  %v3907 = vld [vmem:[%s3 + $0x38] sm:$0xf]
  %v3908 = vld [vmem:[%s3 + $0x3c] sm:$0xf]
  %v3909 = vld [vmem:[%s3 + $0x40] sm:$0xf]
  %v3910 = vld [vmem:[%s3 + $0x44] sm:$0xf]
  %v3911 = vld [vmem:[%s3 + $0x48] sm:$0xf]
  %v3912 = vld [vmem:[%s3 + $0x4c] sm:$0xf]
  %v3913 = vld [vmem:[%s3 + $0x50] sm:$0xf]
  %v3914 = vld [vmem:[%s3 + $0x54] sm:$0xf]
  %v3915 = vld [vmem:[%s3 + $0x58] sm:$0xf]
  %v3916 = vld [vmem:[%s3 + $0x5c] sm:$0xf]
  %v3917 = vld [vmem:[%s3 + $0x60] sm:$0xf]
  %v3918 = vld [vmem:[%s3 + $0x64] sm:$0xf]
  %v3919 = vld [vmem:[%s3 + $0x68] sm:$0xf]
  %v3920 = vld [vmem:[%s3 + $0x6c] sm:$0xf]
  %v3921 = vld [vmem:[%s3 + $0x70] sm:$0xf]
  %v3922 = vld [vmem:[%s3 + $0x74] sm:$0xf]
  %v3923 = vld [vmem:[%s3 + $0x78] sm:$0xf]
  %v3924 = vld [vmem:[%s3 + $0x7c] sm:$0xf]
  %v3925 = vld [vmem:[%s4] sm:$0x1]
  %v3927 = vlaneseq
  %v3928 = vshrl.u32 %v3927, 7
  %v3929 = vsub.s32 0, %v3928
  %v3930 = vrot.slane %v3925, %v3929
  %v3964 = vunpack.c.l.b16 %v3893
  %v3965 = vunpack.c.l.b16 %v3894
  %v3966 = vunpack.c.l.b16 %v3895
  %v3967 = vunpack.c.l.b16 %v3896
  %v3968 = vunpack.c.l.b16 %v3897
  %v3969 = vunpack.c.l.b16 %v3898
  %v3970 = vunpack.c.l.b16 %v3899
  %v3971 = vunpack.c.l.b16 %v3900
  %v3972 = vunpack.c.l.b16 %v3901
  %v3973 = vunpack.c.l.b16 %v3902
  %v3974 = vunpack.c.l.b16 %v3903
  %v3975 = vunpack.c.l.b16 %v3904
  %v3976 = vunpack.c.l.b16 %v3905
  %v3977 = vunpack.c.l.b16 %v3906
  %v3978 = vunpack.c.l.b16 %v3907
  %v3979 = vunpack.c.l.b16 %v3908
  %v3980 = vunpack.c.l.b16 %v3909
  %v3981 = vunpack.c.l.b16 %v3910
  %v3982 = vunpack.c.l.b16 %v3911
  %v3983 = vunpack.c.l.b16 %v3912
  %v3984 = vunpack.c.l.b16 %v3913
  %v3985 = vunpack.c.l.b16 %v3914
  %v3986 = vunpack.c.l.b16 %v3915
  %v3987 = vunpack.c.l.b16 %v3916
  %v3988 = vunpack.c.l.b16 %v3917
  %v3989 = vunpack.c.l.b16 %v3918
  %v3990 = vunpack.c.l.b16 %v3919
  %v3991 = vunpack.c.l.b16 %v3920
  %v3992 = vunpack.c.l.b16 %v3921
  %v3993 = vunpack.c.l.b16 %v3922
  %v3994 = vunpack.c.l.b16 %v3923
  %v3995 = vunpack.c.l.b16 %v3924
  %v3996 = vpack.c.b16 %v3965, %v3964
  %v3997 = vpack.c.b16 %v3967, %v3966
  %v3998 = vpack.c.b16 %v3969, %v3968
  %v3999 = vpack.c.b16 %v3971, %v3970
  %v4000 = vpack.c.b16 %v3973, %v3972
  %v4001 = vpack.c.b16 %v3975, %v3974
  %v4002 = vpack.c.b16 %v3977, %v3976
  %v4003 = vpack.c.b16 %v3979, %v3978
  %v4004 = vpack.c.b16 %v3981, %v3980
  %v4005 = vpack.c.b16 %v3983, %v3982
  %v4006 = vpack.c.b16 %v3985, %v3984
  %v4007 = vpack.c.b16 %v3987, %v3986
  %v4008 = vpack.c.b16 %v3989, %v3988
  %v4009 = vpack.c.b16 %v3991, %v3990
  %v4010 = vpack.c.b16 %v3993, %v3992
  %v4011 = vpack.c.b16 %v3995, %v3994
  %4028 = vmatprep.subr.bf16.mxu0 0
  %4029 = vmatpush1.bf16.msra.mxu0 %v4003
  %4030 = vmatprep.subr.bf16.mxu0 0
  %4031 = vmatpush1.bf16.msra.mxu0 %v4002
  %4032 = vmatprep.subr.bf16.mxu0 0
  %4033 = vmatpush1.bf16.msra.mxu0 %v4001
  %4034 = vmatprep.subr.bf16.mxu0 0
  %4035 = vmatpush1.bf16.msra.mxu0 %v4000
  %4036 = vmatprep.subr.bf16.mxu0 0
  %4037 = vmatpush1.bf16.msra.mxu0 %v3999
  %4038 = vmatprep.subr.bf16.mxu0 0
  %4039 = vmatpush1.bf16.msra.mxu0 %v3998
  %4040 = vmatprep.subr.bf16.mxu0 0
  %4041 = vmatpush1.bf16.msra.mxu0 %v3997
  %4042 = vmatprep.subr.bf16.mxu0 0
  %4043 = vmatpush1.bf16.msra.mxu0 %v3996
  %4044 = vmatprep.subr.bf16.mxu0 0
  %4045 = vmatpush2.bf16.msra.mxu0 %v4011
  %4046 = vmatprep.subr.bf16.mxu0 0
  %4047 = vmatpush2.bf16.msra.mxu0 %v4010
  %4048 = vmatprep.subr.bf16.mxu0 0
  %4049 = vmatpush2.bf16.msra.mxu0 %v4009
  %4050 = vmatprep.subr.bf16.mxu0 0
  %4051 = vmatpush2.bf16.msra.mxu0 %v4008
  %4052 = vmatprep.subr.bf16.mxu0 0
  %4053 = vmatpush2.bf16.msra.mxu0 %v4007
  %4054 = vmatprep.subr.bf16.mxu0 0
  %4055 = vmatpush2.bf16.msra.mxu0 %v4006
  %4056 = vmatprep.subr.bf16.mxu0 0
  %4057 = vmatpush2.bf16.msra.mxu0 %v4005
  %4058 = vmatprep.subr.bf16.mxu0 0
  %4059 = vmatpush2.bf16.msra.mxu0 %v4004
  %4060 = vmatprep.mubr.bf16.mxu0 %v3892
  %4061 = vmatmul.mubr.bf16.gmra.mxu0 %v3891
  %v4062 = vpop.f32.mrf.mxu0
  %v4063 = vadd.f32 %v3930, %v4062
  %v4064 = vpop.f32.mrf.mxu0
  %v4065 = vpop.f32.mrf.mxu0
  %v4066 = vpop.f32.mrf.mxu0
  %4067 = vdwg.mxu0
  %4068 = vst [vmem:[%s5] sm:$0xff] %v4063
  // Predicated region
  $region22: #{dqn_forward.3} parent=0 // pred_check
    _
  $region23: #{dqn_forward.3} parent=0 // pred_check_branch
    %4070 = sbr.rel (0) target = $region25
  $region24: #{dqn_forward.3} parent=0 // pred_region
    _
  $region25: #{dqn_forward.3} parent=0 // pred_fallthru
    _
  // Predicated region
  $region26: #{dqn_forward.3} parent=0 // pred_check
    _
  $region27: #{dqn_forward.3} parent=0 // pred_check_branch
    %4072 = sbr.rel (0) target = $region29
  $region28: #{dqn_forward.3} parent=0 // pred_region
    _
  $region29: #{dqn_forward.3} parent=0 // pred_fallthru
    _

</llo_original>
